<compile_context>
chip_gen: v6e
topology: v6e:2x2x1
jax: 0.10.0
libtpu: 0.0.40
codegen_flags: <defaults>
</compile_context>

<pallas_src>
import functools
import math

import jax
import jax.numpy as jnp
import numpy as np
from jax.experimental import pallas as pl
from jax.experimental.pallas import tpu as pltpu

_HALF_LOG_2PI = 0.5 * math.log(2.0 * math.pi)


# ----------------------------------------------------------------------------
# Fused Pallas kernel: the full evaluate() forward in a single call.
# ----------------------------------------------------------------------------
def _fused_kernel(x_ref, act_ref,
                  A1_ref, b1_ref,
                  A2a_ref, b2a_ref, A2v_ref, b2v_ref,
                  W3a_ref, b3a_ref, W3v_ref, b3v_ref,
                  Wmu_ref, bmu_ref, Wls_ref, bls_ref, Wv_ref, bv_ref,
                  mu_ref, ls_ref, lp_ref, ent_ref, val_ref,
                  *, d_branch):
    f32 = jnp.float32
    x = x_ref[...]                                            # (B, C*H*W), NCHW-flat

    # conv layer 1: actor || critic fused along N (lane-dense 2*nc*H*W columns)
    y1 = jnp.dot(x, A1_ref[...], preferred_element_type=f32) + b1_ref[...]
    y1 = jnp.maximum(y1, 0.0)
    ya = y1[:, :d_branch]                                     # aligned (multiple of 128) split
    yv = y1[:, d_branch:]

    # conv layer 2 (per branch)
    za = jnp.maximum(jnp.dot(ya, A2a_ref[...], preferred_element_type=f32) + b2a_ref[...], 0.0)
    zv = jnp.maximum(jnp.dot(yv, A2v_ref[...], preferred_element_type=f32) + b2v_ref[...], 0.0)

    # linear_{a,v}_0 + ReLU
    ha = jnp.maximum(jnp.dot(za, W3a_ref[...], preferred_element_type=f32) + b3a_ref[...], 0.0)
    hv = jnp.maximum(jnp.dot(zv, W3v_ref[...], preferred_element_type=f32) + b3v_ref[...], 0.0)

    # heads: mu / log_sigma (linear_a, split at pack time) and value (linear_v)
    mu = jnp.dot(ha, Wmu_ref[...], preferred_element_type=f32) + bmu_ref[...]
    ls = jnp.dot(ha, Wls_ref[...], preferred_element_type=f32) + bls_ref[...]
    val = jnp.dot(hv, Wv_ref[...], preferred_element_type=f32) + bv_ref[...]

    # Normal(mu, exp(ls)) log_prob / entropy epilogue (VPU + EUP)
    a = act_ref[...]
    inv_var = jnp.exp(-2.0 * ls)                              # 1/sigma^2, overflow-robust
    diff = a - mu
    lp = -0.5 * diff * diff * inv_var - ls - _HALF_LOG_2PI
    ent = 0.5 + _HALF_LOG_2PI + ls

    mu_ref[...] = mu
    ls_ref[...] = ls
    lp_ref[...] = lp
    ent_ref[...] = ent
    val_ref[...] = val


def _fused_forward(packed, x_flat, action):
    B = x_flat.shape[0]
    action_dim = packed["W_mu"].shape[1]
    d_branch = packed["A2a"].shape[0]

    args = (
        x_flat.astype(jnp.float32), action.astype(jnp.float32),
        packed["A1"], packed["b1"],
        packed["A2a"], packed["b2a"], packed["A2v"], packed["b2v"],
        packed["W3a"], packed["b3a"], packed["W3v"], packed["b3v"],
        packed["W_mu"], packed["b_mu"], packed["W_ls"], packed["b_ls"],
        packed["W_v"], packed["b_v"],
    )
    in_specs = [pl.BlockSpec(a.shape, lambda: (0, 0)) for a in args]
    out_shape = (
        jax.ShapeDtypeStruct((B, action_dim), jnp.float32),   # mu
        jax.ShapeDtypeStruct((B, action_dim), jnp.float32),   # log_sigma
        jax.ShapeDtypeStruct((B, action_dim), jnp.float32),   # log_prob
        jax.ShapeDtypeStruct((B, action_dim), jnp.float32),   # entropy
        jax.ShapeDtypeStruct((B, 1), jnp.float32),            # state value
    )
    out_specs = tuple(pl.BlockSpec(s.shape, lambda: (0, 0)) for s in out_shape)

    return pl.pallas_call(
        functools.partial(_fused_kernel, d_branch=d_branch),
        out_shape=out_shape,
        in_specs=in_specs,
        out_specs=out_specs,
        # total weight footprint ~3 MiB f32; 32 MiB headroom is safe on v5e/v6e/v7x.
        compiler_params=pltpu.CompilerParams(vmem_limit_bytes=32 * 1024 * 1024),
    )(*args)


# ----------------------------------------------------------------------------
# Module entry points (forward semantics of the PyTorch module)
# ----------------------------------------------------------------------------
def infer(packed, state):
    """infer(state) -> (mu, log_sigma).  state is NCHW (B, C, H, W)."""
    B = state.shape[0]
    action_dim = packed["W_mu"].shape[1]
    x_flat = state.reshape(B, -1)
    mu, log_sigma, _, _, _ = _fused_forward(
        packed, x_flat, jnp.zeros((B, action_dim), jnp.float32))
    return mu, log_sigma


def evaluate(packed, state, action):
    """evaluate(state, action) -> (log_prob, state_value, entropy)."""
    B = state.shape[0]
    x_flat = state.reshape(B, -1)
    _, _, lp, ent, value = _fused_forward(packed, x_flat, action)
    return lp, value, ent


# ----------------------------------------------------------------------------
# Parameter init (PyTorch-layout params) + one-time packing into kernel layout
# ----------------------------------------------------------------------------
def init_params(key, input_shape, action_dim, n_out_channels):
    C, H, W = input_shape
    nc = n_out_channels
    flat = nc * H * W
    space = nc

    def conv_p(k, cin, cout):
        kw, kb = jax.random.split(k)
        return {
            "w": 0.1 * jax.random.normal(kw, (cout, cin, 3, 3), jnp.float32),
            "b": 0.05 * jax.random.normal(kb, (cout,), jnp.float32),
        }

    def lin_p(k, fin, fout):
        kw, kb = jax.random.split(k)
        return {
            "w": 0.1 * jax.random.normal(kw, (fout, fin), jnp.float32),
            "b": 0.05 * jax.random.normal(kb, (fout,), jnp.float32),
        }

    ks = jax.random.split(key, 12)
    return {
        "conv_a_0": conv_p(ks[0], C, nc),
        "conv_a_1": conv_p(ks[1], nc, nc),
        "linear_a_0": lin_p(ks[2], flat, space),
        "linear_a": lin_p(ks[3], space, action_dim * 2),
        "conv_v_0": conv_p(ks[4], C, nc),
        "conv_v_1": conv_p(ks[5], nc, nc),
        "linear_v_0": lin_p(ks[6], flat, space),
        "linear_v": lin_p(ks[7], space, 1),
        # t-branch exists in the module but is unused in infer/evaluate.
        "conv_t_0": conv_p(ks[8], C, nc),
        "conv_t_1": conv_p(ks[9], nc, nc),
        "linear_t_0": lin_p(ks[10], flat, space),
        "linear_t": lin_p(ks[11], space, space),
    }


def conv_to_dense_operator(w, H, W):
    """OIHW conv weight (C_out, C_in, 3, 3), circular 'same' padding, stride 1
    -> dense operator A of shape (C_in*H*W, C_out*H*W) such that
       y_flat = x_flat @ A, with flat index order (c, h, w) (i.e. NCHW flatten)."""
    w = np.asarray(w, np.float32)
    C_out, C_in, KH, KW = w.shape
    HW = H * W
    eye = np.eye(HW, dtype=np.float32).reshape(H, W, HW)
    A = np.zeros((C_in, HW, C_out, HW), np.float32)
    for dh in range(KH):
        for dw in range(KW):
            # S[(h',w'), (h,w)] = 1  iff  h' = (h+dh-1) % H  and  w' = (w+dw-1) % W
            S = np.roll(eye, shift=(dh - 1, dw - 1), axis=(0, 1)).reshape(HW, HW)
            A += w[:, :, dh, dw].T[:, None, :, None] * S[None, :, None, :]
    return A.reshape(C_in * HW, C_out * HW)


def pack_params(params, input_shape, n_out_channels, action_dim):
    """One-time conversion of PyTorch-layout params into the fused-kernel layout."""
    C, H, W = input_shape
    HW = H * W
    f32 = jnp.float32

    def dense_conv(name):
        A = conv_to_dense_operator(np.asarray(params[name]["w"]), H, W)
        b = np.repeat(np.asarray(params[name]["b"], np.float32), HW)   # (co, h, w) order
        return A, b

    A1a, b1a = dense_conv("conv_a_0")
    A1v, b1v = dense_conv("conv_v_0")
    A2a, b2a = dense_conv("conv_a_1")
    A2v, b2v = dense_conv("conv_v_1")

    wa = np.asarray(params["linear_a"]["w"], np.float32)   # (2*action_dim, space)
    ba = np.asarray(params["linear_a"]["b"], np.float32)

    return {
        # conv layer 1, actor||critic fused along N
        "A1": jnp.asarray(np.concatenate([A1a, A1v], axis=1), f32),
        "b1": jnp.asarray(np.concatenate([b1a, b1v])[None, :], f32),
        # conv layer 2, per branch
        "A2a": jnp.asarray(A2a, f32), "b2a": jnp.asarray(b2a[None, :], f32),
        "A2v": jnp.asarray(A2v, f32), "b2v": jnp.asarray(b2v[None, :], f32),
        # linear_{a,v}_0 (PyTorch (out, in) -> pre-transposed)
        "W3a": jnp.asarray(np.asarray(params["linear_a_0"]["w"], np.float32).T, f32),
        "b3a": jnp.asarray(np.asarray(params["linear_a_0"]["b"], np.float32)[None, :], f32),
        "W3v": jnp.asarray(np.asarray(params["linear_v_0"]["w"], np.float32).T, f32),
        "b3v": jnp.asarray(np.asarray(params["linear_v_0"]["b"], np.float32)[None, :], f32),
        # linear_a head split into mu / log_sigma at pack time; linear_v head
        "W_mu": jnp.asarray(wa[:action_dim].T, f32),
        "b_mu": jnp.asarray(ba[:action_dim][None, :], f32),
        "W_ls": jnp.asarray(wa[action_dim:].T, f32),
        "b_ls": jnp.asarray(ba[action_dim:][None, :], f32),
        "W_v": jnp.asarray(np.asarray(params["linear_v"]["w"], np.float32).T, f32),
        "b_v": jnp.asarray(np.asarray(params["linear_v"]["b"], np.float32)[None, :], f32),
    }


# ----------------------------------------------------------------------------
# Pure-JAX reference (lax.conv with circular padding) for a correctness check.
# ----------------------------------------------------------------------------
def _ref_evaluate(params, state, action, action_dim):
    def conv(x, w, b, relu):
        xp = jnp.pad(x, ((0, 0), (0, 0), (1, 1), (1, 1)), mode="wrap")
        y = jax.lax.conv_general_dilated(
            xp, w, (1, 1), "VALID", dimension_numbers=("NCHW", "OIHW", "NCHW"))
        y = y + b.reshape(1, -1, 1, 1)
        return jnp.maximum(y, 0.0) if relu else y

    def lin(x, w, b, relu):
        y = x @ w.T + b
        return jnp.maximum(y, 0.0) if relu else y

    B = state.shape[0]
    x = conv(state, params["conv_a_0"]["w"], params["conv_a_0"]["b"], True)
    x = conv(x, params["conv_a_1"]["w"], params["conv_a_1"]["b"], True)
    x = lin(x.reshape(B, -1), params["linear_a_0"]["w"], params["linear_a_0"]["b"], True)
    x = lin(x, params["linear_a"]["w"], params["linear_a"]["b"], False)
    mu, ls = x[:, :action_dim], x[:, action_dim:]
    sigma = jnp.exp(ls)
    lp = -((action - mu) ** 2) / (2 * sigma * sigma) - ls - _HALF_LOG_2PI
    ent = 0.5 + _HALF_LOG_2PI + ls
    x = conv(state, params["conv_v_0"]["w"], params["conv_v_0"]["b"], True)
    x = conv(x, params["conv_v_1"]["w"], params["conv_v_1"]["b"], True)
    x = lin(x.reshape(B, -1), params["linear_v_0"]["w"], params["linear_v_0"]["b"], True)
    v = lin(x, params["linear_v"]["w"], params["linear_v"]["b"], False)
    return lp, v, ent, mu, ls


# ----------------------------------------------------------------------------
if __name__ == "__main__":
    input_shape = (4, 8, 8)        # (C_in, H, W) — module-consistent small shape
    action_dim = 2
    n_out_channels = 8
    batch_size = 2

    key = jax.random.PRNGKey(0)
    kp, ks, ka = jax.random.split(key, 3)
    params = init_params(kp, input_shape, action_dim, n_out_channels)
    packed = pack_params(params, input_shape, n_out_channels, action_dim)

    state = jax.random.normal(ks, (batch_size,) + input_shape, jnp.float32)   # NCHW
    action = jax.random.normal(ka, (batch_size, action_dim), jnp.float32)

    eval_fn = jax.jit(evaluate)
    lp, value, ent = eval_fn(packed, state, action)
    jax.block_until_ready((lp, value, ent))

    assert lp.shape == (batch_size, action_dim)
    assert value.shape == (batch_size, 1)
    assert ent.shape == (batch_size, action_dim)

    # Cross-check fused Pallas result against the pure-JAX reference.
    rlp, rv, rent, rmu, rls = _ref_evaluate(params, state, action, action_dim)
    np.testing.assert_allclose(np.asarray(lp), np.asarray(rlp), rtol=1e-4, atol=1e-4)
    np.testing.assert_allclose(np.asarray(value), np.asarray(rv), rtol=1e-4, atol=1e-4)
    np.testing.assert_allclose(np.asarray(ent), np.asarray(rent), rtol=1e-4, atol=1e-4)

    # Also exercise infer() and check mu/log_sigma.
    mu, log_sigma = jax.jit(infer)(packed, state)
    jax.block_until_ready((mu, log_sigma))
    assert mu.shape == (batch_size, action_dim) and log_sigma.shape == (batch_size, action_dim)
    np.testing.assert_allclose(np.asarray(mu), np.asarray(rmu), rtol=1e-4, atol=1e-4)
    np.testing.assert_allclose(np.asarray(log_sigma), np.asarray(rls), rtol=1e-4, atol=1e-4)

    print("KERNEL_OK")
</pallas_src>

<mosaic_0001>
module attributes {stable_mosaic.version = 11 : i64} {
  func.func @_fused_kernel(%arg0: memref<2x256xf32, #tpu.memory_space<vmem>>, %arg1: memref<2x2xf32, #tpu.memory_space<vmem>>, %arg2: memref<256x1024xf32, #tpu.memory_space<vmem>>, %arg3: memref<1x1024xf32, #tpu.memory_space<vmem>>, %arg4: memref<512x512xf32, #tpu.memory_space<vmem>>, %arg5: memref<1x512xf32, #tpu.memory_space<vmem>>, %arg6: memref<512x512xf32, #tpu.memory_space<vmem>>, %arg7: memref<1x512xf32, #tpu.memory_space<vmem>>, %arg8: memref<512x8xf32, #tpu.memory_space<vmem>>, %arg9: memref<1x8xf32, #tpu.memory_space<vmem>>, %arg10: memref<512x8xf32, #tpu.memory_space<vmem>>, %arg11: memref<1x8xf32, #tpu.memory_space<vmem>>, %arg12: memref<8x2xf32, #tpu.memory_space<vmem>>, %arg13: memref<1x2xf32, #tpu.memory_space<vmem>>, %arg14: memref<8x2xf32, #tpu.memory_space<vmem>>, %arg15: memref<1x2xf32, #tpu.memory_space<vmem>>, %arg16: memref<8x1xf32, #tpu.memory_space<vmem>>, %arg17: memref<1x1xf32, #tpu.memory_space<vmem>>, %arg18: memref<2x2xf32, #tpu.memory_space<vmem>>, %arg19: memref<2x2xf32, #tpu.memory_space<vmem>>, %arg20: memref<2x2xf32, #tpu.memory_space<vmem>>, %arg21: memref<2x2xf32, #tpu.memory_space<vmem>>, %arg22: memref<2x1xf32, #tpu.memory_space<vmem>>) attributes {dimension_semantics = [], scalar_prefetch = 0 : i64, scratch_operands = 0 : i64, tpu.core_type = #tpu.core_type<tc>} {
    %c0 = arith.constant 0 : index
    %c0_0 = arith.constant 0 : index
    %0 = vector.load %arg0[%c0, %c0_0] : memref<2x256xf32, #tpu.memory_space<vmem>>, vector<2x256xf32>
    %c0_1 = arith.constant 0 : index
    %c0_2 = arith.constant 0 : index
    %1 = vector.load %arg2[%c0_1, %c0_2] : memref<256x1024xf32, #tpu.memory_space<vmem>>, vector<256x1024xf32>
    %cst = arith.constant dense<0.000000e+00> : vector<2x1024xf32>
    %2 = tpu.matmul %0, %1, %cst {dimension_numbers = #tpu.dot_dimension_numbers<[1], [0], [0], [1], [0, 0, 1, 1], [], []>} : vector<2x256xf32>, vector<256x1024xf32>, vector<2x1024xf32> -> vector<2x1024xf32>
    %c0_3 = arith.constant 0 : index
    %c0_4 = arith.constant 0 : index
    %3 = vector.load %arg3[%c0_3, %c0_4] : memref<1x1024xf32, #tpu.memory_space<vmem>>, vector<1x1024xf32>
    %4 = vector.broadcast %3 : vector<1x1024xf32> to vector<2x1024xf32>
    %5 = arith.addf %2, %4 : vector<2x1024xf32>
    %cst_5 = arith.constant 0.000000e+00 : f32
    %6 = vector.broadcast %cst_5 : f32 to vector<2x1024xf32>
    %7 = arith.maximumf %5, %6 : vector<2x1024xf32>
    %8 = vector.extract_strided_slice %7 {offsets = [0, 0], sizes = [2, 512], strides = [1, 1]} : vector<2x1024xf32> to vector<2x512xf32>
    %9 = vector.extract_strided_slice %7 {offsets = [0, 512], sizes = [2, 512], strides = [1, 1]} : vector<2x1024xf32> to vector<2x512xf32>
    %c0_6 = arith.constant 0 : index
    %c0_7 = arith.constant 0 : index
    %10 = vector.load %arg4[%c0_6, %c0_7] : memref<512x512xf32, #tpu.memory_space<vmem>>, vector<512x512xf32>
    %cst_8 = arith.constant dense<0.000000e+00> : vector<2x512xf32>
    %11 = tpu.matmul %8, %10, %cst_8 {dimension_numbers = #tpu.dot_dimension_numbers<[1], [0], [0], [1], [0, 0, 1, 1], [], []>} : vector<2x512xf32>, vector<512x512xf32>, vector<2x512xf32> -> vector<2x512xf32>
    %c0_9 = arith.constant 0 : index
    %c0_10 = arith.constant 0 : index
    %12 = vector.load %arg5[%c0_9, %c0_10] : memref<1x512xf32, #tpu.memory_space<vmem>>, vector<1x512xf32>
    %13 = vector.broadcast %12 : vector<1x512xf32> to vector<2x512xf32>
    %14 = arith.addf %11, %13 : vector<2x512xf32>
    %cst_11 = arith.constant 0.000000e+00 : f32
    %15 = vector.broadcast %cst_11 : f32 to vector<2x512xf32>
    %16 = arith.maximumf %14, %15 : vector<2x512xf32>
    %c0_12 = arith.constant 0 : index
    %c0_13 = arith.constant 0 : index
    %17 = vector.load %arg6[%c0_12, %c0_13] : memref<512x512xf32, #tpu.memory_space<vmem>>, vector<512x512xf32>
    %cst_14 = arith.constant dense<0.000000e+00> : vector<2x512xf32>
    %18 = tpu.matmul %9, %17, %cst_14 {dimension_numbers = #tpu.dot_dimension_numbers<[1], [0], [0], [1], [0, 0, 1, 1], [], []>} : vector<2x512xf32>, vector<512x512xf32>, vector<2x512xf32> -> vector<2x512xf32>
    %c0_15 = arith.constant 0 : index
    %c0_16 = arith.constant 0 : index
    %19 = vector.load %arg7[%c0_15, %c0_16] : memref<1x512xf32, #tpu.memory_space<vmem>>, vector<1x512xf32>
    %20 = vector.broadcast %19 : vector<1x512xf32> to vector<2x512xf32>
    %21 = arith.addf %18, %20 : vector<2x512xf32>
    %cst_17 = arith.constant 0.000000e+00 : f32
    %22 = vector.broadcast %cst_17 : f32 to vector<2x512xf32>
    %23 = arith.maximumf %21, %22 : vector<2x512xf32>
    %c0_18 = arith.constant 0 : index
    %c0_19 = arith.constant 0 : index
    %24 = vector.load %arg8[%c0_18, %c0_19] : memref<512x8xf32, #tpu.memory_space<vmem>>, vector<512x8xf32>
    %cst_20 = arith.constant dense<0.000000e+00> : vector<2x8xf32>
    %25 = tpu.matmul %16, %24, %cst_20 {dimension_numbers = #tpu.dot_dimension_numbers<[1], [0], [0], [1], [0, 0, 1, 1], [], []>} : vector<2x512xf32>, vector<512x8xf32>, vector<2x8xf32> -> vector<2x8xf32>
    %c0_21 = arith.constant 0 : index
    %c0_22 = arith.constant 0 : index
    %26 = vector.load %arg9[%c0_21, %c0_22] : memref<1x8xf32, #tpu.memory_space<vmem>>, vector<1x8xf32>
    %27 = vector.broadcast %26 : vector<1x8xf32> to vector<2x8xf32>
    %28 = arith.addf %25, %27 : vector<2x8xf32>
    %cst_23 = arith.constant 0.000000e+00 : f32
    %29 = vector.broadcast %cst_23 : f32 to vector<2x8xf32>
    %30 = arith.maximumf %28, %29 : vector<2x8xf32>
    %c0_24 = arith.constant 0 : index
    %c0_25 = arith.constant 0 : index
    %31 = vector.load %arg10[%c0_24, %c0_25] : memref<512x8xf32, #tpu.memory_space<vmem>>, vector<512x8xf32>
    %cst_26 = arith.constant dense<0.000000e+00> : vector<2x8xf32>
    %32 = tpu.matmul %23, %31, %cst_26 {dimension_numbers = #tpu.dot_dimension_numbers<[1], [0], [0], [1], [0, 0, 1, 1], [], []>} : vector<2x512xf32>, vector<512x8xf32>, vector<2x8xf32> -> vector<2x8xf32>
    %c0_27 = arith.constant 0 : index
    %c0_28 = arith.constant 0 : index
    %33 = vector.load %arg11[%c0_27, %c0_28] : memref<1x8xf32, #tpu.memory_space<vmem>>, vector<1x8xf32>
    %34 = vector.broadcast %33 : vector<1x8xf32> to vector<2x8xf32>
    %35 = arith.addf %32, %34 : vector<2x8xf32>
    %cst_29 = arith.constant 0.000000e+00 : f32
    %36 = vector.broadcast %cst_29 : f32 to vector<2x8xf32>
    %37 = arith.maximumf %35, %36 : vector<2x8xf32>
    %c0_30 = arith.constant 0 : index
    %c0_31 = arith.constant 0 : index
    %38 = vector.load %arg12[%c0_30, %c0_31] : memref<8x2xf32, #tpu.memory_space<vmem>>, vector<8x2xf32>
    %cst_32 = arith.constant dense<0.000000e+00> : vector<2x2xf32>
    %39 = tpu.matmul %30, %38, %cst_32 {dimension_numbers = #tpu.dot_dimension_numbers<[1], [0], [0], [1], [0, 0, 1, 1], [], []>} : vector<2x8xf32>, vector<8x2xf32>, vector<2x2xf32> -> vector<2x2xf32>
    %c0_33 = arith.constant 0 : index
    %c0_34 = arith.constant 0 : index
    %40 = vector.load %arg13[%c0_33, %c0_34] : memref<1x2xf32, #tpu.memory_space<vmem>>, vector<1x2xf32>
    %41 = vector.broadcast %40 : vector<1x2xf32> to vector<2x2xf32>
    %42 = arith.addf %39, %41 : vector<2x2xf32>
    %c0_35 = arith.constant 0 : index
    %c0_36 = arith.constant 0 : index
    %43 = vector.load %arg14[%c0_35, %c0_36] : memref<8x2xf32, #tpu.memory_space<vmem>>, vector<8x2xf32>
    %cst_37 = arith.constant dense<0.000000e+00> : vector<2x2xf32>
    %44 = tpu.matmul %30, %43, %cst_37 {dimension_numbers = #tpu.dot_dimension_numbers<[1], [0], [0], [1], [0, 0, 1, 1], [], []>} : vector<2x8xf32>, vector<8x2xf32>, vector<2x2xf32> -> vector<2x2xf32>
    %c0_38 = arith.constant 0 : index
    %c0_39 = arith.constant 0 : index
    %45 = vector.load %arg15[%c0_38, %c0_39] : memref<1x2xf32, #tpu.memory_space<vmem>>, vector<1x2xf32>
    %46 = vector.broadcast %45 : vector<1x2xf32> to vector<2x2xf32>
    %47 = arith.addf %44, %46 : vector<2x2xf32>
    %c0_40 = arith.constant 0 : index
    %c0_41 = arith.constant 0 : index
    %48 = vector.load %arg16[%c0_40, %c0_41] : memref<8x1xf32, #tpu.memory_space<vmem>>, vector<8x1xf32>
    %cst_42 = arith.constant dense<0.000000e+00> : vector<2x1xf32>
    %49 = tpu.matmul %37, %48, %cst_42 {dimension_numbers = #tpu.dot_dimension_numbers<[1], [0], [0], [1], [0, 0, 1, 1], [], []>} : vector<2x8xf32>, vector<8x1xf32>, vector<2x1xf32> -> vector<2x1xf32>
    %c0_43 = arith.constant 0 : index
    %c0_44 = arith.constant 0 : index
    %50 = vector.load %arg17[%c0_43, %c0_44] : memref<1x1xf32, #tpu.memory_space<vmem>>, vector<1x1xf32>
    %51 = vector.broadcast %50 : vector<1x1xf32> to vector<2x1xf32>
    %52 = arith.addf %49, %51 : vector<2x1xf32>
    %c0_45 = arith.constant 0 : index
    %c0_46 = arith.constant 0 : index
    %53 = vector.load %arg1[%c0_45, %c0_46] : memref<2x2xf32, #tpu.memory_space<vmem>>, vector<2x2xf32>
    %cst_47 = arith.constant -2.000000e+00 : f32
    %54 = vector.broadcast %cst_47 : f32 to vector<2x2xf32>
    %55 = arith.mulf %54, %47 : vector<2x2xf32>
    %56 = math.exp %55 : vector<2x2xf32>
    %57 = arith.subf %53, %42 : vector<2x2xf32>
    %cst_48 = arith.constant -5.000000e-01 : f32
    %58 = vector.broadcast %cst_48 : f32 to vector<2x2xf32>
    %59 = arith.mulf %58, %57 : vector<2x2xf32>
    %60 = arith.mulf %59, %57 : vector<2x2xf32>
    %61 = arith.mulf %60, %56 : vector<2x2xf32>
    %62 = arith.subf %61, %47 : vector<2x2xf32>
    %cst_49 = arith.constant 0.918938517 : f32
    %63 = vector.broadcast %cst_49 : f32 to vector<2x2xf32>
    %64 = arith.subf %62, %63 : vector<2x2xf32>
    %cst_50 = arith.constant 1.41893852 : f32
    %65 = vector.broadcast %cst_50 : f32 to vector<2x2xf32>
    %66 = arith.addf %65, %47 : vector<2x2xf32>
    %c0_51 = arith.constant 0 : index
    %c0_52 = arith.constant 0 : index
    %67 = vector.load %arg18[%c0_51, %c0_52] : memref<2x2xf32, #tpu.memory_space<vmem>>, vector<2x2xf32>
    tpu.vector_store %arg18[%c0_51, %c0_52], %42 {strides = array<i32>} : memref<2x2xf32, #tpu.memory_space<vmem>>, vector<2x2xf32>,
    %c0_53 = arith.constant 0 : index
    %c0_54 = arith.constant 0 : index
    %68 = vector.load %arg19[%c0_53, %c0_54] : memref<2x2xf32, #tpu.memory_space<vmem>>, vector<2x2xf32>
    tpu.vector_store %arg19[%c0_53, %c0_54], %47 {strides = array<i32>} : memref<2x2xf32, #tpu.memory_space<vmem>>, vector<2x2xf32>,
    %c0_55 = arith.constant 0 : index
    %c0_56 = arith.constant 0 : index
    %69 = vector.load %arg20[%c0_55, %c0_56] : memref<2x2xf32, #tpu.memory_space<vmem>>, vector<2x2xf32>
    tpu.vector_store %arg20[%c0_55, %c0_56], %64 {strides = array<i32>} : memref<2x2xf32, #tpu.memory_space<vmem>>, vector<2x2xf32>,
    %c0_57 = arith.constant 0 : index
    %c0_58 = arith.constant 0 : index
    %70 = vector.load %arg21[%c0_57, %c0_58] : memref<2x2xf32, #tpu.memory_space<vmem>>, vector<2x2xf32>
    tpu.vector_store %arg21[%c0_57, %c0_58], %66 {strides = array<i32>} : memref<2x2xf32, #tpu.memory_space<vmem>>, vector<2x2xf32>,
    %c0_59 = arith.constant 0 : index
    %c0_60 = arith.constant 0 : index
    %71 = vector.load %arg22[%c0_59, %c0_60] : memref<2x1xf32, #tpu.memory_space<vmem>>, vector<2x1xf32>
    tpu.vector_store %arg22[%c0_59, %c0_60], %52 {strides = array<i32>} : memref<2x1xf32, #tpu.memory_space<vmem>>, vector<2x1xf32>,
    return
  }
}

</mosaic_0001>

<llo_original>
// kernel: evaluate.1
$region0: #{evaluate.1}
  #allocation0 [shape = 'u32[]', space=smem, size = 0x4, offset = 0x4, fixed_abs, tag = 'smem constant byte address 0x4 - core index']
  #allocation1 [shape = 'u32[144,128]{1,0:T(1,128)}', space=vmem, size = 0x12000, scoped, tag = 'internal scratch']
  #allocation2 [shape = 'f32[1,1]{1,0:T(1,128)S(1)}', space=vmem, size = 0x200, scoped, tag = 'scoped memory for evaluate.1']
  %s0 = inlined_call_operand.vmem [shape: f32[2,256], index: 0, kind: input, shape index: {}]
  %s1 = inlined_call_operand.vmem [shape: f32[2,2], index: 1, kind: input, shape index: {}]
  %s2 = inlined_call_operand.hbm [shape: f32[256,1024], index: 2, kind: input, shape index: {}]
  %s3 = inlined_call_operand.vmem [shape: f32[1,1024], index: 3, kind: input, shape index: {}]
  %s4 = inlined_call_operand.hbm [shape: f32[512,512], index: 4, kind: input, shape index: {}]
  %s5 = inlined_call_operand.vmem [shape: f32[1,512], index: 5, kind: input, shape index: {}]
  %s6 = inlined_call_operand.hbm [shape: f32[512,512], index: 6, kind: input, shape index: {}]
  %s7 = inlined_call_operand.vmem [shape: f32[1,512], index: 7, kind: input, shape index: {}]
  %s8 = inlined_call_operand.vmem [shape: f32[512,8], index: 8, kind: input, shape index: {}]
  %s9 = inlined_call_operand.vmem [shape: f32[1,8], index: 9, kind: input, shape index: {}]
  %s10 = inlined_call_operand.vmem [shape: f32[512,8], index: 10, kind: input, shape index: {}]
  %s11 = inlined_call_operand.vmem [shape: f32[1,8], index: 11, kind: input, shape index: {}]
  %s12 = inlined_call_operand.vmem [shape: f32[8,2], index: 12, kind: input, shape index: {}]
  %s13 = inlined_call_operand.vmem [shape: f32[1,2], index: 13, kind: input, shape index: {}]
  %s14 = inlined_call_operand.vmem [shape: f32[8,2], index: 14, kind: input, shape index: {}]
  %s15 = inlined_call_operand.vmem [shape: f32[1,2], index: 15, kind: input, shape index: {}]
  %s16 = inlined_call_operand.vmem [shape: f32[8,1], index: 16, kind: input, shape index: {}]
  %s17 = inlined_call_operand.<no memory space> [shape: f32[1,1], index: 17, kind: input, shape index: {}]
  %s18 = inlined_call_operand.hbm [shape: f32[2,2], index: 18, kind: output, shape index: {0}]
  %s19 = inlined_call_operand.hbm [shape: f32[2,2], index: 19, kind: output, shape index: {1}]
  %s20 = inlined_call_operand.hbm [shape: f32[2,2], index: 20, kind: output, shape index: {2}]
  %s21 = inlined_call_operand.hbm [shape: f32[2,2], index: 21, kind: output, shape index: {3}]
  %s22 = inlined_call_operand.vmem [shape: f32[2,1], index: 22, kind: output, shape index: {4}]
  %23 = xla_tuple %s18, %s19, %s20, %s21, %s22
  %s24 = sld [smem:[#allocation0]]
  $region126: #{evaluate.1} parent=0
    _
  %s26 = ssub.s32 1, %s24
  %s27 = scalar_select 0, %s26, %s24
  %v28 = vstv %s17
  %29 = vst [vmem:[#allocation2] sm:$0x1] %v28
  $region1: #{evaluate.1} parent=0
    #allocation3 [shape = 'u8[1048576]{0}', space=vmem, size = 0x100000, scoped, tag = 'input window, operand 2, single buffered']
    #allocation4 [shape = 's32[1]{0}', space=sflag, size = 0x4, scoped, tag = 'scoped memory for evaluate.1']
    #allocation5 [shape = 's32[1]{0}', space=sflag, size = 0x4, scoped, tag = 'scoped memory for evaluate.1']
    #allocation6 [shape = 'u8[1048576]{0}', space=vmem, size = 0x100000, scoped, tag = 'input window, operand 4, single buffered']
    #allocation7 [shape = 's32[1]{0}', space=sflag, size = 0x4, scoped, tag = 'scoped memory for evaluate.1']
    #allocation8 [shape = 'u8[1048576]{0}', space=vmem, size = 0x100000, scoped, tag = 'input window, operand 6, single buffered']
    #allocation9 [shape = 'u8[1024]{0}', space=vmem, size = 0x400, scoped, tag = 'output window, operand 0, single buffered']
    #allocation10 [shape = 'u8[1024]{0}', space=vmem, size = 0x400, scoped, tag = 'output window, operand 1, single buffered']
    #allocation11 [shape = 's32[1]{0}', space=sflag, size = 0x4, scoped, tag = 'scoped memory for evaluate.1']
    #allocation12 [shape = 'u8[1024]{0}', space=vmem, size = 0x400, scoped, tag = 'output window, operand 2, single buffered']
    #allocation13 [shape = 'u8[1024]{0}', space=vmem, size = 0x400, scoped, tag = 'output window, operand 3, single buffered']
    #allocation14 [shape = 's32[1]{0}', space=sflag, size = 0x4, scoped, tag = 'scoped memory for evaluate.1']
    %30 = vsyncpa [#allocation4], 0
    %31 = vsyncpa [#allocation7], 0
    %32 = vsyncpa [#allocation5], 0
    %33 = vsyncpa [#allocation11], 0
    %34 = vsyncpa [#allocation14], 0
    // Predicated region
    $region2: #{evaluate.1} parent=1 // pred_check
      _
    $region3: #{evaluate.1} parent=1 // pred_check_branch
      %36 = sbr.rel (0) target = $region5
    $region4: #{evaluate.1} parent=1 // pred_region
      _
    $region5: #{evaluate.1} parent=1 // pred_fallthru
      _
    // Predicated region
    $region6: #{evaluate.1} parent=1 // pred_check
      _
    $region7: #{evaluate.1} parent=1 // pred_check_branch
      %38 = sbr.rel (0) target = $region9
    $region8: #{evaluate.1} parent=1 // pred_region
      _
    $region9: #{evaluate.1} parent=1 // pred_fallthru
      _
    // Predicated region
    $region10: #{evaluate.1} parent=1 // pred_check
      _
    $region11: #{evaluate.1} parent=1 // pred_check_branch
      %40 = sbr.rel (0) target = $region13
    $region12: #{evaluate.1} parent=1 // pred_region
      %s42 = ssub.s32 32768, 32768
      %43 = vsyncadd [#allocation4], %s42
      %s44 = sshll.u32 [#allocation3], 4
      %s45 = int_to_ptr.vmem [resolvable:$true] %s44
      %50 = dma.hbm_to_vmem [thread:$0]  %s2, 32768, %s45, [#allocation4], 1024, 1024, 64
    $region13: #{evaluate.1} parent=1 // pred_fallthru
      _
    // Predicated region
    $region14: #{evaluate.1} parent=1 // pred_check
      _
    $region15: #{evaluate.1} parent=1 // pred_check_branch
      %52 = sbr.rel (0) target = $region17
    $region16: #{evaluate.1} parent=1 // pred_region
      _
    $region17: #{evaluate.1} parent=1 // pred_fallthru
      _
    // Predicated region
    $region18: #{evaluate.1} parent=1 // pred_check
      _
    $region19: #{evaluate.1} parent=1 // pred_check_branch
      %54 = sbr.rel (0) target = $region21
    $region20: #{evaluate.1} parent=1 // pred_region
      %s56 = ssub.s32 32768, 32768
      %57 = vsyncadd [#allocation7], %s56
      %s58 = sshll.u32 [#allocation6], 4
      %s59 = int_to_ptr.vmem [resolvable:$true] %s58
      %64 = dma.hbm_to_vmem [thread:$0]  %s4, 32768, %s59, [#allocation7], 512, 512, 32
    $region21: #{evaluate.1} parent=1 // pred_fallthru
      _
    // Predicated region
    $region22: #{evaluate.1} parent=1 // pred_check
      _
    $region23: #{evaluate.1} parent=1 // pred_check_branch
      %66 = sbr.rel (0) target = $region25
    $region24: #{evaluate.1} parent=1 // pred_region
      _
    $region25: #{evaluate.1} parent=1 // pred_fallthru
      _
    // Predicated region
    $region26: #{evaluate.1} parent=1 // pred_check
      _
    $region27: #{evaluate.1} parent=1 // pred_check_branch
      %68 = sbr.rel (0) target = $region29
    $region28: #{evaluate.1} parent=1 // pred_region
      %s70 = ssub.s32 32768, 32768
      %71 = vsyncadd [#allocation7], %s70
      %s72 = sshll.u32 [#allocation8], 4
      %s73 = int_to_ptr.vmem [resolvable:$true] %s72
      %78 = dma.hbm_to_vmem [thread:$0]  %s6, 32768, %s73, [#allocation7], 512, 512, 32
    $region29: #{evaluate.1} parent=1 // pred_fallthru
      _
    // Predicated region
    $region30: #{evaluate.1} parent=1 // pred_check
      _
    $region31: #{evaluate.1} parent=1 // pred_check_branch
      %80 = sbr.rel (0) target = $region33
    $region32: #{evaluate.1} parent=1 // pred_region
      _
    $region33: #{evaluate.1} parent=1 // pred_fallthru
      _
    // Predicated region
    $region34: #{evaluate.1} parent=1 // pred_check
      _
    $region35: #{evaluate.1} parent=1 // pred_check_branch
      %82 = sbr.rel (0) target = $region37
    $region36: #{evaluate.1} parent=1 // pred_region
      _
    $region37: #{evaluate.1} parent=1 // pred_fallthru
      _
    // Predicated region
    $region38: #{evaluate.1} parent=1 // pred_check
      _
    $region39: #{evaluate.1} parent=1 // pred_check_branch
      %84 = sbr.rel (0) target = $region41
    $region40: #{evaluate.1} parent=1 // pred_region
      _
    $region41: #{evaluate.1} parent=1 // pred_fallthru
      _
    // Predicated region
    $region42: #{evaluate.1} parent=1 // pred_check
      _
    $region43: #{evaluate.1} parent=1 // pred_check_branch
      %86 = sbr.rel (0) target = $region45
    $region44: #{evaluate.1} parent=1 // pred_region
      _
    $region45: #{evaluate.1} parent=1 // pred_fallthru
      _
    // Predicated region
    $region46: #{evaluate.1} parent=1 // pred_check
      _
    $region47: #{evaluate.1} parent=1 // pred_check_branch
      %88 = sbr.rel (0) target = $region49
    $region48: #{evaluate.1} parent=1 // pred_region
      _
    $region49: #{evaluate.1} parent=1 // pred_fallthru
      _
    // Predicated region
    $region50: #{evaluate.1} parent=1 // pred_check
      _
    $region51: #{evaluate.1} parent=1 // pred_check_branch
      %90 = sbr.rel (0) target = $region53
    $region52: #{evaluate.1} parent=1 // pred_region
      _
    $region53: #{evaluate.1} parent=1 // pred_fallthru
      _
    // Predicated region
    $region54: #{evaluate.1} parent=1 // pred_check
      _
    $region55: #{evaluate.1} parent=1 // pred_check_branch
      %92 = sbr.rel (0) target = $region57
    $region56: #{evaluate.1} parent=1 // pred_region
      _
    $region57: #{evaluate.1} parent=1 // pred_fallthru
      _
    // Predicated region
    $region58: #{evaluate.1} parent=1 // pred_check
      _
    $region59: #{evaluate.1} parent=1 // pred_check_branch
      %94 = sbr.rel (0) target = $region61
    $region60: #{evaluate.1} parent=1 // pred_region
      _
    $region61: #{evaluate.1} parent=1 // pred_fallthru
      _
    // Predicated region
    $region62: #{evaluate.1} parent=1 // pred_check
      _
    $region63: #{evaluate.1} parent=1 // pred_check_branch
      %96 = sbr.rel (0) target = $region65
    $region64: #{evaluate.1} parent=1 // pred_region
      _
    $region65: #{evaluate.1} parent=1 // pred_fallthru
      _
    // Predicated region
    $region66: #{evaluate.1} parent=1 // pred_check
      _
    $region67: #{evaluate.1} parent=1 // pred_check_branch
      %98 = sbr.rel (0) target = $region69
    $region68: #{evaluate.1} parent=1 // pred_region
      _
    $region69: #{evaluate.1} parent=1 // pred_fallthru
      _
    // Predicated region
    $region70: #{evaluate.1} parent=1 // pred_check
      _
    $region71: #{evaluate.1} parent=1 // pred_check_branch
      %100 = sbr.rel (0) target = $region73
    $region72: #{evaluate.1} parent=1 // pred_region
      _
    $region73: #{evaluate.1} parent=1 // pred_fallthru
      _
    // Predicated region
    $region74: #{evaluate.1} parent=1 // pred_check
      _
    $region75: #{evaluate.1} parent=1 // pred_check_branch
      %102 = sbr.rel (0) target = $region77
    $region76: #{evaluate.1} parent=1 // pred_region
      %103 = dma.done [#allocation4], 32768
    $region77: #{evaluate.1} parent=1 // pred_fallthru
      _
    // Predicated region
    $region78: #{evaluate.1} parent=1 // pred_check
      _
    $region79: #{evaluate.1} parent=1 // pred_check_branch
      %105 = sbr.rel (0) target = $region81
    $region80: #{evaluate.1} parent=1 // pred_region
      %106 = dma.done [#allocation7], 32768
    $region81: #{evaluate.1} parent=1 // pred_fallthru
      _
    // Predicated region
    $region82: #{evaluate.1} parent=1 // pred_check
      _
    $region83: #{evaluate.1} parent=1 // pred_check_branch
      %108 = sbr.rel (0) target = $region85
    $region84: #{evaluate.1} parent=1 // pred_region
      %109 = dma.done [#allocation7], 32768
    $region85: #{evaluate.1} parent=1 // pred_fallthru
      _
    %v110 = vld [vmem:[%s0] sm:$0xf]
    %v111 = vld [vmem:[#allocation3] sm:$0xff]
    %v112 = vld [vmem:[#allocation3 + $0x8] sm:$0xff]
    %v113 = vld [vmem:[#allocation3 + $0x10] sm:$0xff]
    %v114 = vld [vmem:[#allocation3 + $0x18] sm:$0xff]
    %v115 = vld [vmem:[#allocation3 + $0x20] sm:$0xff]
    %v116 = vld [vmem:[#allocation3 + $0x28] sm:$0xff]
    %v117 = vld [vmem:[#allocation3 + $0x30] sm:$0xff]
    %v118 = vld [vmem:[#allocation3 + $0x38] sm:$0xff]
    %v119 = vld [vmem:[#allocation3 + $0x40] sm:$0xff]
    %v120 = vld [vmem:[#allocation3 + $0x48] sm:$0xff]
    %v121 = vld [vmem:[#allocation3 + $0x50] sm:$0xff]
    %v122 = vld [vmem:[#allocation3 + $0x58] sm:$0xff]
    %v123 = vld [vmem:[#allocation3 + $0x60] sm:$0xff]
    %v124 = vld [vmem:[#allocation3 + $0x68] sm:$0xff]
    %v125 = vld [vmem:[#allocation3 + $0x70] sm:$0xff]
    %v126 = vld [vmem:[#allocation3 + $0x78] sm:$0xff]
    %v127 = vld [vmem:[#allocation3 + $0x80] sm:$0xff]
    %v128 = vld [vmem:[#allocation3 + $0x88] sm:$0xff]
    %v129 = vld [vmem:[#allocation3 + $0x90] sm:$0xff]
    %v130 = vld [vmem:[#allocation3 + $0x98] sm:$0xff]
    %v131 = vld [vmem:[#allocation3 + $0xa0] sm:$0xff]
    %v132 = vld [vmem:[#allocation3 + $0xa8] sm:$0xff]
    %v133 = vld [vmem:[#allocation3 + $0xb0] sm:$0xff]
    %v134 = vld [vmem:[#allocation3 + $0xb8] sm:$0xff]
    %v135 = vld [vmem:[#allocation3 + $0xc0] sm:$0xff]
    %v136 = vld [vmem:[#allocation3 + $0xc8] sm:$0xff]
    %v137 = vld [vmem:[#allocation3 + $0xd0] sm:$0xff]
    %v138 = vld [vmem:[#allocation3 + $0xd8] sm:$0xff]
    %v139 = vld [vmem:[#allocation3 + $0xe0] sm:$0xff]
    %v140 = vld [vmem:[#allocation3 + $0xe8] sm:$0xff]
    %v141 = vld [vmem:[#allocation3 + $0xf0] sm:$0xff]
    %v142 = vld [vmem:[#allocation3 + $0xf8] sm:$0xff]
    %v143 = vld [vmem:[#allocation3 + $0x100] sm:$0xff]
    %v144 = vld [vmem:[#allocation3 + $0x108] sm:$0xff]
    %v145 = vld [vmem:[#allocation3 + $0x110] sm:$0xff]
    %v146 = vld [vmem:[#allocation3 + $0x118] sm:$0xff]
    %v147 = vld [vmem:[#allocation3 + $0x120] sm:$0xff]
    %v148 = vld [vmem:[#allocation3 + $0x128] sm:$0xff]
    %v149 = vld [vmem:[#allocation3 + $0x130] sm:$0xff]
    %v150 = vld [vmem:[#allocation3 + $0x138] sm:$0xff]
    %v151 = vld [vmem:[#allocation3 + $0x140] sm:$0xff]
    %v152 = vld [vmem:[#allocation3 + $0x148] sm:$0xff]
    %v153 = vld [vmem:[#allocation3 + $0x150] sm:$0xff]
    %v154 = vld [vmem:[#allocation3 + $0x158] sm:$0xff]
    %v155 = vld [vmem:[#allocation3 + $0x160] sm:$0xff]
    %v156 = vld [vmem:[#allocation3 + $0x168] sm:$0xff]
    %v157 = vld [vmem:[#allocation3 + $0x170] sm:$0xff]
    %v158 = vld [vmem:[#allocation3 + $0x178] sm:$0xff]
    %v159 = vld [vmem:[#allocation3 + $0x180] sm:$0xff]
    %v160 = vld [vmem:[#allocation3 + $0x188] sm:$0xff]
    %v161 = vld [vmem:[#allocation3 + $0x190] sm:$0xff]
    %v162 = vld [vmem:[#allocation3 + $0x198] sm:$0xff]
    %v163 = vld [vmem:[#allocation3 + $0x1a0] sm:$0xff]
    %v164 = vld [vmem:[#allocation3 + $0x1a8] sm:$0xff]
    %v165 = vld [vmem:[#allocation3 + $0x1b0] sm:$0xff]
    %v166 = vld [vmem:[#allocation3 + $0x1b8] sm:$0xff]
    %v167 = vld [vmem:[#allocation3 + $0x1c0] sm:$0xff]
    %v168 = vld [vmem:[#allocation3 + $0x1c8] sm:$0xff]
    %v169 = vld [vmem:[#allocation3 + $0x1d0] sm:$0xff]
    %v170 = vld [vmem:[#allocation3 + $0x1d8] sm:$0xff]
    %v171 = vld [vmem:[#allocation3 + $0x1e0] sm:$0xff]
    %v172 = vld [vmem:[#allocation3 + $0x1e8] sm:$0xff]
    %v173 = vld [vmem:[#allocation3 + $0x1f0] sm:$0xff]
    %v174 = vld [vmem:[#allocation3 + $0x1f8] sm:$0xff]
    %v175 = vld [vmem:[#allocation3 + $0x200] sm:$0xff]
    %v176 = vld [vmem:[#allocation3 + $0x208] sm:$0xff]
    %v177 = vld [vmem:[#allocation3 + $0x210] sm:$0xff]
    %v178 = vld [vmem:[#allocation3 + $0x218] sm:$0xff]
    %v179 = vld [vmem:[#allocation3 + $0x220] sm:$0xff]
    %v180 = vld [vmem:[#allocation3 + $0x228] sm:$0xff]
    %v181 = vld [vmem:[#allocation3 + $0x230] sm:$0xff]
    %v182 = vld [vmem:[#allocation3 + $0x238] sm:$0xff]
    %v183 = vld [vmem:[#allocation3 + $0x240] sm:$0xff]
    %v184 = vld [vmem:[#allocation3 + $0x248] sm:$0xff]
    %v185 = vld [vmem:[#allocation3 + $0x250] sm:$0xff]
    %v186 = vld [vmem:[#allocation3 + $0x258] sm:$0xff]
    %v187 = vld [vmem:[#allocation3 + $0x260] sm:$0xff]
    %v188 = vld [vmem:[#allocation3 + $0x268] sm:$0xff]
    %v189 = vld [vmem:[#allocation3 + $0x270] sm:$0xff]
    %v190 = vld [vmem:[#allocation3 + $0x278] sm:$0xff]
    %v191 = vld [vmem:[#allocation3 + $0x280] sm:$0xff]
    %v192 = vld [vmem:[#allocation3 + $0x288] sm:$0xff]
    %v193 = vld [vmem:[#allocation3 + $0x290] sm:$0xff]
    %v194 = vld [vmem:[#allocation3 + $0x298] sm:$0xff]
    %v195 = vld [vmem:[#allocation3 + $0x2a0] sm:$0xff]
    %v196 = vld [vmem:[#allocation3 + $0x2a8] sm:$0xff]
    %v197 = vld [vmem:[#allocation3 + $0x2b0] sm:$0xff]
    %v198 = vld [vmem:[#allocation3 + $0x2b8] sm:$0xff]
    %v199 = vld [vmem:[#allocation3 + $0x2c0] sm:$0xff]
    %v200 = vld [vmem:[#allocation3 + $0x2c8] sm:$0xff]
    %v201 = vld [vmem:[#allocation3 + $0x2d0] sm:$0xff]
    %v202 = vld [vmem:[#allocation3 + $0x2d8] sm:$0xff]
    %v203 = vld [vmem:[#allocation3 + $0x2e0] sm:$0xff]
    %v204 = vld [vmem:[#allocation3 + $0x2e8] sm:$0xff]
    %v205 = vld [vmem:[#allocation3 + $0x2f0] sm:$0xff]
    %v206 = vld [vmem:[#allocation3 + $0x2f8] sm:$0xff]
    %v207 = vld [vmem:[#allocation3 + $0x300] sm:$0xff]
    %v208 = vld [vmem:[#allocation3 + $0x308] sm:$0xff]
    %v209 = vld [vmem:[#allocation3 + $0x310] sm:$0xff]
    %v210 = vld [vmem:[#allocation3 + $0x318] sm:$0xff]
    %v211 = vld [vmem:[#allocation3 + $0x320] sm:$0xff]
    %v212 = vld [vmem:[#allocation3 + $0x328] sm:$0xff]
    %v213 = vld [vmem:[#allocation3 + $0x330] sm:$0xff]
    %v214 = vld [vmem:[#allocation3 + $0x338] sm:$0xff]
    %v215 = vld [vmem:[#allocation3 + $0x340] sm:$0xff]
    %v216 = vld [vmem:[#allocation3 + $0x348] sm:$0xff]
    %v217 = vld [vmem:[#allocation3 + $0x350] sm:$0xff]
    %v218 = vld [vmem:[#allocation3 + $0x358] sm:$0xff]
    %v219 = vld [vmem:[#allocation3 + $0x360] sm:$0xff]
    %v220 = vld [vmem:[#allocation3 + $0x368] sm:$0xff]
    %v221 = vld [vmem:[#allocation3 + $0x370] sm:$0xff]
    %v222 = vld [vmem:[#allocation3 + $0x378] sm:$0xff]
    %v223 = vld [vmem:[#allocation3 + $0x380] sm:$0xff]
    %v224 = vld [vmem:[#allocation3 + $0x388] sm:$0xff]
    %v225 = vld [vmem:[#allocation3 + $0x390] sm:$0xff]
    %v226 = vld [vmem:[#allocation3 + $0x398] sm:$0xff]
    %v227 = vld [vmem:[#allocation3 + $0x3a0] sm:$0xff]
    %v228 = vld [vmem:[#allocation3 + $0x3a8] sm:$0xff]
    %v229 = vld [vmem:[#allocation3 + $0x3b0] sm:$0xff]
    %v230 = vld [vmem:[#allocation3 + $0x3b8] sm:$0xff]
    %v231 = vld [vmem:[#allocation3 + $0x3c0] sm:$0xff]
    %v232 = vld [vmem:[#allocation3 + $0x3c8] sm:$0xff]
    %v233 = vld [vmem:[#allocation3 + $0x3d0] sm:$0xff]
    %v234 = vld [vmem:[#allocation3 + $0x3d8] sm:$0xff]
    %v235 = vld [vmem:[#allocation3 + $0x3e0] sm:$0xff]
    %v236 = vld [vmem:[#allocation3 + $0x3e8] sm:$0xff]
    %v237 = vld [vmem:[#allocation3 + $0x3f0] sm:$0xff]
    %v238 = vld [vmem:[#allocation3 + $0x3f8] sm:$0xff]
    %v239 = vld [vmem:[#allocation3 + $0x400] sm:$0xff]
    %v240 = vld [vmem:[#allocation3 + $0x408] sm:$0xff]
    %v241 = vld [vmem:[#allocation3 + $0x410] sm:$0xff]
    %v242 = vld [vmem:[#allocation3 + $0x418] sm:$0xff]
    %v243 = vld [vmem:[#allocation3 + $0x420] sm:$0xff]
    %v244 = vld [vmem:[#allocation3 + $0x428] sm:$0xff]
    %v245 = vld [vmem:[#allocation3 + $0x430] sm:$0xff]
    %v246 = vld [vmem:[#allocation3 + $0x438] sm:$0xff]
    %v247 = vld [vmem:[#allocation3 + $0x440] sm:$0xff]
    %v248 = vld [vmem:[#allocation3 + $0x448] sm:$0xff]
    %v249 = vld [vmem:[#allocation3 + $0x450] sm:$0xff]
    %v250 = vld [vmem:[#allocation3 + $0x458] sm:$0xff]
    %v251 = vld [vmem:[#allocation3 + $0x460] sm:$0xff]
    %v252 = vld [vmem:[#allocation3 + $0x468] sm:$0xff]
    %v253 = vld [vmem:[#allocation3 + $0x470] sm:$0xff]
    %v254 = vld [vmem:[#allocation3 + $0x478] sm:$0xff]
    %v255 = vld [vmem:[#allocation3 + $0x480] sm:$0xff]
    %v256 = vld [vmem:[#allocation3 + $0x488] sm:$0xff]
    %v257 = vld [vmem:[#allocation3 + $0x490] sm:$0xff]
    %v258 = vld [vmem:[#allocation3 + $0x498] sm:$0xff]
    %v259 = vld [vmem:[#allocation3 + $0x4a0] sm:$0xff]
    %v260 = vld [vmem:[#allocation3 + $0x4a8] sm:$0xff]
    %v261 = vld [vmem:[#allocation3 + $0x4b0] sm:$0xff]
    %v262 = vld [vmem:[#allocation3 + $0x4b8] sm:$0xff]
    %v263 = vld [vmem:[#allocation3 + $0x4c0] sm:$0xff]
    %v264 = vld [vmem:[#allocation3 + $0x4c8] sm:$0xff]
    %v265 = vld [vmem:[#allocation3 + $0x4d0] sm:$0xff]
    %v266 = vld [vmem:[#allocation3 + $0x4d8] sm:$0xff]
    %v267 = vld [vmem:[#allocation3 + $0x4e0] sm:$0xff]
    %v268 = vld [vmem:[#allocation3 + $0x4e8] sm:$0xff]
    %v269 = vld [vmem:[#allocation3 + $0x4f0] sm:$0xff]
    %v270 = vld [vmem:[#allocation3 + $0x4f8] sm:$0xff]
    %v271 = vld [vmem:[#allocation3 + $0x500] sm:$0xff]
    %v272 = vld [vmem:[#allocation3 + $0x508] sm:$0xff]
    %v273 = vld [vmem:[#allocation3 + $0x510] sm:$0xff]
    %v274 = vld [vmem:[#allocation3 + $0x518] sm:$0xff]
    %v275 = vld [vmem:[#allocation3 + $0x520] sm:$0xff]
    %v276 = vld [vmem:[#allocation3 + $0x528] sm:$0xff]
    %v277 = vld [vmem:[#allocation3 + $0x530] sm:$0xff]
    %v278 = vld [vmem:[#allocation3 + $0x538] sm:$0xff]
    %v279 = vld [vmem:[#allocation3 + $0x540] sm:$0xff]
    %v280 = vld [vmem:[#allocation3 + $0x548] sm:$0xff]
    %v281 = vld [vmem:[#allocation3 + $0x550] sm:$0xff]
    %v282 = vld [vmem:[#allocation3 + $0x558] sm:$0xff]
    %v283 = vld [vmem:[#allocation3 + $0x560] sm:$0xff]
    %v284 = vld [vmem:[#allocation3 + $0x568] sm:$0xff]
    %v285 = vld [vmem:[#allocation3 + $0x570] sm:$0xff]
    %v286 = vld [vmem:[#allocation3 + $0x578] sm:$0xff]
    %v287 = vld [vmem:[#allocation3 + $0x580] sm:$0xff]
    %v288 = vld [vmem:[#allocation3 + $0x588] sm:$0xff]
    %v289 = vld [vmem:[#allocation3 + $0x590] sm:$0xff]
    %v290 = vld [vmem:[#allocation3 + $0x598] sm:$0xff]
    %v291 = vld [vmem:[#allocation3 + $0x5a0] sm:$0xff]
    %v292 = vld [vmem:[#allocation3 + $0x5a8] sm:$0xff]
    %v293 = vld [vmem:[#allocation3 + $0x5b0] sm:$0xff]
    %v294 = vld [vmem:[#allocation3 + $0x5b8] sm:$0xff]
    %v295 = vld [vmem:[#allocation3 + $0x5c0] sm:$0xff]
    %v296 = vld [vmem:[#allocation3 + $0x5c8] sm:$0xff]
    %v297 = vld [vmem:[#allocation3 + $0x5d0] sm:$0xff]
    %v298 = vld [vmem:[#allocation3 + $0x5d8] sm:$0xff]
    %v299 = vld [vmem:[#allocation3 + $0x5e0] sm:$0xff]
    %v300 = vld [vmem:[#allocation3 + $0x5e8] sm:$0xff]
    %v301 = vld [vmem:[#allocation3 + $0x5f0] sm:$0xff]
    %v302 = vld [vmem:[#allocation3 + $0x5f8] sm:$0xff]
    %v303 = vld [vmem:[#allocation3 + $0x600] sm:$0xff]
    %v304 = vld [vmem:[#allocation3 + $0x608] sm:$0xff]
    %v305 = vld [vmem:[#allocation3 + $0x610] sm:$0xff]
    %v306 = vld [vmem:[#allocation3 + $0x618] sm:$0xff]
    %v307 = vld [vmem:[#allocation3 + $0x620] sm:$0xff]
    %v308 = vld [vmem:[#allocation3 + $0x628] sm:$0xff]
    %v309 = vld [vmem:[#allocation3 + $0x630] sm:$0xff]
    %v310 = vld [vmem:[#allocation3 + $0x638] sm:$0xff]
    %v311 = vld [vmem:[#allocation3 + $0x640] sm:$0xff]
    %v312 = vld [vmem:[#allocation3 + $0x648] sm:$0xff]
    %v313 = vld [vmem:[#allocation3 + $0x650] sm:$0xff]
    %v314 = vld [vmem:[#allocation3 + $0x658] sm:$0xff]
    %v315 = vld [vmem:[#allocation3 + $0x660] sm:$0xff]
    %v316 = vld [vmem:[#allocation3 + $0x668] sm:$0xff]
    %v317 = vld [vmem:[#allocation3 + $0x670] sm:$0xff]
    %v318 = vld [vmem:[#allocation3 + $0x678] sm:$0xff]
    %v319 = vld [vmem:[#allocation3 + $0x680] sm:$0xff]
    %v320 = vld [vmem:[#allocation3 + $0x688] sm:$0xff]
    %v321 = vld [vmem:[#allocation3 + $0x690] sm:$0xff]
    %v322 = vld [vmem:[#allocation3 + $0x698] sm:$0xff]
    %v323 = vld [vmem:[#allocation3 + $0x6a0] sm:$0xff]
    %v324 = vld [vmem:[#allocation3 + $0x6a8] sm:$0xff]
    %v325 = vld [vmem:[#allocation3 + $0x6b0] sm:$0xff]
    %v326 = vld [vmem:[#allocation3 + $0x6b8] sm:$0xff]
    %v327 = vld [vmem:[#allocation3 + $0x6c0] sm:$0xff]
    %v328 = vld [vmem:[#allocation3 + $0x6c8] sm:$0xff]
    %v329 = vld [vmem:[#allocation3 + $0x6d0] sm:$0xff]
    %v330 = vld [vmem:[#allocation3 + $0x6d8] sm:$0xff]
    %v331 = vld [vmem:[#allocation3 + $0x6e0] sm:$0xff]
    %v332 = vld [vmem:[#allocation3 + $0x6e8] sm:$0xff]
    %v333 = vld [vmem:[#allocation3 + $0x6f0] sm:$0xff]
    %v334 = vld [vmem:[#allocation3 + $0x6f8] sm:$0xff]
    %v335 = vld [vmem:[#allocation3 + $0x700] sm:$0xff]
    %v336 = vld [vmem:[#allocation3 + $0x708] sm:$0xff]
    %v337 = vld [vmem:[#allocation3 + $0x710] sm:$0xff]
    %v338 = vld [vmem:[#allocation3 + $0x718] sm:$0xff]
    %v339 = vld [vmem:[#allocation3 + $0x720] sm:$0xff]
    %v340 = vld [vmem:[#allocation3 + $0x728] sm:$0xff]
    %v341 = vld [vmem:[#allocation3 + $0x730] sm:$0xff]
    %v342 = vld [vmem:[#allocation3 + $0x738] sm:$0xff]
    %v343 = vld [vmem:[#allocation3 + $0x740] sm:$0xff]
    %v344 = vld [vmem:[#allocation3 + $0x748] sm:$0xff]
    %v345 = vld [vmem:[#allocation3 + $0x750] sm:$0xff]
    %v346 = vld [vmem:[#allocation3 + $0x758] sm:$0xff]
    %v347 = vld [vmem:[#allocation3 + $0x760] sm:$0xff]
    %v348 = vld [vmem:[#allocation3 + $0x768] sm:$0xff]
    %v349 = vld [vmem:[#allocation3 + $0x770] sm:$0xff]
    %v350 = vld [vmem:[#allocation3 + $0x778] sm:$0xff]
    %v351 = vld [vmem:[#allocation3 + $0x780] sm:$0xff]
    %v352 = vld [vmem:[#allocation3 + $0x788] sm:$0xff]
    %v353 = vld [vmem:[#allocation3 + $0x790] sm:$0xff]
    %v354 = vld [vmem:[#allocation3 + $0x798] sm:$0xff]
    %v355 = vld [vmem:[#allocation3 + $0x7a0] sm:$0xff]
    %v356 = vld [vmem:[#allocation3 + $0x7a8] sm:$0xff]
    %v357 = vld [vmem:[#allocation3 + $0x7b0] sm:$0xff]
    %v358 = vld [vmem:[#allocation3 + $0x7b8] sm:$0xff]
    %v359 = vld [vmem:[#allocation3 + $0x7c0] sm:$0xff]
    %v360 = vld [vmem:[#allocation3 + $0x7c8] sm:$0xff]
    %v361 = vld [vmem:[#allocation3 + $0x7d0] sm:$0xff]
    %v362 = vld [vmem:[#allocation3 + $0x7d8] sm:$0xff]
    %v363 = vld [vmem:[#allocation3 + $0x7e0] sm:$0xff]
    %v364 = vld [vmem:[#allocation3 + $0x7e8] sm:$0xff]
    %v365 = vld [vmem:[#allocation3 + $0x7f0] sm:$0xff]
    %v366 = vld [vmem:[#allocation3 + $0x7f8] sm:$0xff]
    %v367 = vld [vmem:[%s3] sm:$0xff]
    %v369 = vlaneseq
    %v370 = vshrl.u32 %v369, 7
    %v371 = vsub.s32 0, %v370
    %v372 = vrot.slane %v367, %v371
    %v373 = vlaneseq
    %v374 = vshrl.u32 %v373, 7
    %v375 = vsub.s32 1, %v374
    %v376 = vrot.slane %v367, %v375
    %v377 = vlaneseq
    %v378 = vshrl.u32 %v377, 7
    %v379 = vsub.s32 2, %v378
    %v380 = vrot.slane %v367, %v379
    %v381 = vlaneseq
    %v382 = vshrl.u32 %v381, 7
    %v383 = vsub.s32 3, %v382
    %v384 = vrot.slane %v367, %v383
    %v385 = vlaneseq
    %v386 = vshrl.u32 %v385, 7
    %v387 = vsub.s32 4, %v386
    %v388 = vrot.slane %v367, %v387
    %v389 = vlaneseq
    %v390 = vshrl.u32 %v389, 7
    %v391 = vsub.s32 5, %v390
    %v392 = vrot.slane %v367, %v391
    %v393 = vlaneseq
    %v394 = vshrl.u32 %v393, 7
    %v395 = vsub.s32 6, %v394
    %v396 = vrot.slane %v367, %v395
    %v397 = vlaneseq
    %v398 = vshrl.u32 %v397, 7
    %v399 = vsub.s32 7, %v398
    %v400 = vrot.slane %v367, %v399
    %v411 = vunpack.c.l.s4 1983009808
    %v412 = vunpack.c.0.s8 %v411
    %v413 = vlaneseq
    %v414 = vshrl.u32 %v413, 7
    %v415 = vsub.s32 %v412, %v414
    %v416 = vrot.slane %v110, %v415
    %v417 = vcombine.high %v416, %v416
    %420 = vmatprep.subr.mxu0 %v232
    %421 = vmatpush1.msra.mxu0 %v231
    %422 = vmatprep.subr.mxu0 %v224
    %423 = vmatpush1.msra.mxu0 %v223
    %424 = vmatprep.subr.mxu0 %v216
    %425 = vmatpush1.msra.mxu0 %v215
    %426 = vmatprep.subr.mxu0 %v208
    %427 = vmatpush1.msra.mxu0 %v207
    %428 = vmatprep.subr.mxu0 %v200
    %429 = vmatpush1.msra.mxu0 %v199
    %430 = vmatprep.subr.mxu0 %v192
    %431 = vmatpush1.msra.mxu0 %v191
    %432 = vmatprep.subr.mxu0 %v184
    %433 = vmatpush1.msra.mxu0 %v183
    %434 = vmatprep.subr.mxu0 %v176
    %435 = vmatpush1.msra.mxu0 %v175
    %436 = vmatprep.subr.mxu0 %v168
    %437 = vmatpush1.msra.mxu0 %v167
    %438 = vmatprep.subr.mxu0 %v160
    %439 = vmatpush1.msra.mxu0 %v159
    %440 = vmatprep.subr.mxu0 %v152
    %441 = vmatpush1.msra.mxu0 %v151
    %442 = vmatprep.subr.mxu0 %v144
    %443 = vmatpush1.msra.mxu0 %v143
    %444 = vmatprep.subr.mxu0 %v136
    %445 = vmatpush1.msra.mxu0 %v135
    %446 = vmatprep.subr.mxu0 %v128
    %447 = vmatpush1.msra.mxu0 %v127
    %448 = vmatprep.subr.mxu0 %v120
    %449 = vmatpush1.msra.mxu0 %v119
    %450 = vmatprep.subr.mxu0 %v112
    %451 = vmatpush1.msra.mxu0 %v111
    %452 = vmatprep.subr.mxu0 %v360
    %453 = vmatpush2.msra.mxu0 %v359
    %454 = vmatprep.subr.mxu0 %v352
    %455 = vmatpush2.msra.mxu0 %v351
    %456 = vmatprep.subr.mxu0 %v344
    %457 = vmatpush2.msra.mxu0 %v343
    %458 = vmatprep.subr.mxu0 %v336
    %459 = vmatpush2.msra.mxu0 %v335
    %460 = vmatprep.subr.mxu0 %v328
    %461 = vmatpush2.msra.mxu0 %v327
    %462 = vmatprep.subr.mxu0 %v320
    %463 = vmatpush2.msra.mxu0 %v319
    %464 = vmatprep.subr.mxu0 %v312
    %465 = vmatpush2.msra.mxu0 %v311
    %466 = vmatprep.subr.mxu0 %v304
    %467 = vmatpush2.msra.mxu0 %v303
    %468 = vmatprep.subr.mxu0 %v296
    %469 = vmatpush2.msra.mxu0 %v295
    %470 = vmatprep.subr.mxu0 %v288
    %471 = vmatpush2.msra.mxu0 %v287
    %472 = vmatprep.subr.mxu0 %v280
    %473 = vmatpush2.msra.mxu0 %v279
    %474 = vmatprep.subr.mxu0 %v272
    %475 = vmatpush2.msra.mxu0 %v271
    %476 = vmatprep.subr.mxu0 %v264
    %477 = vmatpush2.msra.mxu0 %v263
    %478 = vmatprep.subr.mxu0 %v256
    %479 = vmatpush2.msra.mxu0 %v255
    %480 = vmatprep.subr.mxu0 %v248
    %481 = vmatpush2.msra.mxu0 %v247
    %482 = vmatprep.subr.mxu0 %v240
    %483 = vmatpush2.msra.mxu0 %v239
    %484 = vmatprep.mubr.f32.mxu0 %v417
    %485 = vmatmul.mubr.f32.gmra.mxu0 %v416
    %v486 = vpop.f32.mrf.mxu0
    %v487 = vadd.f32 %v372, %v486
    %v488 = vpop.f32.mrf.mxu0
    %v489 = vadd.f32 %v376, %v488
    %490 = vdwg.mxu0
    %491 = vmatprep.subr.mxu0 %v234
    %492 = vmatpush1.msra.mxu0 %v233
    %493 = vmatprep.subr.mxu0 %v226
    %494 = vmatpush1.msra.mxu0 %v225
    %495 = vmatprep.subr.mxu0 %v218
    %496 = vmatpush1.msra.mxu0 %v217
    %497 = vmatprep.subr.mxu0 %v210
    %498 = vmatpush1.msra.mxu0 %v209
    %499 = vmatprep.subr.mxu0 %v202
    %500 = vmatpush1.msra.mxu0 %v201
    %501 = vmatprep.subr.mxu0 %v194
    %502 = vmatpush1.msra.mxu0 %v193
    %503 = vmatprep.subr.mxu0 %v186
    %504 = vmatpush1.msra.mxu0 %v185
    %505 = vmatprep.subr.mxu0 %v178
    %506 = vmatpush1.msra.mxu0 %v177
    %507 = vmatprep.subr.mxu0 %v170
    %508 = vmatpush1.msra.mxu0 %v169
    %509 = vmatprep.subr.mxu0 %v162
    %510 = vmatpush1.msra.mxu0 %v161
    %511 = vmatprep.subr.mxu0 %v154
    %512 = vmatpush1.msra.mxu0 %v153
    %513 = vmatprep.subr.mxu0 %v146
    %514 = vmatpush1.msra.mxu0 %v145
    %515 = vmatprep.subr.mxu0 %v138
    %516 = vmatpush1.msra.mxu0 %v137
    %517 = vmatprep.subr.mxu0 %v130
    %518 = vmatpush1.msra.mxu0 %v129
    %519 = vmatprep.subr.mxu0 %v122
    %520 = vmatpush1.msra.mxu0 %v121
    %521 = vmatprep.subr.mxu0 %v114
    %522 = vmatpush1.msra.mxu0 %v113
    %523 = vmatprep.subr.mxu0 %v362
    %524 = vmatpush2.msra.mxu0 %v361
    %525 = vmatprep.subr.mxu0 %v354
    %526 = vmatpush2.msra.mxu0 %v353
    %527 = vmatprep.subr.mxu0 %v346
    %528 = vmatpush2.msra.mxu0 %v345
    %529 = vmatprep.subr.mxu0 %v338
    %530 = vmatpush2.msra.mxu0 %v337
    %531 = vmatprep.subr.mxu0 %v330
    %532 = vmatpush2.msra.mxu0 %v329
    %533 = vmatprep.subr.mxu0 %v322
    %534 = vmatpush2.msra.mxu0 %v321
    %535 = vmatprep.subr.mxu0 %v314
    %536 = vmatpush2.msra.mxu0 %v313
    %537 = vmatprep.subr.mxu0 %v306
    %538 = vmatpush2.msra.mxu0 %v305
    %539 = vmatprep.subr.mxu0 %v298
    %540 = vmatpush2.msra.mxu0 %v297
    %541 = vmatprep.subr.mxu0 %v290
    %542 = vmatpush2.msra.mxu0 %v289
    %543 = vmatprep.subr.mxu0 %v282
    %544 = vmatpush2.msra.mxu0 %v281
    %545 = vmatprep.subr.mxu0 %v274
    %546 = vmatpush2.msra.mxu0 %v273
    %547 = vmatprep.subr.mxu0 %v266
    %548 = vmatpush2.msra.mxu0 %v265
    %549 = vmatprep.subr.mxu0 %v258
    %550 = vmatpush2.msra.mxu0 %v257
    %551 = vmatprep.subr.mxu0 %v250
    %552 = vmatpush2.msra.mxu0 %v249
    %553 = vmatprep.subr.mxu0 %v242
    %554 = vmatpush2.msra.mxu0 %v241
    %555 = vmatprep.mubr.f32.mxu0 %v417
    %556 = vmatmul.mubr.f32.gmra.mxu0 %v416
    %v557 = vpop.f32.mrf.mxu0
    %v558 = vadd.f32 %v380, %v557
    %v559 = vpop.f32.mrf.mxu0
    %v560 = vadd.f32 %v384, %v559
    %561 = vdwg.mxu0
    %562 = vmatprep.subr.mxu0 %v236
    %563 = vmatpush1.msra.mxu0 %v235
    %564 = vmatprep.subr.mxu0 %v228
    %565 = vmatpush1.msra.mxu0 %v227
    %566 = vmatprep.subr.mxu0 %v220
    %567 = vmatpush1.msra.mxu0 %v219
    %568 = vmatprep.subr.mxu0 %v212
    %569 = vmatpush1.msra.mxu0 %v211
    %570 = vmatprep.subr.mxu0 %v204
    %571 = vmatpush1.msra.mxu0 %v203
    %572 = vmatprep.subr.mxu0 %v196
    %573 = vmatpush1.msra.mxu0 %v195
    %574 = vmatprep.subr.mxu0 %v188
    %575 = vmatpush1.msra.mxu0 %v187
    %576 = vmatprep.subr.mxu0 %v180
    %577 = vmatpush1.msra.mxu0 %v179
    %578 = vmatprep.subr.mxu0 %v172
    %579 = vmatpush1.msra.mxu0 %v171
    %580 = vmatprep.subr.mxu0 %v164
    %581 = vmatpush1.msra.mxu0 %v163
    %582 = vmatprep.subr.mxu0 %v156
    %583 = vmatpush1.msra.mxu0 %v155
    %584 = vmatprep.subr.mxu0 %v148
    %585 = vmatpush1.msra.mxu0 %v147
    %586 = vmatprep.subr.mxu0 %v140
    %587 = vmatpush1.msra.mxu0 %v139
    %588 = vmatprep.subr.mxu0 %v132
    %589 = vmatpush1.msra.mxu0 %v131
    %590 = vmatprep.subr.mxu0 %v124
    %591 = vmatpush1.msra.mxu0 %v123
    %592 = vmatprep.subr.mxu0 %v116
    %593 = vmatpush1.msra.mxu0 %v115
    %594 = vmatprep.subr.mxu0 %v364
    %595 = vmatpush2.msra.mxu0 %v363
    %596 = vmatprep.subr.mxu0 %v356
    %597 = vmatpush2.msra.mxu0 %v355
    %598 = vmatprep.subr.mxu0 %v348
    %599 = vmatpush2.msra.mxu0 %v347
    %600 = vmatprep.subr.mxu0 %v340
    %601 = vmatpush2.msra.mxu0 %v339
    %602 = vmatprep.subr.mxu0 %v332
    %603 = vmatpush2.msra.mxu0 %v331
    %604 = vmatprep.subr.mxu0 %v324
    %605 = vmatpush2.msra.mxu0 %v323
    %606 = vmatprep.subr.mxu0 %v316
    %607 = vmatpush2.msra.mxu0 %v315
    %608 = vmatprep.subr.mxu0 %v308
    %609 = vmatpush2.msra.mxu0 %v307
    %610 = vmatprep.subr.mxu0 %v300
    %611 = vmatpush2.msra.mxu0 %v299
    %612 = vmatprep.subr.mxu0 %v292
    %613 = vmatpush2.msra.mxu0 %v291
    %614 = vmatprep.subr.mxu0 %v284
    %615 = vmatpush2.msra.mxu0 %v283
    %616 = vmatprep.subr.mxu0 %v276
    %617 = vmatpush2.msra.mxu0 %v275
    %618 = vmatprep.subr.mxu0 %v268
    %619 = vmatpush2.msra.mxu0 %v267
    %620 = vmatprep.subr.mxu0 %v260
    %621 = vmatpush2.msra.mxu0 %v259
    %622 = vmatprep.subr.mxu0 %v252
    %623 = vmatpush2.msra.mxu0 %v251
    %624 = vmatprep.subr.mxu0 %v244
    %625 = vmatpush2.msra.mxu0 %v243
    %626 = vmatprep.mubr.f32.mxu0 %v417
    %627 = vmatmul.mubr.f32.gmra.mxu0 %v416
    %v628 = vpop.f32.mrf.mxu0
    %v629 = vadd.f32 %v388, %v628
    %v630 = vpop.f32.mrf.mxu0
    %v631 = vadd.f32 %v392, %v630
    %632 = vdwg.mxu0
    %633 = vmatprep.subr.mxu0 %v238
    %634 = vmatpush1.msra.mxu0 %v237
    %635 = vmatprep.subr.mxu0 %v230
    %636 = vmatpush1.msra.mxu0 %v229
    %637 = vmatprep.subr.mxu0 %v222
    %638 = vmatpush1.msra.mxu0 %v221
    %639 = vmatprep.subr.mxu0 %v214
    %640 = vmatpush1.msra.mxu0 %v213
    %641 = vmatprep.subr.mxu0 %v206
    %642 = vmatpush1.msra.mxu0 %v205
    %643 = vmatprep.subr.mxu0 %v198
    %644 = vmatpush1.msra.mxu0 %v197
    %645 = vmatprep.subr.mxu0 %v190
    %646 = vmatpush1.msra.mxu0 %v189
    %647 = vmatprep.subr.mxu0 %v182
    %648 = vmatpush1.msra.mxu0 %v181
    %649 = vmatprep.subr.mxu0 %v174
    %650 = vmatpush1.msra.mxu0 %v173
    %651 = vmatprep.subr.mxu0 %v166
    %652 = vmatpush1.msra.mxu0 %v165
    %653 = vmatprep.subr.mxu0 %v158
    %654 = vmatpush1.msra.mxu0 %v157
    %655 = vmatprep.subr.mxu0 %v150
    %656 = vmatpush1.msra.mxu0 %v149
    %657 = vmatprep.subr.mxu0 %v142
    %658 = vmatpush1.msra.mxu0 %v141
    %659 = vmatprep.subr.mxu0 %v134
    %660 = vmatpush1.msra.mxu0 %v133
    %661 = vmatprep.subr.mxu0 %v126
    %662 = vmatpush1.msra.mxu0 %v125
    %663 = vmatprep.subr.mxu0 %v118
    %664 = vmatpush1.msra.mxu0 %v117
    %665 = vmatprep.subr.mxu0 %v366
    %666 = vmatpush2.msra.mxu0 %v365
    %667 = vmatprep.subr.mxu0 %v358
    %668 = vmatpush2.msra.mxu0 %v357
    %669 = vmatprep.subr.mxu0 %v350
    %670 = vmatpush2.msra.mxu0 %v349
    %671 = vmatprep.subr.mxu0 %v342
    %672 = vmatpush2.msra.mxu0 %v341
    %673 = vmatprep.subr.mxu0 %v334
    %674 = vmatpush2.msra.mxu0 %v333
    %675 = vmatprep.subr.mxu0 %v326
    %676 = vmatpush2.msra.mxu0 %v325
    %677 = vmatprep.subr.mxu0 %v318
    %678 = vmatpush2.msra.mxu0 %v317
    %679 = vmatprep.subr.mxu0 %v310
    %680 = vmatpush2.msra.mxu0 %v309
    %681 = vmatprep.subr.mxu0 %v302
    %682 = vmatpush2.msra.mxu0 %v301
    %683 = vmatprep.subr.mxu0 %v294
    %684 = vmatpush2.msra.mxu0 %v293
    %685 = vmatprep.subr.mxu0 %v286
    %686 = vmatpush2.msra.mxu0 %v285
    %687 = vmatprep.subr.mxu0 %v278
    %688 = vmatpush2.msra.mxu0 %v277
    %689 = vmatprep.subr.mxu0 %v270
    %690 = vmatpush2.msra.mxu0 %v269
    %691 = vmatprep.subr.mxu0 %v262
    %692 = vmatpush2.msra.mxu0 %v261
    %693 = vmatprep.subr.mxu0 %v254
    %694 = vmatpush2.msra.mxu0 %v253
    %695 = vmatprep.subr.mxu0 %v246
    %696 = vmatpush2.msra.mxu0 %v245
    %697 = vmatprep.mubr.f32.mxu0 %v417
    %698 = vmatmul.mubr.f32.gmra.mxu0 %v416
    %v699 = vpop.f32.mrf.mxu0
    %v700 = vadd.f32 %v396, %v699
    %v701 = vpop.f32.mrf.mxu0
    %v702 = vadd.f32 %v400, %v701
    %703 = vdwg.mxu0
    %v704 = vmax.f32 %v487, 0.0
    %v705 = vmax.f32 %v489, 0.0
    %v706 = vmax.f32 %v558, 0.0
    %v707 = vmax.f32 %v560, 0.0
    %v708 = vmax.f32 %v629, 0.0
    %v709 = vmax.f32 %v631, 0.0
    %v710 = vmax.f32 %v700, 0.0
    %v711 = vmax.f32 %v702, 0.0
    %v712 = vld [vmem:[#allocation6] sm:$0xff]
    %v713 = vld [vmem:[#allocation6 + $0x8] sm:$0xff]
    %v714 = vld [vmem:[#allocation6 + $0x10] sm:$0xff]
    %v715 = vld [vmem:[#allocation6 + $0x18] sm:$0xff]
    %v716 = vld [vmem:[#allocation6 + $0x20] sm:$0xff]
    %v717 = vld [vmem:[#allocation6 + $0x28] sm:$0xff]
    %v718 = vld [vmem:[#allocation6 + $0x30] sm:$0xff]
    %v719 = vld [vmem:[#allocation6 + $0x38] sm:$0xff]
    %v720 = vld [vmem:[#allocation6 + $0x40] sm:$0xff]
    %v721 = vld [vmem:[#allocation6 + $0x48] sm:$0xff]
    %v722 = vld [vmem:[#allocation6 + $0x50] sm:$0xff]
    %v723 = vld [vmem:[#allocation6 + $0x58] sm:$0xff]
    %v724 = vld [vmem:[#allocation6 + $0x60] sm:$0xff]
    %v725 = vld [vmem:[#allocation6 + $0x68] sm:$0xff]
    %v726 = vld [vmem:[#allocation6 + $0x70] sm:$0xff]
    %v727 = vld [vmem:[#allocation6 + $0x78] sm:$0xff]
    %v728 = vld [vmem:[#allocation6 + $0x80] sm:$0xff]
    %v729 = vld [vmem:[#allocation6 + $0x88] sm:$0xff]
    %v730 = vld [vmem:[#allocation6 + $0x90] sm:$0xff]
    %v731 = vld [vmem:[#allocation6 + $0x98] sm:$0xff]
    %v732 = vld [vmem:[#allocation6 + $0xa0] sm:$0xff]
    %v733 = vld [vmem:[#allocation6 + $0xa8] sm:$0xff]
    %v734 = vld [vmem:[#allocation6 + $0xb0] sm:$0xff]
    %v735 = vld [vmem:[#allocation6 + $0xb8] sm:$0xff]
    %v736 = vld [vmem:[#allocation6 + $0xc0] sm:$0xff]
    %v737 = vld [vmem:[#allocation6 + $0xc8] sm:$0xff]
    %v738 = vld [vmem:[#allocation6 + $0xd0] sm:$0xff]
    %v739 = vld [vmem:[#allocation6 + $0xd8] sm:$0xff]
    %v740 = vld [vmem:[#allocation6 + $0xe0] sm:$0xff]
    %v741 = vld [vmem:[#allocation6 + $0xe8] sm:$0xff]
    %v742 = vld [vmem:[#allocation6 + $0xf0] sm:$0xff]
    %v743 = vld [vmem:[#allocation6 + $0xf8] sm:$0xff]
    %v744 = vld [vmem:[#allocation6 + $0x100] sm:$0xff]
    %v745 = vld [vmem:[#allocation6 + $0x108] sm:$0xff]
    %v746 = vld [vmem:[#allocation6 + $0x110] sm:$0xff]
    %v747 = vld [vmem:[#allocation6 + $0x118] sm:$0xff]
    %v748 = vld [vmem:[#allocation6 + $0x120] sm:$0xff]
    %v749 = vld [vmem:[#allocation6 + $0x128] sm:$0xff]
    %v750 = vld [vmem:[#allocation6 + $0x130] sm:$0xff]
    %v751 = vld [vmem:[#allocation6 + $0x138] sm:$0xff]
    %v752 = vld [vmem:[#allocation6 + $0x140] sm:$0xff]
    %v753 = vld [vmem:[#allocation6 + $0x148] sm:$0xff]
    %v754 = vld [vmem:[#allocation6 + $0x150] sm:$0xff]
    %v755 = vld [vmem:[#allocation6 + $0x158] sm:$0xff]
    %v756 = vld [vmem:[#allocation6 + $0x160] sm:$0xff]
    %v757 = vld [vmem:[#allocation6 + $0x168] sm:$0xff]
    %v758 = vld [vmem:[#allocation6 + $0x170] sm:$0xff]
    %v759 = vld [vmem:[#allocation6 + $0x178] sm:$0xff]
    %v760 = vld [vmem:[#allocation6 + $0x180] sm:$0xff]
    %v761 = vld [vmem:[#allocation6 + $0x188] sm:$0xff]
    %v762 = vld [vmem:[#allocation6 + $0x190] sm:$0xff]
    %v763 = vld [vmem:[#allocation6 + $0x198] sm:$0xff]
    %v764 = vld [vmem:[#allocation6 + $0x1a0] sm:$0xff]
    %v765 = vld [vmem:[#allocation6 + $0x1a8] sm:$0xff]
    %v766 = vld [vmem:[#allocation6 + $0x1b0] sm:$0xff]
    %v767 = vld [vmem:[#allocation6 + $0x1b8] sm:$0xff]
    %v768 = vld [vmem:[#allocation6 + $0x1c0] sm:$0xff]
    %v769 = vld [vmem:[#allocation6 + $0x1c8] sm:$0xff]
    %v770 = vld [vmem:[#allocation6 + $0x1d0] sm:$0xff]
    %v771 = vld [vmem:[#allocation6 + $0x1d8] sm:$0xff]
    %v772 = vld [vmem:[#allocation6 + $0x1e0] sm:$0xff]
    %v773 = vld [vmem:[#allocation6 + $0x1e8] sm:$0xff]
    %v774 = vld [vmem:[#allocation6 + $0x1f0] sm:$0xff]
    %v775 = vld [vmem:[#allocation6 + $0x1f8] sm:$0xff]
    %v776 = vld [vmem:[#allocation6 + $0x200] sm:$0xff]
    %v777 = vld [vmem:[#allocation6 + $0x208] sm:$0xff]
    %v778 = vld [vmem:[#allocation6 + $0x210] sm:$0xff]
    %v779 = vld [vmem:[#allocation6 + $0x218] sm:$0xff]
    %v780 = vld [vmem:[#allocation6 + $0x220] sm:$0xff]
    %v781 = vld [vmem:[#allocation6 + $0x228] sm:$0xff]
    %v782 = vld [vmem:[#allocation6 + $0x230] sm:$0xff]
    %v783 = vld [vmem:[#allocation6 + $0x238] sm:$0xff]
    %v784 = vld [vmem:[#allocation6 + $0x240] sm:$0xff]
    %v785 = vld [vmem:[#allocation6 + $0x248] sm:$0xff]
    %v786 = vld [vmem:[#allocation6 + $0x250] sm:$0xff]
    %v787 = vld [vmem:[#allocation6 + $0x258] sm:$0xff]
    %v788 = vld [vmem:[#allocation6 + $0x260] sm:$0xff]
    %v789 = vld [vmem:[#allocation6 + $0x268] sm:$0xff]
    %v790 = vld [vmem:[#allocation6 + $0x270] sm:$0xff]
    %v791 = vld [vmem:[#allocation6 + $0x278] sm:$0xff]
    %v792 = vld [vmem:[#allocation6 + $0x280] sm:$0xff]
    %v793 = vld [vmem:[#allocation6 + $0x288] sm:$0xff]
    %v794 = vld [vmem:[#allocation6 + $0x290] sm:$0xff]
    %v795 = vld [vmem:[#allocation6 + $0x298] sm:$0xff]
    %v796 = vld [vmem:[#allocation6 + $0x2a0] sm:$0xff]
    %v797 = vld [vmem:[#allocation6 + $0x2a8] sm:$0xff]
    %v798 = vld [vmem:[#allocation6 + $0x2b0] sm:$0xff]
    %v799 = vld [vmem:[#allocation6 + $0x2b8] sm:$0xff]
    %v800 = vld [vmem:[#allocation6 + $0x2c0] sm:$0xff]
    %v801 = vld [vmem:[#allocation6 + $0x2c8] sm:$0xff]
    %v802 = vld [vmem:[#allocation6 + $0x2d0] sm:$0xff]
    %v803 = vld [vmem:[#allocation6 + $0x2d8] sm:$0xff]
    %v804 = vld [vmem:[#allocation6 + $0x2e0] sm:$0xff]
    %v805 = vld [vmem:[#allocation6 + $0x2e8] sm:$0xff]
    %v806 = vld [vmem:[#allocation6 + $0x2f0] sm:$0xff]
    %v807 = vld [vmem:[#allocation6 + $0x2f8] sm:$0xff]
    %v808 = vld [vmem:[#allocation6 + $0x300] sm:$0xff]
    %v809 = vld [vmem:[#allocation6 + $0x308] sm:$0xff]
    %v810 = vld [vmem:[#allocation6 + $0x310] sm:$0xff]
    %v811 = vld [vmem:[#allocation6 + $0x318] sm:$0xff]
    %v812 = vld [vmem:[#allocation6 + $0x320] sm:$0xff]
    %v813 = vld [vmem:[#allocation6 + $0x328] sm:$0xff]
    %v814 = vld [vmem:[#allocation6 + $0x330] sm:$0xff]
    %v815 = vld [vmem:[#allocation6 + $0x338] sm:$0xff]
    %v816 = vld [vmem:[#allocation6 + $0x340] sm:$0xff]
    %v817 = vld [vmem:[#allocation6 + $0x348] sm:$0xff]
    %v818 = vld [vmem:[#allocation6 + $0x350] sm:$0xff]
    %v819 = vld [vmem:[#allocation6 + $0x358] sm:$0xff]
    %v820 = vld [vmem:[#allocation6 + $0x360] sm:$0xff]
    %v821 = vld [vmem:[#allocation6 + $0x368] sm:$0xff]
    %v822 = vld [vmem:[#allocation6 + $0x370] sm:$0xff]
    %v823 = vld [vmem:[#allocation6 + $0x378] sm:$0xff]
    %v824 = vld [vmem:[#allocation6 + $0x380] sm:$0xff]
    %v825 = vld [vmem:[#allocation6 + $0x388] sm:$0xff]
    %v826 = vld [vmem:[#allocation6 + $0x390] sm:$0xff]
    %v827 = vld [vmem:[#allocation6 + $0x398] sm:$0xff]
    %v828 = vld [vmem:[#allocation6 + $0x3a0] sm:$0xff]
    %v829 = vld [vmem:[#allocation6 + $0x3a8] sm:$0xff]
    %v830 = vld [vmem:[#allocation6 + $0x3b0] sm:$0xff]
    %v831 = vld [vmem:[#allocation6 + $0x3b8] sm:$0xff]
    %v832 = vld [vmem:[#allocation6 + $0x3c0] sm:$0xff]
    %v833 = vld [vmem:[#allocation6 + $0x3c8] sm:$0xff]
    %v834 = vld [vmem:[#allocation6 + $0x3d0] sm:$0xff]
    %v835 = vld [vmem:[#allocation6 + $0x3d8] sm:$0xff]
    %v836 = vld [vmem:[#allocation6 + $0x3e0] sm:$0xff]
    %v837 = vld [vmem:[#allocation6 + $0x3e8] sm:$0xff]
    %v838 = vld [vmem:[#allocation6 + $0x3f0] sm:$0xff]
    %v839 = vld [vmem:[#allocation6 + $0x3f8] sm:$0xff]
    %v840 = vld [vmem:[#allocation6 + $0x400] sm:$0xff]
    %v841 = vld [vmem:[#allocation6 + $0x408] sm:$0xff]
    %v842 = vld [vmem:[#allocation6 + $0x410] sm:$0xff]
    %v843 = vld [vmem:[#allocation6 + $0x418] sm:$0xff]
    %v844 = vld [vmem:[#allocation6 + $0x420] sm:$0xff]
    %v845 = vld [vmem:[#allocation6 + $0x428] sm:$0xff]
    %v846 = vld [vmem:[#allocation6 + $0x430] sm:$0xff]
    %v847 = vld [vmem:[#allocation6 + $0x438] sm:$0xff]
    %v848 = vld [vmem:[#allocation6 + $0x440] sm:$0xff]
    %v849 = vld [vmem:[#allocation6 + $0x448] sm:$0xff]
    %v850 = vld [vmem:[#allocation6 + $0x450] sm:$0xff]
    %v851 = vld [vmem:[#allocation6 + $0x458] sm:$0xff]
    %v852 = vld [vmem:[#allocation6 + $0x460] sm:$0xff]
    %v853 = vld [vmem:[#allocation6 + $0x468] sm:$0xff]
    %v854 = vld [vmem:[#allocation6 + $0x470] sm:$0xff]
    %v855 = vld [vmem:[#allocation6 + $0x478] sm:$0xff]
    %v856 = vld [vmem:[#allocation6 + $0x480] sm:$0xff]
    %v857 = vld [vmem:[#allocation6 + $0x488] sm:$0xff]
    %v858 = vld [vmem:[#allocation6 + $0x490] sm:$0xff]
    %v859 = vld [vmem:[#allocation6 + $0x498] sm:$0xff]
    %v860 = vld [vmem:[#allocation6 + $0x4a0] sm:$0xff]
    %v861 = vld [vmem:[#allocation6 + $0x4a8] sm:$0xff]
    %v862 = vld [vmem:[#allocation6 + $0x4b0] sm:$0xff]
    %v863 = vld [vmem:[#allocation6 + $0x4b8] sm:$0xff]
    %v864 = vld [vmem:[#allocation6 + $0x4c0] sm:$0xff]
    %v865 = vld [vmem:[#allocation6 + $0x4c8] sm:$0xff]
    %v866 = vld [vmem:[#allocation6 + $0x4d0] sm:$0xff]
    %v867 = vld [vmem:[#allocation6 + $0x4d8] sm:$0xff]
    %v868 = vld [vmem:[#allocation6 + $0x4e0] sm:$0xff]
    %v869 = vld [vmem:[#allocation6 + $0x4e8] sm:$0xff]
    %v870 = vld [vmem:[#allocation6 + $0x4f0] sm:$0xff]
    %v871 = vld [vmem:[#allocation6 + $0x4f8] sm:$0xff]
    %v872 = vld [vmem:[#allocation6 + $0x500] sm:$0xff]
    %v873 = vld [vmem:[#allocation6 + $0x508] sm:$0xff]
    %v874 = vld [vmem:[#allocation6 + $0x510] sm:$0xff]
    %v875 = vld [vmem:[#allocation6 + $0x518] sm:$0xff]
    %v876 = vld [vmem:[#allocation6 + $0x520] sm:$0xff]
    %v877 = vld [vmem:[#allocation6 + $0x528] sm:$0xff]
    %v878 = vld [vmem:[#allocation6 + $0x530] sm:$0xff]
    %v879 = vld [vmem:[#allocation6 + $0x538] sm:$0xff]
    %v880 = vld [vmem:[#allocation6 + $0x540] sm:$0xff]
    %v881 = vld [vmem:[#allocation6 + $0x548] sm:$0xff]
    %v882 = vld [vmem:[#allocation6 + $0x550] sm:$0xff]
    %v883 = vld [vmem:[#allocation6 + $0x558] sm:$0xff]
    %v884 = vld [vmem:[#allocation6 + $0x560] sm:$0xff]
    %v885 = vld [vmem:[#allocation6 + $0x568] sm:$0xff]
    %v886 = vld [vmem:[#allocation6 + $0x570] sm:$0xff]
    %v887 = vld [vmem:[#allocation6 + $0x578] sm:$0xff]
    %v888 = vld [vmem:[#allocation6 + $0x580] sm:$0xff]
    %v889 = vld [vmem:[#allocation6 + $0x588] sm:$0xff]
    %v890 = vld [vmem:[#allocation6 + $0x590] sm:$0xff]
    %v891 = vld [vmem:[#allocation6 + $0x598] sm:$0xff]
    %v892 = vld [vmem:[#allocation6 + $0x5a0] sm:$0xff]
    %v893 = vld [vmem:[#allocation6 + $0x5a8] sm:$0xff]
    %v894 = vld [vmem:[#allocation6 + $0x5b0] sm:$0xff]
    %v895 = vld [vmem:[#allocation6 + $0x5b8] sm:$0xff]
    %v896 = vld [vmem:[#allocation6 + $0x5c0] sm:$0xff]
    %v897 = vld [vmem:[#allocation6 + $0x5c8] sm:$0xff]
    %v898 = vld [vmem:[#allocation6 + $0x5d0] sm:$0xff]
    %v899 = vld [vmem:[#allocation6 + $0x5d8] sm:$0xff]
    %v900 = vld [vmem:[#allocation6 + $0x5e0] sm:$0xff]
    %v901 = vld [vmem:[#allocation6 + $0x5e8] sm:$0xff]
    %v902 = vld [vmem:[#allocation6 + $0x5f0] sm:$0xff]
    %v903 = vld [vmem:[#allocation6 + $0x5f8] sm:$0xff]
    %v904 = vld [vmem:[#allocation6 + $0x600] sm:$0xff]
    %v905 = vld [vmem:[#allocation6 + $0x608] sm:$0xff]
    %v906 = vld [vmem:[#allocation6 + $0x610] sm:$0xff]
    %v907 = vld [vmem:[#allocation6 + $0x618] sm:$0xff]
    %v908 = vld [vmem:[#allocation6 + $0x620] sm:$0xff]
    %v909 = vld [vmem:[#allocation6 + $0x628] sm:$0xff]
    %v910 = vld [vmem:[#allocation6 + $0x630] sm:$0xff]
    %v911 = vld [vmem:[#allocation6 + $0x638] sm:$0xff]
    %v912 = vld [vmem:[#allocation6 + $0x640] sm:$0xff]
    %v913 = vld [vmem:[#allocation6 + $0x648] sm:$0xff]
    %v914 = vld [vmem:[#allocation6 + $0x650] sm:$0xff]
    %v915 = vld [vmem:[#allocation6 + $0x658] sm:$0xff]
    %v916 = vld [vmem:[#allocation6 + $0x660] sm:$0xff]
    %v917 = vld [vmem:[#allocation6 + $0x668] sm:$0xff]
    %v918 = vld [vmem:[#allocation6 + $0x670] sm:$0xff]
    %v919 = vld [vmem:[#allocation6 + $0x678] sm:$0xff]
    %v920 = vld [vmem:[#allocation6 + $0x680] sm:$0xff]
    %v921 = vld [vmem:[#allocation6 + $0x688] sm:$0xff]
    %v922 = vld [vmem:[#allocation6 + $0x690] sm:$0xff]
    %v923 = vld [vmem:[#allocation6 + $0x698] sm:$0xff]
    %v924 = vld [vmem:[#allocation6 + $0x6a0] sm:$0xff]
    %v925 = vld [vmem:[#allocation6 + $0x6a8] sm:$0xff]
    %v926 = vld [vmem:[#allocation6 + $0x6b0] sm:$0xff]
    %v927 = vld [vmem:[#allocation6 + $0x6b8] sm:$0xff]
    %v928 = vld [vmem:[#allocation6 + $0x6c0] sm:$0xff]
    %v929 = vld [vmem:[#allocation6 + $0x6c8] sm:$0xff]
    %v930 = vld [vmem:[#allocation6 + $0x6d0] sm:$0xff]
    %v931 = vld [vmem:[#allocation6 + $0x6d8] sm:$0xff]
    %v932 = vld [vmem:[#allocation6 + $0x6e0] sm:$0xff]
    %v933 = vld [vmem:[#allocation6 + $0x6e8] sm:$0xff]
    %v934 = vld [vmem:[#allocation6 + $0x6f0] sm:$0xff]
    %v935 = vld [vmem:[#allocation6 + $0x6f8] sm:$0xff]
    %v936 = vld [vmem:[#allocation6 + $0x700] sm:$0xff]
    %v937 = vld [vmem:[#allocation6 + $0x708] sm:$0xff]
    %v938 = vld [vmem:[#allocation6 + $0x710] sm:$0xff]
    %v939 = vld [vmem:[#allocation6 + $0x718] sm:$0xff]
    %v940 = vld [vmem:[#allocation6 + $0x720] sm:$0xff]
    %v941 = vld [vmem:[#allocation6 + $0x728] sm:$0xff]
    %v942 = vld [vmem:[#allocation6 + $0x730] sm:$0xff]
    %v943 = vld [vmem:[#allocation6 + $0x738] sm:$0xff]
    %v944 = vld [vmem:[#allocation6 + $0x740] sm:$0xff]
    %v945 = vld [vmem:[#allocation6 + $0x748] sm:$0xff]
    %v946 = vld [vmem:[#allocation6 + $0x750] sm:$0xff]
    %v947 = vld [vmem:[#allocation6 + $0x758] sm:$0xff]
    %v948 = vld [vmem:[#allocation6 + $0x760] sm:$0xff]
    %v949 = vld [vmem:[#allocation6 + $0x768] sm:$0xff]
    %v950 = vld [vmem:[#allocation6 + $0x770] sm:$0xff]
    %v951 = vld [vmem:[#allocation6 + $0x778] sm:$0xff]
    %v952 = vld [vmem:[#allocation6 + $0x780] sm:$0xff]
    %v953 = vld [vmem:[#allocation6 + $0x788] sm:$0xff]
    %v954 = vld [vmem:[#allocation6 + $0x790] sm:$0xff]
    %v955 = vld [vmem:[#allocation6 + $0x798] sm:$0xff]
    %v956 = vld [vmem:[#allocation6 + $0x7a0] sm:$0xff]
    %v957 = vld [vmem:[#allocation6 + $0x7a8] sm:$0xff]
    %v958 = vld [vmem:[#allocation6 + $0x7b0] sm:$0xff]
    %v959 = vld [vmem:[#allocation6 + $0x7b8] sm:$0xff]
    %v960 = vld [vmem:[#allocation6 + $0x7c0] sm:$0xff]
    %v961 = vld [vmem:[#allocation6 + $0x7c8] sm:$0xff]
    %v962 = vld [vmem:[#allocation6 + $0x7d0] sm:$0xff]
    %v963 = vld [vmem:[#allocation6 + $0x7d8] sm:$0xff]
    %v964 = vld [vmem:[#allocation6 + $0x7e0] sm:$0xff]
    %v965 = vld [vmem:[#allocation6 + $0x7e8] sm:$0xff]
    %v966 = vld [vmem:[#allocation6 + $0x7f0] sm:$0xff]
    %v967 = vld [vmem:[#allocation6 + $0x7f8] sm:$0xff]
    %v968 = vld [vmem:[%s5] sm:$0xf]
    %v970 = vlaneseq
    %v971 = vshrl.u32 %v970, 7
    %v972 = vsub.s32 0, %v971
    %v973 = vrot.slane %v968, %v972
    %v974 = vlaneseq
    %v975 = vshrl.u32 %v974, 7
    %v976 = vsub.s32 1, %v975
    %v977 = vrot.slane %v968, %v976
    %v978 = vlaneseq
    %v979 = vshrl.u32 %v978, 7
    %v980 = vsub.s32 2, %v979
    %v981 = vrot.slane %v968, %v980
    %v982 = vlaneseq
    %v983 = vshrl.u32 %v982, 7
    %v984 = vsub.s32 3, %v983
    %v985 = vrot.slane %v968, %v984
    %990 = vmatprep.subr.mxu0 %v773
    %991 = vmatpush1.msra.mxu0 %v772
    %992 = vmatprep.subr.mxu0 %v769
    %993 = vmatpush1.msra.mxu0 %v768
    %994 = vmatprep.subr.mxu0 %v765
    %995 = vmatpush1.msra.mxu0 %v764
    %996 = vmatprep.subr.mxu0 %v761
    %997 = vmatpush1.msra.mxu0 %v760
    %998 = vmatprep.subr.mxu0 %v757
    %999 = vmatpush1.msra.mxu0 %v756
    %1000 = vmatprep.subr.mxu0 %v753
    %1001 = vmatpush1.msra.mxu0 %v752
    %1002 = vmatprep.subr.mxu0 %v749
    %1003 = vmatpush1.msra.mxu0 %v748
    %1004 = vmatprep.subr.mxu0 %v745
    %1005 = vmatpush1.msra.mxu0 %v744
    %1006 = vmatprep.subr.mxu0 %v741
    %1007 = vmatpush1.msra.mxu0 %v740
    %1008 = vmatprep.subr.mxu0 %v737
    %1009 = vmatpush1.msra.mxu0 %v736
    %1010 = vmatprep.subr.mxu0 %v733
    %1011 = vmatpush1.msra.mxu0 %v732
    %1012 = vmatprep.subr.mxu0 %v729
    %1013 = vmatpush1.msra.mxu0 %v728
    %1014 = vmatprep.subr.mxu0 %v725
    %1015 = vmatpush1.msra.mxu0 %v724
    %1016 = vmatprep.subr.mxu0 %v721
    %1017 = vmatpush1.msra.mxu0 %v720
    %1018 = vmatprep.subr.mxu0 %v717
    %1019 = vmatpush1.msra.mxu0 %v716
    %1020 = vmatprep.subr.mxu0 %v713
    %1021 = vmatpush1.msra.mxu0 %v712
    %1022 = vmatprep.subr.mxu0 %v837
    %1023 = vmatpush2.msra.mxu0 %v836
    %1024 = vmatprep.subr.mxu0 %v833
    %1025 = vmatpush2.msra.mxu0 %v832
    %1026 = vmatprep.subr.mxu0 %v829
    %1027 = vmatpush2.msra.mxu0 %v828
    %1028 = vmatprep.subr.mxu0 %v825
    %1029 = vmatpush2.msra.mxu0 %v824
    %1030 = vmatprep.subr.mxu0 %v821
    %1031 = vmatpush2.msra.mxu0 %v820
    %1032 = vmatprep.subr.mxu0 %v817
    %1033 = vmatpush2.msra.mxu0 %v816
    %1034 = vmatprep.subr.mxu0 %v813
    %1035 = vmatpush2.msra.mxu0 %v812
    %1036 = vmatprep.subr.mxu0 %v809
    %1037 = vmatpush2.msra.mxu0 %v808
    %1038 = vmatprep.subr.mxu0 %v805
    %1039 = vmatpush2.msra.mxu0 %v804
    %1040 = vmatprep.subr.mxu0 %v801
    %1041 = vmatpush2.msra.mxu0 %v800
    %1042 = vmatprep.subr.mxu0 %v797
    %1043 = vmatpush2.msra.mxu0 %v796
    %1044 = vmatprep.subr.mxu0 %v793
    %1045 = vmatpush2.msra.mxu0 %v792
    %1046 = vmatprep.subr.mxu0 %v789
    %1047 = vmatpush2.msra.mxu0 %v788
    %1048 = vmatprep.subr.mxu0 %v785
    %1049 = vmatpush2.msra.mxu0 %v784
    %1050 = vmatprep.subr.mxu0 %v781
    %1051 = vmatpush2.msra.mxu0 %v780
    %1052 = vmatprep.subr.mxu0 %v777
    %1053 = vmatpush2.msra.mxu0 %v776
    %1054 = vmatprep.mubr.f32.mxu0 %v705
    %1055 = vmatmul.mubr.f32.gmra.mxu0 %v704
    %v1056 = vpop.f32.mrf.mxu0
    %v1057 = vadd.f32 %v973, %v1056
    %v1058 = vpop.f32.mrf.mxu0
    %v1059 = vadd.f32 %v977, %v1058
    %1060 = vdwg.mxu0
    %1061 = vmatprep.subr.mxu0 %v901
    %1062 = vmatpush1.msra.mxu0 %v900
    %1063 = vmatprep.subr.mxu0 %v897
    %1064 = vmatpush1.msra.mxu0 %v896
    %1065 = vmatprep.subr.mxu0 %v893
    %1066 = vmatpush1.msra.mxu0 %v892
    %1067 = vmatprep.subr.mxu0 %v889
    %1068 = vmatpush1.msra.mxu0 %v888
    %1069 = vmatprep.subr.mxu0 %v885
    %1070 = vmatpush1.msra.mxu0 %v884
    %1071 = vmatprep.subr.mxu0 %v881
    %1072 = vmatpush1.msra.mxu0 %v880
    %1073 = vmatprep.subr.mxu0 %v877
    %1074 = vmatpush1.msra.mxu0 %v876
    %1075 = vmatprep.subr.mxu0 %v873
    %1076 = vmatpush1.msra.mxu0 %v872
    %1077 = vmatprep.subr.mxu0 %v869
    %1078 = vmatpush1.msra.mxu0 %v868
    %1079 = vmatprep.subr.mxu0 %v865
    %1080 = vmatpush1.msra.mxu0 %v864
    %1081 = vmatprep.subr.mxu0 %v861
    %1082 = vmatpush1.msra.mxu0 %v860
    %1083 = vmatprep.subr.mxu0 %v857
    %1084 = vmatpush1.msra.mxu0 %v856
    %1085 = vmatprep.subr.mxu0 %v853
    %1086 = vmatpush1.msra.mxu0 %v852
    %1087 = vmatprep.subr.mxu0 %v849
    %1088 = vmatpush1.msra.mxu0 %v848
    %1089 = vmatprep.subr.mxu0 %v845
    %1090 = vmatpush1.msra.mxu0 %v844
    %1091 = vmatprep.subr.mxu0 %v841
    %1092 = vmatpush1.msra.mxu0 %v840
    %1093 = vmatprep.subr.mxu0 %v965
    %1094 = vmatpush2.msra.mxu0 %v964
    %1095 = vmatprep.subr.mxu0 %v961
    %1096 = vmatpush2.msra.mxu0 %v960
    %1097 = vmatprep.subr.mxu0 %v957
    %1098 = vmatpush2.msra.mxu0 %v956
    %1099 = vmatprep.subr.mxu0 %v953
    %1100 = vmatpush2.msra.mxu0 %v952
    %1101 = vmatprep.subr.mxu0 %v949
    %1102 = vmatpush2.msra.mxu0 %v948
    %1103 = vmatprep.subr.mxu0 %v945
    %1104 = vmatpush2.msra.mxu0 %v944
    %1105 = vmatprep.subr.mxu0 %v941
    %1106 = vmatpush2.msra.mxu0 %v940
    %1107 = vmatprep.subr.mxu0 %v937
    %1108 = vmatpush2.msra.mxu0 %v936
    %1109 = vmatprep.subr.mxu0 %v933
    %1110 = vmatpush2.msra.mxu0 %v932
    %1111 = vmatprep.subr.mxu0 %v929
    %1112 = vmatpush2.msra.mxu0 %v928
    %1113 = vmatprep.subr.mxu0 %v925
    %1114 = vmatpush2.msra.mxu0 %v924
    %1115 = vmatprep.subr.mxu0 %v921
    %1116 = vmatpush2.msra.mxu0 %v920
    %1117 = vmatprep.subr.mxu0 %v917
    %1118 = vmatpush2.msra.mxu0 %v916
    %1119 = vmatprep.subr.mxu0 %v913
    %1120 = vmatpush2.msra.mxu0 %v912
    %1121 = vmatprep.subr.mxu0 %v909
    %1122 = vmatpush2.msra.mxu0 %v908
    %1123 = vmatprep.subr.mxu0 %v905
    %1124 = vmatpush2.msra.mxu0 %v904
    %1125 = vmatprep.mubr.f32.mxu0 %v707
    %1126 = vmatmul.mubr.f32.gmra.mxu0 %v706
    %v1127 = vpop.f32.mrf.mxu0
    %v1128 = vadd.f32 %v1057, %v1127
    %v1129 = vpop.f32.mrf.mxu0
    %v1130 = vadd.f32 %v1059, %v1129
    %1131 = vdwg.mxu0
    %1132 = vmatprep.subr.mxu0 %v775
    %1133 = vmatpush1.msra.mxu0 %v774
    %1134 = vmatprep.subr.mxu0 %v771
    %1135 = vmatpush1.msra.mxu0 %v770
    %1136 = vmatprep.subr.mxu0 %v767
    %1137 = vmatpush1.msra.mxu0 %v766
    %1138 = vmatprep.subr.mxu0 %v763
    %1139 = vmatpush1.msra.mxu0 %v762
    %1140 = vmatprep.subr.mxu0 %v759
    %1141 = vmatpush1.msra.mxu0 %v758
    %1142 = vmatprep.subr.mxu0 %v755
    %1143 = vmatpush1.msra.mxu0 %v754
    %1144 = vmatprep.subr.mxu0 %v751
    %1145 = vmatpush1.msra.mxu0 %v750
    %1146 = vmatprep.subr.mxu0 %v747
    %1147 = vmatpush1.msra.mxu0 %v746
    %1148 = vmatprep.subr.mxu0 %v743
    %1149 = vmatpush1.msra.mxu0 %v742
    %1150 = vmatprep.subr.mxu0 %v739
    %1151 = vmatpush1.msra.mxu0 %v738
    %1152 = vmatprep.subr.mxu0 %v735
    %1153 = vmatpush1.msra.mxu0 %v734
    %1154 = vmatprep.subr.mxu0 %v731
    %1155 = vmatpush1.msra.mxu0 %v730
    %1156 = vmatprep.subr.mxu0 %v727
    %1157 = vmatpush1.msra.mxu0 %v726
    %1158 = vmatprep.subr.mxu0 %v723
    %1159 = vmatpush1.msra.mxu0 %v722
    %1160 = vmatprep.subr.mxu0 %v719
    %1161 = vmatpush1.msra.mxu0 %v718
    %1162 = vmatprep.subr.mxu0 %v715
    %1163 = vmatpush1.msra.mxu0 %v714
    %1164 = vmatprep.subr.mxu0 %v839
    %1165 = vmatpush2.msra.mxu0 %v838
    %1166 = vmatprep.subr.mxu0 %v835
    %1167 = vmatpush2.msra.mxu0 %v834
    %1168 = vmatprep.subr.mxu0 %v831
    %1169 = vmatpush2.msra.mxu0 %v830
    %1170 = vmatprep.subr.mxu0 %v827
    %1171 = vmatpush2.msra.mxu0 %v826
    %1172 = vmatprep.subr.mxu0 %v823
    %1173 = vmatpush2.msra.mxu0 %v822
    %1174 = vmatprep.subr.mxu0 %v819
    %1175 = vmatpush2.msra.mxu0 %v818
    %1176 = vmatprep.subr.mxu0 %v815
    %1177 = vmatpush2.msra.mxu0 %v814
    %1178 = vmatprep.subr.mxu0 %v811
    %1179 = vmatpush2.msra.mxu0 %v810
    %1180 = vmatprep.subr.mxu0 %v807
    %1181 = vmatpush2.msra.mxu0 %v806
    %1182 = vmatprep.subr.mxu0 %v803
    %1183 = vmatpush2.msra.mxu0 %v802
    %1184 = vmatprep.subr.mxu0 %v799
    %1185 = vmatpush2.msra.mxu0 %v798
    %1186 = vmatprep.subr.mxu0 %v795
    %1187 = vmatpush2.msra.mxu0 %v794
    %1188 = vmatprep.subr.mxu0 %v791
    %1189 = vmatpush2.msra.mxu0 %v790
    %1190 = vmatprep.subr.mxu0 %v787
    %1191 = vmatpush2.msra.mxu0 %v786
    %1192 = vmatprep.subr.mxu0 %v783
    %1193 = vmatpush2.msra.mxu0 %v782
    %1194 = vmatprep.subr.mxu0 %v779
    %1195 = vmatpush2.msra.mxu0 %v778
    %1196 = vmatprep.mubr.f32.mxu0 %v705
    %1197 = vmatmul.mubr.f32.gmra.mxu0 %v704
    %v1198 = vpop.f32.mrf.mxu0
    %v1199 = vadd.f32 %v981, %v1198
    %v1200 = vpop.f32.mrf.mxu0
    %v1201 = vadd.f32 %v985, %v1200
    %1202 = vdwg.mxu0
    %1203 = vmatprep.subr.mxu0 %v903
    %1204 = vmatpush1.msra.mxu0 %v902
    %1205 = vmatprep.subr.mxu0 %v899
    %1206 = vmatpush1.msra.mxu0 %v898
    %1207 = vmatprep.subr.mxu0 %v895
    %1208 = vmatpush1.msra.mxu0 %v894
    %1209 = vmatprep.subr.mxu0 %v891
    %1210 = vmatpush1.msra.mxu0 %v890
    %1211 = vmatprep.subr.mxu0 %v887
    %1212 = vmatpush1.msra.mxu0 %v886
    %1213 = vmatprep.subr.mxu0 %v883
    %1214 = vmatpush1.msra.mxu0 %v882
    %1215 = vmatprep.subr.mxu0 %v879
    %1216 = vmatpush1.msra.mxu0 %v878
    %1217 = vmatprep.subr.mxu0 %v875
    %1218 = vmatpush1.msra.mxu0 %v874
    %1219 = vmatprep.subr.mxu0 %v871
    %1220 = vmatpush1.msra.mxu0 %v870
    %1221 = vmatprep.subr.mxu0 %v867
    %1222 = vmatpush1.msra.mxu0 %v866
    %1223 = vmatprep.subr.mxu0 %v863
    %1224 = vmatpush1.msra.mxu0 %v862
    %1225 = vmatprep.subr.mxu0 %v859
    %1226 = vmatpush1.msra.mxu0 %v858
    %1227 = vmatprep.subr.mxu0 %v855
    %1228 = vmatpush1.msra.mxu0 %v854
    %1229 = vmatprep.subr.mxu0 %v851
    %1230 = vmatpush1.msra.mxu0 %v850
    %1231 = vmatprep.subr.mxu0 %v847
    %1232 = vmatpush1.msra.mxu0 %v846
    %1233 = vmatprep.subr.mxu0 %v843
    %1234 = vmatpush1.msra.mxu0 %v842
    %1235 = vmatprep.subr.mxu0 %v967
    %1236 = vmatpush2.msra.mxu0 %v966
    %1237 = vmatprep.subr.mxu0 %v963
    %1238 = vmatpush2.msra.mxu0 %v962
    %1239 = vmatprep.subr.mxu0 %v959
    %1240 = vmatpush2.msra.mxu0 %v958
    %1241 = vmatprep.subr.mxu0 %v955
    %1242 = vmatpush2.msra.mxu0 %v954
    %1243 = vmatprep.subr.mxu0 %v951
    %1244 = vmatpush2.msra.mxu0 %v950
    %1245 = vmatprep.subr.mxu0 %v947
    %1246 = vmatpush2.msra.mxu0 %v946
    %1247 = vmatprep.subr.mxu0 %v943
    %1248 = vmatpush2.msra.mxu0 %v942
    %1249 = vmatprep.subr.mxu0 %v939
    %1250 = vmatpush2.msra.mxu0 %v938
    %1251 = vmatprep.subr.mxu0 %v935
    %1252 = vmatpush2.msra.mxu0 %v934
    %1253 = vmatprep.subr.mxu0 %v931
    %1254 = vmatpush2.msra.mxu0 %v930
    %1255 = vmatprep.subr.mxu0 %v927
    %1256 = vmatpush2.msra.mxu0 %v926
    %1257 = vmatprep.subr.mxu0 %v923
    %1258 = vmatpush2.msra.mxu0 %v922
    %1259 = vmatprep.subr.mxu0 %v919
    %1260 = vmatpush2.msra.mxu0 %v918
    %1261 = vmatprep.subr.mxu0 %v915
    %1262 = vmatpush2.msra.mxu0 %v914
    %1263 = vmatprep.subr.mxu0 %v911
    %1264 = vmatpush2.msra.mxu0 %v910
    %1265 = vmatprep.subr.mxu0 %v907
    %1266 = vmatpush2.msra.mxu0 %v906
    %1267 = vmatprep.mubr.f32.mxu0 %v707
    %1268 = vmatmul.mubr.f32.gmra.mxu0 %v706
    %v1269 = vpop.f32.mrf.mxu0
    %v1270 = vadd.f32 %v1199, %v1269
    %v1271 = vpop.f32.mrf.mxu0
    %v1272 = vadd.f32 %v1201, %v1271
    %1273 = vdwg.mxu0
    %v1274 = vmax.f32 %v1128, 0.0
    %v1275 = vmax.f32 %v1130, 0.0
    %v1276 = vmax.f32 %v1270, 0.0
    %v1277 = vmax.f32 %v1272, 0.0
    %v1278 = vld [vmem:[#allocation8] sm:$0xff]
    %v1279 = vld [vmem:[#allocation8 + $0x8] sm:$0xff]
    %v1280 = vld [vmem:[#allocation8 + $0x10] sm:$0xff]
    %v1281 = vld [vmem:[#allocation8 + $0x18] sm:$0xff]
    %v1282 = vld [vmem:[#allocation8 + $0x20] sm:$0xff]
    %v1283 = vld [vmem:[#allocation8 + $0x28] sm:$0xff]
    %v1284 = vld [vmem:[#allocation8 + $0x30] sm:$0xff]
    %v1285 = vld [vmem:[#allocation8 + $0x38] sm:$0xff]
    %v1286 = vld [vmem:[#allocation8 + $0x40] sm:$0xff]
    %v1287 = vld [vmem:[#allocation8 + $0x48] sm:$0xff]
    %v1288 = vld [vmem:[#allocation8 + $0x50] sm:$0xff]
    %v1289 = vld [vmem:[#allocation8 + $0x58] sm:$0xff]
    %v1290 = vld [vmem:[#allocation8 + $0x60] sm:$0xff]
    %v1291 = vld [vmem:[#allocation8 + $0x68] sm:$0xff]
    %v1292 = vld [vmem:[#allocation8 + $0x70] sm:$0xff]
    %v1293 = vld [vmem:[#allocation8 + $0x78] sm:$0xff]
    %v1294 = vld [vmem:[#allocation8 + $0x80] sm:$0xff]
    %v1295 = vld [vmem:[#allocation8 + $0x88] sm:$0xff]
    %v1296 = vld [vmem:[#allocation8 + $0x90] sm:$0xff]
    %v1297 = vld [vmem:[#allocation8 + $0x98] sm:$0xff]
    %v1298 = vld [vmem:[#allocation8 + $0xa0] sm:$0xff]
    %v1299 = vld [vmem:[#allocation8 + $0xa8] sm:$0xff]
    %v1300 = vld [vmem:[#allocation8 + $0xb0] sm:$0xff]
    %v1301 = vld [vmem:[#allocation8 + $0xb8] sm:$0xff]
    %v1302 = vld [vmem:[#allocation8 + $0xc0] sm:$0xff]
    %v1303 = vld [vmem:[#allocation8 + $0xc8] sm:$0xff]
    %v1304 = vld [vmem:[#allocation8 + $0xd0] sm:$0xff]
    %v1305 = vld [vmem:[#allocation8 + $0xd8] sm:$0xff]
    %v1306 = vld [vmem:[#allocation8 + $0xe0] sm:$0xff]
    %v1307 = vld [vmem:[#allocation8 + $0xe8] sm:$0xff]
    %v1308 = vld [vmem:[#allocation8 + $0xf0] sm:$0xff]
    %v1309 = vld [vmem:[#allocation8 + $0xf8] sm:$0xff]
    %v1310 = vld [vmem:[#allocation8 + $0x100] sm:$0xff]
    %v1311 = vld [vmem:[#allocation8 + $0x108] sm:$0xff]
    %v1312 = vld [vmem:[#allocation8 + $0x110] sm:$0xff]
    %v1313 = vld [vmem:[#allocation8 + $0x118] sm:$0xff]
    %v1314 = vld [vmem:[#allocation8 + $0x120] sm:$0xff]
    %v1315 = vld [vmem:[#allocation8 + $0x128] sm:$0xff]
    %v1316 = vld [vmem:[#allocation8 + $0x130] sm:$0xff]
    %v1317 = vld [vmem:[#allocation8 + $0x138] sm:$0xff]
    %v1318 = vld [vmem:[#allocation8 + $0x140] sm:$0xff]
    %v1319 = vld [vmem:[#allocation8 + $0x148] sm:$0xff]
    %v1320 = vld [vmem:[#allocation8 + $0x150] sm:$0xff]
    %v1321 = vld [vmem:[#allocation8 + $0x158] sm:$0xff]
    %v1322 = vld [vmem:[#allocation8 + $0x160] sm:$0xff]
    %v1323 = vld [vmem:[#allocation8 + $0x168] sm:$0xff]
    %v1324 = vld [vmem:[#allocation8 + $0x170] sm:$0xff]
    %v1325 = vld [vmem:[#allocation8 + $0x178] sm:$0xff]
    %v1326 = vld [vmem:[#allocation8 + $0x180] sm:$0xff]
    %v1327 = vld [vmem:[#allocation8 + $0x188] sm:$0xff]
    %v1328 = vld [vmem:[#allocation8 + $0x190] sm:$0xff]
    %v1329 = vld [vmem:[#allocation8 + $0x198] sm:$0xff]
    %v1330 = vld [vmem:[#allocation8 + $0x1a0] sm:$0xff]
    %v1331 = vld [vmem:[#allocation8 + $0x1a8] sm:$0xff]
    %v1332 = vld [vmem:[#allocation8 + $0x1b0] sm:$0xff]
    %v1333 = vld [vmem:[#allocation8 + $0x1b8] sm:$0xff]
    %v1334 = vld [vmem:[#allocation8 + $0x1c0] sm:$0xff]
    %v1335 = vld [vmem:[#allocation8 + $0x1c8] sm:$0xff]
    %v1336 = vld [vmem:[#allocation8 + $0x1d0] sm:$0xff]
    %v1337 = vld [vmem:[#allocation8 + $0x1d8] sm:$0xff]
    %v1338 = vld [vmem:[#allocation8 + $0x1e0] sm:$0xff]
    %v1339 = vld [vmem:[#allocation8 + $0x1e8] sm:$0xff]
    %v1340 = vld [vmem:[#allocation8 + $0x1f0] sm:$0xff]
    %v1341 = vld [vmem:[#allocation8 + $0x1f8] sm:$0xff]
    %v1342 = vld [vmem:[#allocation8 + $0x200] sm:$0xff]
    %v1343 = vld [vmem:[#allocation8 + $0x208] sm:$0xff]
    %v1344 = vld [vmem:[#allocation8 + $0x210] sm:$0xff]
    %v1345 = vld [vmem:[#allocation8 + $0x218] sm:$0xff]
    %v1346 = vld [vmem:[#allocation8 + $0x220] sm:$0xff]
    %v1347 = vld [vmem:[#allocation8 + $0x228] sm:$0xff]
    %v1348 = vld [vmem:[#allocation8 + $0x230] sm:$0xff]
    %v1349 = vld [vmem:[#allocation8 + $0x238] sm:$0xff]
    %v1350 = vld [vmem:[#allocation8 + $0x240] sm:$0xff]
    %v1351 = vld [vmem:[#allocation8 + $0x248] sm:$0xff]
    %v1352 = vld [vmem:[#allocation8 + $0x250] sm:$0xff]
    %v1353 = vld [vmem:[#allocation8 + $0x258] sm:$0xff]
    %v1354 = vld [vmem:[#allocation8 + $0x260] sm:$0xff]
    %v1355 = vld [vmem:[#allocation8 + $0x268] sm:$0xff]
    %v1356 = vld [vmem:[#allocation8 + $0x270] sm:$0xff]
    %v1357 = vld [vmem:[#allocation8 + $0x278] sm:$0xff]
    %v1358 = vld [vmem:[#allocation8 + $0x280] sm:$0xff]
    %v1359 = vld [vmem:[#allocation8 + $0x288] sm:$0xff]
    %v1360 = vld [vmem:[#allocation8 + $0x290] sm:$0xff]
    %v1361 = vld [vmem:[#allocation8 + $0x298] sm:$0xff]
    %v1362 = vld [vmem:[#allocation8 + $0x2a0] sm:$0xff]
    %v1363 = vld [vmem:[#allocation8 + $0x2a8] sm:$0xff]
    %v1364 = vld [vmem:[#allocation8 + $0x2b0] sm:$0xff]
    %v1365 = vld [vmem:[#allocation8 + $0x2b8] sm:$0xff]
    %v1366 = vld [vmem:[#allocation8 + $0x2c0] sm:$0xff]
    %v1367 = vld [vmem:[#allocation8 + $0x2c8] sm:$0xff]
    %v1368 = vld [vmem:[#allocation8 + $0x2d0] sm:$0xff]
    %v1369 = vld [vmem:[#allocation8 + $0x2d8] sm:$0xff]
    %v1370 = vld [vmem:[#allocation8 + $0x2e0] sm:$0xff]
    %v1371 = vld [vmem:[#allocation8 + $0x2e8] sm:$0xff]
    %v1372 = vld [vmem:[#allocation8 + $0x2f0] sm:$0xff]
    %v1373 = vld [vmem:[#allocation8 + $0x2f8] sm:$0xff]
    %v1374 = vld [vmem:[#allocation8 + $0x300] sm:$0xff]
    %v1375 = vld [vmem:[#allocation8 + $0x308] sm:$0xff]
    %v1376 = vld [vmem:[#allocation8 + $0x310] sm:$0xff]
    %v1377 = vld [vmem:[#allocation8 + $0x318] sm:$0xff]
    %v1378 = vld [vmem:[#allocation8 + $0x320] sm:$0xff]
    %v1379 = vld [vmem:[#allocation8 + $0x328] sm:$0xff]
    %v1380 = vld [vmem:[#allocation8 + $0x330] sm:$0xff]
    %v1381 = vld [vmem:[#allocation8 + $0x338] sm:$0xff]
    %v1382 = vld [vmem:[#allocation8 + $0x340] sm:$0xff]
    %v1383 = vld [vmem:[#allocation8 + $0x348] sm:$0xff]
    %v1384 = vld [vmem:[#allocation8 + $0x350] sm:$0xff]
    %v1385 = vld [vmem:[#allocation8 + $0x358] sm:$0xff]
    %v1386 = vld [vmem:[#allocation8 + $0x360] sm:$0xff]
    %v1387 = vld [vmem:[#allocation8 + $0x368] sm:$0xff]
    %v1388 = vld [vmem:[#allocation8 + $0x370] sm:$0xff]
    %v1389 = vld [vmem:[#allocation8 + $0x378] sm:$0xff]
    %v1390 = vld [vmem:[#allocation8 + $0x380] sm:$0xff]
    %v1391 = vld [vmem:[#allocation8 + $0x388] sm:$0xff]
    %v1392 = vld [vmem:[#allocation8 + $0x390] sm:$0xff]
    %v1393 = vld [vmem:[#allocation8 + $0x398] sm:$0xff]
    %v1394 = vld [vmem:[#allocation8 + $0x3a0] sm:$0xff]
    %v1395 = vld [vmem:[#allocation8 + $0x3a8] sm:$0xff]
    %v1396 = vld [vmem:[#allocation8 + $0x3b0] sm:$0xff]
    %v1397 = vld [vmem:[#allocation8 + $0x3b8] sm:$0xff]
    %v1398 = vld [vmem:[#allocation8 + $0x3c0] sm:$0xff]
    %v1399 = vld [vmem:[#allocation8 + $0x3c8] sm:$0xff]
    %v1400 = vld [vmem:[#allocation8 + $0x3d0] sm:$0xff]
    %v1401 = vld [vmem:[#allocation8 + $0x3d8] sm:$0xff]
    %v1402 = vld [vmem:[#allocation8 + $0x3e0] sm:$0xff]
    %v1403 = vld [vmem:[#allocation8 + $0x3e8] sm:$0xff]
    %v1404 = vld [vmem:[#allocation8 + $0x3f0] sm:$0xff]
    %v1405 = vld [vmem:[#allocation8 + $0x3f8] sm:$0xff]
    %v1406 = vld [vmem:[#allocation8 + $0x400] sm:$0xff]
    %v1407 = vld [vmem:[#allocation8 + $0x408] sm:$0xff]
    %v1408 = vld [vmem:[#allocation8 + $0x410] sm:$0xff]
    %v1409 = vld [vmem:[#allocation8 + $0x418] sm:$0xff]
    %v1410 = vld [vmem:[#allocation8 + $0x420] sm:$0xff]
    %v1411 = vld [vmem:[#allocation8 + $0x428] sm:$0xff]
    %v1412 = vld [vmem:[#allocation8 + $0x430] sm:$0xff]
    %v1413 = vld [vmem:[#allocation8 + $0x438] sm:$0xff]
    %v1414 = vld [vmem:[#allocation8 + $0x440] sm:$0xff]
    %v1415 = vld [vmem:[#allocation8 + $0x448] sm:$0xff]
    %v1416 = vld [vmem:[#allocation8 + $0x450] sm:$0xff]
    %v1417 = vld [vmem:[#allocation8 + $0x458] sm:$0xff]
    %v1418 = vld [vmem:[#allocation8 + $0x460] sm:$0xff]
    %v1419 = vld [vmem:[#allocation8 + $0x468] sm:$0xff]
    %v1420 = vld [vmem:[#allocation8 + $0x470] sm:$0xff]
    %v1421 = vld [vmem:[#allocation8 + $0x478] sm:$0xff]
    %v1422 = vld [vmem:[#allocation8 + $0x480] sm:$0xff]
    %v1423 = vld [vmem:[#allocation8 + $0x488] sm:$0xff]
    %v1424 = vld [vmem:[#allocation8 + $0x490] sm:$0xff]
    %v1425 = vld [vmem:[#allocation8 + $0x498] sm:$0xff]
    %v1426 = vld [vmem:[#allocation8 + $0x4a0] sm:$0xff]
    %v1427 = vld [vmem:[#allocation8 + $0x4a8] sm:$0xff]
    %v1428 = vld [vmem:[#allocation8 + $0x4b0] sm:$0xff]
    %v1429 = vld [vmem:[#allocation8 + $0x4b8] sm:$0xff]
    %v1430 = vld [vmem:[#allocation8 + $0x4c0] sm:$0xff]
    %v1431 = vld [vmem:[#allocation8 + $0x4c8] sm:$0xff]
    %v1432 = vld [vmem:[#allocation8 + $0x4d0] sm:$0xff]
    %v1433 = vld [vmem:[#allocation8 + $0x4d8] sm:$0xff]
    %v1434 = vld [vmem:[#allocation8 + $0x4e0] sm:$0xff]
    %v1435 = vld [vmem:[#allocation8 + $0x4e8] sm:$0xff]
    %v1436 = vld [vmem:[#allocation8 + $0x4f0] sm:$0xff]
    %v1437 = vld [vmem:[#allocation8 + $0x4f8] sm:$0xff]
    %v1438 = vld [vmem:[#allocation8 + $0x500] sm:$0xff]
    %v1439 = vld [vmem:[#allocation8 + $0x508] sm:$0xff]
    %v1440 = vld [vmem:[#allocation8 + $0x510] sm:$0xff]
    %v1441 = vld [vmem:[#allocation8 + $0x518] sm:$0xff]
    %v1442 = vld [vmem:[#allocation8 + $0x520] sm:$0xff]
    %v1443 = vld [vmem:[#allocation8 + $0x528] sm:$0xff]
    %v1444 = vld [vmem:[#allocation8 + $0x530] sm:$0xff]
    %v1445 = vld [vmem:[#allocation8 + $0x538] sm:$0xff]
    %v1446 = vld [vmem:[#allocation8 + $0x540] sm:$0xff]
    %v1447 = vld [vmem:[#allocation8 + $0x548] sm:$0xff]
    %v1448 = vld [vmem:[#allocation8 + $0x550] sm:$0xff]
    %v1449 = vld [vmem:[#allocation8 + $0x558] sm:$0xff]
    %v1450 = vld [vmem:[#allocation8 + $0x560] sm:$0xff]
    %v1451 = vld [vmem:[#allocation8 + $0x568] sm:$0xff]
    %v1452 = vld [vmem:[#allocation8 + $0x570] sm:$0xff]
    %v1453 = vld [vmem:[#allocation8 + $0x578] sm:$0xff]
    %v1454 = vld [vmem:[#allocation8 + $0x580] sm:$0xff]
    %v1455 = vld [vmem:[#allocation8 + $0x588] sm:$0xff]
    %v1456 = vld [vmem:[#allocation8 + $0x590] sm:$0xff]
    %v1457 = vld [vmem:[#allocation8 + $0x598] sm:$0xff]
    %v1458 = vld [vmem:[#allocation8 + $0x5a0] sm:$0xff]
    %v1459 = vld [vmem:[#allocation8 + $0x5a8] sm:$0xff]
    %v1460 = vld [vmem:[#allocation8 + $0x5b0] sm:$0xff]
    %v1461 = vld [vmem:[#allocation8 + $0x5b8] sm:$0xff]
    %v1462 = vld [vmem:[#allocation8 + $0x5c0] sm:$0xff]
    %v1463 = vld [vmem:[#allocation8 + $0x5c8] sm:$0xff]
    %v1464 = vld [vmem:[#allocation8 + $0x5d0] sm:$0xff]
    %v1465 = vld [vmem:[#allocation8 + $0x5d8] sm:$0xff]
    %v1466 = vld [vmem:[#allocation8 + $0x5e0] sm:$0xff]
    %v1467 = vld [vmem:[#allocation8 + $0x5e8] sm:$0xff]
    %v1468 = vld [vmem:[#allocation8 + $0x5f0] sm:$0xff]
    %v1469 = vld [vmem:[#allocation8 + $0x5f8] sm:$0xff]
    %v1470 = vld [vmem:[#allocation8 + $0x600] sm:$0xff]
    %v1471 = vld [vmem:[#allocation8 + $0x608] sm:$0xff]
    %v1472 = vld [vmem:[#allocation8 + $0x610] sm:$0xff]
    %v1473 = vld [vmem:[#allocation8 + $0x618] sm:$0xff]
    %v1474 = vld [vmem:[#allocation8 + $0x620] sm:$0xff]
    %v1475 = vld [vmem:[#allocation8 + $0x628] sm:$0xff]
    %v1476 = vld [vmem:[#allocation8 + $0x630] sm:$0xff]
    %v1477 = vld [vmem:[#allocation8 + $0x638] sm:$0xff]
    %v1478 = vld [vmem:[#allocation8 + $0x640] sm:$0xff]
    %v1479 = vld [vmem:[#allocation8 + $0x648] sm:$0xff]
    %v1480 = vld [vmem:[#allocation8 + $0x650] sm:$0xff]
    %v1481 = vld [vmem:[#allocation8 + $0x658] sm:$0xff]
    %v1482 = vld [vmem:[#allocation8 + $0x660] sm:$0xff]
    %v1483 = vld [vmem:[#allocation8 + $0x668] sm:$0xff]
    %v1484 = vld [vmem:[#allocation8 + $0x670] sm:$0xff]
    %v1485 = vld [vmem:[#allocation8 + $0x678] sm:$0xff]
    %v1486 = vld [vmem:[#allocation8 + $0x680] sm:$0xff]
    %v1487 = vld [vmem:[#allocation8 + $0x688] sm:$0xff]
    %v1488 = vld [vmem:[#allocation8 + $0x690] sm:$0xff]
    %v1489 = vld [vmem:[#allocation8 + $0x698] sm:$0xff]
    %v1490 = vld [vmem:[#allocation8 + $0x6a0] sm:$0xff]
    %v1491 = vld [vmem:[#allocation8 + $0x6a8] sm:$0xff]
    %v1492 = vld [vmem:[#allocation8 + $0x6b0] sm:$0xff]
    %v1493 = vld [vmem:[#allocation8 + $0x6b8] sm:$0xff]
    %v1494 = vld [vmem:[#allocation8 + $0x6c0] sm:$0xff]
    %v1495 = vld [vmem:[#allocation8 + $0x6c8] sm:$0xff]
    %v1496 = vld [vmem:[#allocation8 + $0x6d0] sm:$0xff]
    %v1497 = vld [vmem:[#allocation8 + $0x6d8] sm:$0xff]
    %v1498 = vld [vmem:[#allocation8 + $0x6e0] sm:$0xff]
    %v1499 = vld [vmem:[#allocation8 + $0x6e8] sm:$0xff]
    %v1500 = vld [vmem:[#allocation8 + $0x6f0] sm:$0xff]
    %v1501 = vld [vmem:[#allocation8 + $0x6f8] sm:$0xff]
    %v1502 = vld [vmem:[#allocation8 + $0x700] sm:$0xff]
    %v1503 = vld [vmem:[#allocation8 + $0x708] sm:$0xff]
    %v1504 = vld [vmem:[#allocation8 + $0x710] sm:$0xff]
    %v1505 = vld [vmem:[#allocation8 + $0x718] sm:$0xff]
    %v1506 = vld [vmem:[#allocation8 + $0x720] sm:$0xff]
    %v1507 = vld [vmem:[#allocation8 + $0x728] sm:$0xff]
    %v1508 = vld [vmem:[#allocation8 + $0x730] sm:$0xff]
    %v1509 = vld [vmem:[#allocation8 + $0x738] sm:$0xff]
    %v1510 = vld [vmem:[#allocation8 + $0x740] sm:$0xff]
    %v1511 = vld [vmem:[#allocation8 + $0x748] sm:$0xff]
    %v1512 = vld [vmem:[#allocation8 + $0x750] sm:$0xff]
    %v1513 = vld [vmem:[#allocation8 + $0x758] sm:$0xff]
    %v1514 = vld [vmem:[#allocation8 + $0x760] sm:$0xff]
    %v1515 = vld [vmem:[#allocation8 + $0x768] sm:$0xff]
    %v1516 = vld [vmem:[#allocation8 + $0x770] sm:$0xff]
    %v1517 = vld [vmem:[#allocation8 + $0x778] sm:$0xff]
    %v1518 = vld [vmem:[#allocation8 + $0x780] sm:$0xff]
    %v1519 = vld [vmem:[#allocation8 + $0x788] sm:$0xff]
    %v1520 = vld [vmem:[#allocation8 + $0x790] sm:$0xff]
    %v1521 = vld [vmem:[#allocation8 + $0x798] sm:$0xff]
    %v1522 = vld [vmem:[#allocation8 + $0x7a0] sm:$0xff]
    %v1523 = vld [vmem:[#allocation8 + $0x7a8] sm:$0xff]
    %v1524 = vld [vmem:[#allocation8 + $0x7b0] sm:$0xff]
    %v1525 = vld [vmem:[#allocation8 + $0x7b8] sm:$0xff]
    %v1526 = vld [vmem:[#allocation8 + $0x7c0] sm:$0xff]
    %v1527 = vld [vmem:[#allocation8 + $0x7c8] sm:$0xff]
    %v1528 = vld [vmem:[#allocation8 + $0x7d0] sm:$0xff]
    %v1529 = vld [vmem:[#allocation8 + $0x7d8] sm:$0xff]
    %v1530 = vld [vmem:[#allocation8 + $0x7e0] sm:$0xff]
    %v1531 = vld [vmem:[#allocation8 + $0x7e8] sm:$0xff]
    %v1532 = vld [vmem:[#allocation8 + $0x7f0] sm:$0xff]
    %v1533 = vld [vmem:[#allocation8 + $0x7f8] sm:$0xff]
    %v1534 = vld [vmem:[%s7] sm:$0xf]
    %v1536 = vlaneseq
    %v1537 = vshrl.u32 %v1536, 7
    %v1538 = vsub.s32 0, %v1537
    %v1539 = vrot.slane %v1534, %v1538
    %v1540 = vlaneseq
    %v1541 = vshrl.u32 %v1540, 7
    %v1542 = vsub.s32 1, %v1541
    %v1543 = vrot.slane %v1534, %v1542
    %v1544 = vlaneseq
    %v1545 = vshrl.u32 %v1544, 7
    %v1546 = vsub.s32 2, %v1545
    %v1547 = vrot.slane %v1534, %v1546
    %v1548 = vlaneseq
    %v1549 = vshrl.u32 %v1548, 7
    %v1550 = vsub.s32 3, %v1549
    %v1551 = vrot.slane %v1534, %v1550
    %1556 = vmatprep.subr.mxu0 %v1339
    %1557 = vmatpush1.msra.mxu0 %v1338
    %1558 = vmatprep.subr.mxu0 %v1335
    %1559 = vmatpush1.msra.mxu0 %v1334
    %1560 = vmatprep.subr.mxu0 %v1331
    %1561 = vmatpush1.msra.mxu0 %v1330
    %1562 = vmatprep.subr.mxu0 %v1327
    %1563 = vmatpush1.msra.mxu0 %v1326
    %1564 = vmatprep.subr.mxu0 %v1323
    %1565 = vmatpush1.msra.mxu0 %v1322
    %1566 = vmatprep.subr.mxu0 %v1319
    %1567 = vmatpush1.msra.mxu0 %v1318
    %1568 = vmatprep.subr.mxu0 %v1315
    %1569 = vmatpush1.msra.mxu0 %v1314
    %1570 = vmatprep.subr.mxu0 %v1311
    %1571 = vmatpush1.msra.mxu0 %v1310
    %1572 = vmatprep.subr.mxu0 %v1307
    %1573 = vmatpush1.msra.mxu0 %v1306
    %1574 = vmatprep.subr.mxu0 %v1303
    %1575 = vmatpush1.msra.mxu0 %v1302
    %1576 = vmatprep.subr.mxu0 %v1299
    %1577 = vmatpush1.msra.mxu0 %v1298
    %1578 = vmatprep.subr.mxu0 %v1295
    %1579 = vmatpush1.msra.mxu0 %v1294
    %1580 = vmatprep.subr.mxu0 %v1291
    %1581 = vmatpush1.msra.mxu0 %v1290
    %1582 = vmatprep.subr.mxu0 %v1287
    %1583 = vmatpush1.msra.mxu0 %v1286
    %1584 = vmatprep.subr.mxu0 %v1283
    %1585 = vmatpush1.msra.mxu0 %v1282
    %1586 = vmatprep.subr.mxu0 %v1279
    %1587 = vmatpush1.msra.mxu0 %v1278
    %1588 = vmatprep.subr.mxu0 %v1403
    %1589 = vmatpush2.msra.mxu0 %v1402
    %1590 = vmatprep.subr.mxu0 %v1399
    %1591 = vmatpush2.msra.mxu0 %v1398
    %1592 = vmatprep.subr.mxu0 %v1395
    %1593 = vmatpush2.msra.mxu0 %v1394
    %1594 = vmatprep.subr.mxu0 %v1391
    %1595 = vmatpush2.msra.mxu0 %v1390
    %1596 = vmatprep.subr.mxu0 %v1387
    %1597 = vmatpush2.msra.mxu0 %v1386
    %1598 = vmatprep.subr.mxu0 %v1383
    %1599 = vmatpush2.msra.mxu0 %v1382
    %1600 = vmatprep.subr.mxu0 %v1379
    %1601 = vmatpush2.msra.mxu0 %v1378
    %1602 = vmatprep.subr.mxu0 %v1375
    %1603 = vmatpush2.msra.mxu0 %v1374
    %1604 = vmatprep.subr.mxu0 %v1371
    %1605 = vmatpush2.msra.mxu0 %v1370
    %1606 = vmatprep.subr.mxu0 %v1367
    %1607 = vmatpush2.msra.mxu0 %v1366
    %1608 = vmatprep.subr.mxu0 %v1363
    %1609 = vmatpush2.msra.mxu0 %v1362
    %1610 = vmatprep.subr.mxu0 %v1359
    %1611 = vmatpush2.msra.mxu0 %v1358
    %1612 = vmatprep.subr.mxu0 %v1355
    %1613 = vmatpush2.msra.mxu0 %v1354
    %1614 = vmatprep.subr.mxu0 %v1351
    %1615 = vmatpush2.msra.mxu0 %v1350
    %1616 = vmatprep.subr.mxu0 %v1347
    %1617 = vmatpush2.msra.mxu0 %v1346
    %1618 = vmatprep.subr.mxu0 %v1343
    %1619 = vmatpush2.msra.mxu0 %v1342
    %1620 = vmatprep.mubr.f32.mxu0 %v709
    %1621 = vmatmul.mubr.f32.gmra.mxu0 %v708
    %v1622 = vpop.f32.mrf.mxu0
    %v1623 = vadd.f32 %v1539, %v1622
    %v1624 = vpop.f32.mrf.mxu0
    %v1625 = vadd.f32 %v1543, %v1624
    %1626 = vdwg.mxu0
    %1627 = vmatprep.subr.mxu0 %v1467
    %1628 = vmatpush1.msra.mxu0 %v1466
    %1629 = vmatprep.subr.mxu0 %v1463
    %1630 = vmatpush1.msra.mxu0 %v1462
    %1631 = vmatprep.subr.mxu0 %v1459
    %1632 = vmatpush1.msra.mxu0 %v1458
    %1633 = vmatprep.subr.mxu0 %v1455
    %1634 = vmatpush1.msra.mxu0 %v1454
    %1635 = vmatprep.subr.mxu0 %v1451
    %1636 = vmatpush1.msra.mxu0 %v1450
    %1637 = vmatprep.subr.mxu0 %v1447
    %1638 = vmatpush1.msra.mxu0 %v1446
    %1639 = vmatprep.subr.mxu0 %v1443
    %1640 = vmatpush1.msra.mxu0 %v1442
    %1641 = vmatprep.subr.mxu0 %v1439
    %1642 = vmatpush1.msra.mxu0 %v1438
    %1643 = vmatprep.subr.mxu0 %v1435
    %1644 = vmatpush1.msra.mxu0 %v1434
    %1645 = vmatprep.subr.mxu0 %v1431
    %1646 = vmatpush1.msra.mxu0 %v1430
    %1647 = vmatprep.subr.mxu0 %v1427
    %1648 = vmatpush1.msra.mxu0 %v1426
    %1649 = vmatprep.subr.mxu0 %v1423
    %1650 = vmatpush1.msra.mxu0 %v1422
    %1651 = vmatprep.subr.mxu0 %v1419
    %1652 = vmatpush1.msra.mxu0 %v1418
    %1653 = vmatprep.subr.mxu0 %v1415
    %1654 = vmatpush1.msra.mxu0 %v1414
    %1655 = vmatprep.subr.mxu0 %v1411
    %1656 = vmatpush1.msra.mxu0 %v1410
    %1657 = vmatprep.subr.mxu0 %v1407
    %1658 = vmatpush1.msra.mxu0 %v1406
    %1659 = vmatprep.subr.mxu0 %v1531
    %1660 = vmatpush2.msra.mxu0 %v1530
    %1661 = vmatprep.subr.mxu0 %v1527
    %1662 = vmatpush2.msra.mxu0 %v1526
    %1663 = vmatprep.subr.mxu0 %v1523
    %1664 = vmatpush2.msra.mxu0 %v1522
    %1665 = vmatprep.subr.mxu0 %v1519
    %1666 = vmatpush2.msra.mxu0 %v1518
    %1667 = vmatprep.subr.mxu0 %v1515
    %1668 = vmatpush2.msra.mxu0 %v1514
    %1669 = vmatprep.subr.mxu0 %v1511
    %1670 = vmatpush2.msra.mxu0 %v1510
    %1671 = vmatprep.subr.mxu0 %v1507
    %1672 = vmatpush2.msra.mxu0 %v1506
    %1673 = vmatprep.subr.mxu0 %v1503
    %1674 = vmatpush2.msra.mxu0 %v1502
    %1675 = vmatprep.subr.mxu0 %v1499
    %1676 = vmatpush2.msra.mxu0 %v1498
    %1677 = vmatprep.subr.mxu0 %v1495
    %1678 = vmatpush2.msra.mxu0 %v1494
    %1679 = vmatprep.subr.mxu0 %v1491
    %1680 = vmatpush2.msra.mxu0 %v1490
    %1681 = vmatprep.subr.mxu0 %v1487
    %1682 = vmatpush2.msra.mxu0 %v1486
    %1683 = vmatprep.subr.mxu0 %v1483
    %1684 = vmatpush2.msra.mxu0 %v1482
    %1685 = vmatprep.subr.mxu0 %v1479
    %1686 = vmatpush2.msra.mxu0 %v1478
    %1687 = vmatprep.subr.mxu0 %v1475
    %1688 = vmatpush2.msra.mxu0 %v1474
    %1689 = vmatprep.subr.mxu0 %v1471
    %1690 = vmatpush2.msra.mxu0 %v1470
    %1691 = vmatprep.mubr.f32.mxu0 %v711
    %1692 = vmatmul.mubr.f32.gmra.mxu0 %v710
    %v1693 = vpop.f32.mrf.mxu0
    %v1694 = vadd.f32 %v1623, %v1693
    %v1695 = vpop.f32.mrf.mxu0
    %v1696 = vadd.f32 %v1625, %v1695
    %1697 = vdwg.mxu0
    %1698 = vmatprep.subr.mxu0 %v1341
    %1699 = vmatpush1.msra.mxu0 %v1340
    %1700 = vmatprep.subr.mxu0 %v1337
    %1701 = vmatpush1.msra.mxu0 %v1336
    %1702 = vmatprep.subr.mxu0 %v1333
    %1703 = vmatpush1.msra.mxu0 %v1332
    %1704 = vmatprep.subr.mxu0 %v1329
    %1705 = vmatpush1.msra.mxu0 %v1328
    %1706 = vmatprep.subr.mxu0 %v1325
    %1707 = vmatpush1.msra.mxu0 %v1324
    %1708 = vmatprep.subr.mxu0 %v1321
    %1709 = vmatpush1.msra.mxu0 %v1320
    %1710 = vmatprep.subr.mxu0 %v1317
    %1711 = vmatpush1.msra.mxu0 %v1316
    %1712 = vmatprep.subr.mxu0 %v1313
    %1713 = vmatpush1.msra.mxu0 %v1312
    %1714 = vmatprep.subr.mxu0 %v1309
    %1715 = vmatpush1.msra.mxu0 %v1308
    %1716 = vmatprep.subr.mxu0 %v1305
    %1717 = vmatpush1.msra.mxu0 %v1304
    %1718 = vmatprep.subr.mxu0 %v1301
    %1719 = vmatpush1.msra.mxu0 %v1300
    %1720 = vmatprep.subr.mxu0 %v1297
    %1721 = vmatpush1.msra.mxu0 %v1296
    %1722 = vmatprep.subr.mxu0 %v1293
    %1723 = vmatpush1.msra.mxu0 %v1292
    %1724 = vmatprep.subr.mxu0 %v1289
    %1725 = vmatpush1.msra.mxu0 %v1288
    %1726 = vmatprep.subr.mxu0 %v1285
    %1727 = vmatpush1.msra.mxu0 %v1284
    %1728 = vmatprep.subr.mxu0 %v1281
    %1729 = vmatpush1.msra.mxu0 %v1280
    %1730 = vmatprep.subr.mxu0 %v1405
    %1731 = vmatpush2.msra.mxu0 %v1404
    %1732 = vmatprep.subr.mxu0 %v1401
    %1733 = vmatpush2.msra.mxu0 %v1400
    %1734 = vmatprep.subr.mxu0 %v1397
    %1735 = vmatpush2.msra.mxu0 %v1396
    %1736 = vmatprep.subr.mxu0 %v1393
    %1737 = vmatpush2.msra.mxu0 %v1392
    %1738 = vmatprep.subr.mxu0 %v1389
    %1739 = vmatpush2.msra.mxu0 %v1388
    %1740 = vmatprep.subr.mxu0 %v1385
    %1741 = vmatpush2.msra.mxu0 %v1384
    %1742 = vmatprep.subr.mxu0 %v1381
    %1743 = vmatpush2.msra.mxu0 %v1380
    %1744 = vmatprep.subr.mxu0 %v1377
    %1745 = vmatpush2.msra.mxu0 %v1376
    %1746 = vmatprep.subr.mxu0 %v1373
    %1747 = vmatpush2.msra.mxu0 %v1372
    %1748 = vmatprep.subr.mxu0 %v1369
    %1749 = vmatpush2.msra.mxu0 %v1368
    %1750 = vmatprep.subr.mxu0 %v1365
    %1751 = vmatpush2.msra.mxu0 %v1364
    %1752 = vmatprep.subr.mxu0 %v1361
    %1753 = vmatpush2.msra.mxu0 %v1360
    %1754 = vmatprep.subr.mxu0 %v1357
    %1755 = vmatpush2.msra.mxu0 %v1356
    %1756 = vmatprep.subr.mxu0 %v1353
    %1757 = vmatpush2.msra.mxu0 %v1352
    %1758 = vmatprep.subr.mxu0 %v1349
    %1759 = vmatpush2.msra.mxu0 %v1348
    %1760 = vmatprep.subr.mxu0 %v1345
    %1761 = vmatpush2.msra.mxu0 %v1344
    %1762 = vmatprep.mubr.f32.mxu0 %v709
    %1763 = vmatmul.mubr.f32.gmra.mxu0 %v708
    %v1764 = vpop.f32.mrf.mxu0
    %v1765 = vadd.f32 %v1547, %v1764
    %v1766 = vpop.f32.mrf.mxu0
    %v1767 = vadd.f32 %v1551, %v1766
    %1768 = vdwg.mxu0
    %1769 = vmatprep.subr.mxu0 %v1469
    %1770 = vmatpush1.msra.mxu0 %v1468
    %1771 = vmatprep.subr.mxu0 %v1465
    %1772 = vmatpush1.msra.mxu0 %v1464
    %1773 = vmatprep.subr.mxu0 %v1461
    %1774 = vmatpush1.msra.mxu0 %v1460
    %1775 = vmatprep.subr.mxu0 %v1457
    %1776 = vmatpush1.msra.mxu0 %v1456
    %1777 = vmatprep.subr.mxu0 %v1453
    %1778 = vmatpush1.msra.mxu0 %v1452
    %1779 = vmatprep.subr.mxu0 %v1449
    %1780 = vmatpush1.msra.mxu0 %v1448
    %1781 = vmatprep.subr.mxu0 %v1445
    %1782 = vmatpush1.msra.mxu0 %v1444
    %1783 = vmatprep.subr.mxu0 %v1441
    %1784 = vmatpush1.msra.mxu0 %v1440
    %1785 = vmatprep.subr.mxu0 %v1437
    %1786 = vmatpush1.msra.mxu0 %v1436
    %1787 = vmatprep.subr.mxu0 %v1433
    %1788 = vmatpush1.msra.mxu0 %v1432
    %1789 = vmatprep.subr.mxu0 %v1429
    %1790 = vmatpush1.msra.mxu0 %v1428
    %1791 = vmatprep.subr.mxu0 %v1425
    %1792 = vmatpush1.msra.mxu0 %v1424
    %1793 = vmatprep.subr.mxu0 %v1421
    %1794 = vmatpush1.msra.mxu0 %v1420
    %1795 = vmatprep.subr.mxu0 %v1417
    %1796 = vmatpush1.msra.mxu0 %v1416
    %1797 = vmatprep.subr.mxu0 %v1413
    %1798 = vmatpush1.msra.mxu0 %v1412
    %1799 = vmatprep.subr.mxu0 %v1409
    %1800 = vmatpush1.msra.mxu0 %v1408
    %1801 = vmatprep.subr.mxu0 %v1533
    %1802 = vmatpush2.msra.mxu0 %v1532
    %1803 = vmatprep.subr.mxu0 %v1529
    %1804 = vmatpush2.msra.mxu0 %v1528
    %1805 = vmatprep.subr.mxu0 %v1525
    %1806 = vmatpush2.msra.mxu0 %v1524
    %1807 = vmatprep.subr.mxu0 %v1521
    %1808 = vmatpush2.msra.mxu0 %v1520
    %1809 = vmatprep.subr.mxu0 %v1517
    %1810 = vmatpush2.msra.mxu0 %v1516
    %1811 = vmatprep.subr.mxu0 %v1513
    %1812 = vmatpush2.msra.mxu0 %v1512
    %1813 = vmatprep.subr.mxu0 %v1509
    %1814 = vmatpush2.msra.mxu0 %v1508
    %1815 = vmatprep.subr.mxu0 %v1505
    %1816 = vmatpush2.msra.mxu0 %v1504
    %1817 = vmatprep.subr.mxu0 %v1501
    %1818 = vmatpush2.msra.mxu0 %v1500
    %1819 = vmatprep.subr.mxu0 %v1497
    %1820 = vmatpush2.msra.mxu0 %v1496
    %1821 = vmatprep.subr.mxu0 %v1493
    %1822 = vmatpush2.msra.mxu0 %v1492
    %1823 = vmatprep.subr.mxu0 %v1489
    %1824 = vmatpush2.msra.mxu0 %v1488
    %1825 = vmatprep.subr.mxu0 %v1485
    %1826 = vmatpush2.msra.mxu0 %v1484
    %1827 = vmatprep.subr.mxu0 %v1481
    %1828 = vmatpush2.msra.mxu0 %v1480
    %1829 = vmatprep.subr.mxu0 %v1477
    %1830 = vmatpush2.msra.mxu0 %v1476
    %1831 = vmatprep.subr.mxu0 %v1473
    %1832 = vmatpush2.msra.mxu0 %v1472
    %1833 = vmatprep.mubr.f32.mxu0 %v711
    %1834 = vmatmul.mubr.f32.gmra.mxu0 %v710
    %v1835 = vpop.f32.mrf.mxu0
    %v1836 = vadd.f32 %v1765, %v1835
    %v1837 = vpop.f32.mrf.mxu0
    %v1838 = vadd.f32 %v1767, %v1837
    %1839 = vdwg.mxu0
    %v1840 = vmax.f32 %v1694, 0.0
    %v1841 = vmax.f32 %v1696, 0.0
    %v1842 = vmax.f32 %v1836, 0.0
    %v1843 = vmax.f32 %v1838, 0.0
    %v1844 = vld [vmem:[%s8] sm:$0xff]
    %v1845 = vld [vmem:[%s8 + $0x8] sm:$0xff]
    %v1846 = vld [vmem:[%s8 + $0x10] sm:$0xff]
    %v1847 = vld [vmem:[%s8 + $0x18] sm:$0xff]
    %v1848 = vld [vmem:[%s8 + $0x20] sm:$0xff]
    %v1849 = vld [vmem:[%s8 + $0x28] sm:$0xff]
    %v1850 = vld [vmem:[%s8 + $0x30] sm:$0xff]
    %v1851 = vld [vmem:[%s8 + $0x38] sm:$0xff]
    %v1852 = vld [vmem:[%s8 + $0x40] sm:$0xff]
    %v1853 = vld [vmem:[%s8 + $0x48] sm:$0xff]
    %v1854 = vld [vmem:[%s8 + $0x50] sm:$0xff]
    %v1855 = vld [vmem:[%s8 + $0x58] sm:$0xff]
    %v1856 = vld [vmem:[%s8 + $0x60] sm:$0xff]
    %v1857 = vld [vmem:[%s8 + $0x68] sm:$0xff]
    %v1858 = vld [vmem:[%s8 + $0x70] sm:$0xff]
    %v1859 = vld [vmem:[%s8 + $0x78] sm:$0xff]
    %v1860 = vld [vmem:[%s8 + $0x80] sm:$0xff]
    %v1861 = vld [vmem:[%s8 + $0x88] sm:$0xff]
    %v1862 = vld [vmem:[%s8 + $0x90] sm:$0xff]
    %v1863 = vld [vmem:[%s8 + $0x98] sm:$0xff]
    %v1864 = vld [vmem:[%s8 + $0xa0] sm:$0xff]
    %v1865 = vld [vmem:[%s8 + $0xa8] sm:$0xff]
    %v1866 = vld [vmem:[%s8 + $0xb0] sm:$0xff]
    %v1867 = vld [vmem:[%s8 + $0xb8] sm:$0xff]
    %v1868 = vld [vmem:[%s8 + $0xc0] sm:$0xff]
    %v1869 = vld [vmem:[%s8 + $0xc8] sm:$0xff]
    %v1870 = vld [vmem:[%s8 + $0xd0] sm:$0xff]
    %v1871 = vld [vmem:[%s8 + $0xd8] sm:$0xff]
    %v1872 = vld [vmem:[%s8 + $0xe0] sm:$0xff]
    %v1873 = vld [vmem:[%s8 + $0xe8] sm:$0xff]
    %v1874 = vld [vmem:[%s8 + $0xf0] sm:$0xff]
    %v1875 = vld [vmem:[%s8 + $0xf8] sm:$0xff]
    %v1876 = vld [vmem:[%s8 + $0x100] sm:$0xff]
    %v1877 = vld [vmem:[%s8 + $0x108] sm:$0xff]
    %v1878 = vld [vmem:[%s8 + $0x110] sm:$0xff]
    %v1879 = vld [vmem:[%s8 + $0x118] sm:$0xff]
    %v1880 = vld [vmem:[%s8 + $0x120] sm:$0xff]
    %v1881 = vld [vmem:[%s8 + $0x128] sm:$0xff]
    %v1882 = vld [vmem:[%s8 + $0x130] sm:$0xff]
    %v1883 = vld [vmem:[%s8 + $0x138] sm:$0xff]
    %v1884 = vld [vmem:[%s8 + $0x140] sm:$0xff]
    %v1885 = vld [vmem:[%s8 + $0x148] sm:$0xff]
    %v1886 = vld [vmem:[%s8 + $0x150] sm:$0xff]
    %v1887 = vld [vmem:[%s8 + $0x158] sm:$0xff]
    %v1888 = vld [vmem:[%s8 + $0x160] sm:$0xff]
    %v1889 = vld [vmem:[%s8 + $0x168] sm:$0xff]
    %v1890 = vld [vmem:[%s8 + $0x170] sm:$0xff]
    %v1891 = vld [vmem:[%s8 + $0x178] sm:$0xff]
    %v1892 = vld [vmem:[%s8 + $0x180] sm:$0xff]
    %v1893 = vld [vmem:[%s8 + $0x188] sm:$0xff]
    %v1894 = vld [vmem:[%s8 + $0x190] sm:$0xff]
    %v1895 = vld [vmem:[%s8 + $0x198] sm:$0xff]
    %v1896 = vld [vmem:[%s8 + $0x1a0] sm:$0xff]
    %v1897 = vld [vmem:[%s8 + $0x1a8] sm:$0xff]
    %v1898 = vld [vmem:[%s8 + $0x1b0] sm:$0xff]
    %v1899 = vld [vmem:[%s8 + $0x1b8] sm:$0xff]
    %v1900 = vld [vmem:[%s8 + $0x1c0] sm:$0xff]
    %v1901 = vld [vmem:[%s8 + $0x1c8] sm:$0xff]
    %v1902 = vld [vmem:[%s8 + $0x1d0] sm:$0xff]
    %v1903 = vld [vmem:[%s8 + $0x1d8] sm:$0xff]
    %v1904 = vld [vmem:[%s8 + $0x1e0] sm:$0xff]
    %v1905 = vld [vmem:[%s8 + $0x1e8] sm:$0xff]
    %v1906 = vld [vmem:[%s8 + $0x1f0] sm:$0xff]
    %v1907 = vld [vmem:[%s8 + $0x1f8] sm:$0xff]
    %v1908 = vld [vmem:[%s9] sm:$0x1]
    %v1910 = vlaneseq
    %v1911 = vshrl.u32 %v1910, 7
    %v1912 = vsub.s32 0, %v1911
    %v1913 = vrot.slane %v1908, %v1912
    %1915 = vmatprep.subr.mxu0 0.0
    %1916 = vmatpush1.msra.mxu0 %v1859
    %1917 = vmatprep.subr.mxu0 0.0
    %1918 = vmatpush1.msra.mxu0 %v1858
    %1919 = vmatprep.subr.mxu0 0.0
    %1920 = vmatpush1.msra.mxu0 %v1857
    %1921 = vmatprep.subr.mxu0 0.0
    %1922 = vmatpush1.msra.mxu0 %v1856
    %1923 = vmatprep.subr.mxu0 0.0
    %1924 = vmatpush1.msra.mxu0 %v1855
    %1925 = vmatprep.subr.mxu0 0.0
    %1926 = vmatpush1.msra.mxu0 %v1854
    %1927 = vmatprep.subr.mxu0 0.0
    %1928 = vmatpush1.msra.mxu0 %v1853
    %1929 = vmatprep.subr.mxu0 0.0
    %1930 = vmatpush1.msra.mxu0 %v1852
    %1931 = vmatprep.subr.mxu0 0.0
    %1932 = vmatpush1.msra.mxu0 %v1851
    %1933 = vmatprep.subr.mxu0 0.0
    %1934 = vmatpush1.msra.mxu0 %v1850
    %1935 = vmatprep.subr.mxu0 0.0
    %1936 = vmatpush1.msra.mxu0 %v1849
    %1937 = vmatprep.subr.mxu0 0.0
    %1938 = vmatpush1.msra.mxu0 %v1848
    %1939 = vmatprep.subr.mxu0 0.0
    %1940 = vmatpush1.msra.mxu0 %v1847
    %1941 = vmatprep.subr.mxu0 0.0
    %1942 = vmatpush1.msra.mxu0 %v1846
    %1943 = vmatprep.subr.mxu0 0.0
    %1944 = vmatpush1.msra.mxu0 %v1845
    %1945 = vmatprep.subr.mxu0 0.0
    %1946 = vmatpush1.msra.mxu0 %v1844
    %1947 = vmatprep.subr.mxu0 0.0
    %1948 = vmatpush2.msra.mxu0 %v1875
    %1949 = vmatprep.subr.mxu0 0.0
    %1950 = vmatpush2.msra.mxu0 %v1874
    %1951 = vmatprep.subr.mxu0 0.0
    %1952 = vmatpush2.msra.mxu0 %v1873
    %1953 = vmatprep.subr.mxu0 0.0
    %1954 = vmatpush2.msra.mxu0 %v1872
    %1955 = vmatprep.subr.mxu0 0.0
    %1956 = vmatpush2.msra.mxu0 %v1871
    %1957 = vmatprep.subr.mxu0 0.0
    %1958 = vmatpush2.msra.mxu0 %v1870
    %1959 = vmatprep.subr.mxu0 0.0
    %1960 = vmatpush2.msra.mxu0 %v1869
    %1961 = vmatprep.subr.mxu0 0.0
    %1962 = vmatpush2.msra.mxu0 %v1868
    %1963 = vmatprep.subr.mxu0 0.0
    %1964 = vmatpush2.msra.mxu0 %v1867
    %1965 = vmatprep.subr.mxu0 0.0
    %1966 = vmatpush2.msra.mxu0 %v1866
    %1967 = vmatprep.subr.mxu0 0.0
    %1968 = vmatpush2.msra.mxu0 %v1865
    %1969 = vmatprep.subr.mxu0 0.0
    %1970 = vmatpush2.msra.mxu0 %v1864
    %1971 = vmatprep.subr.mxu0 0.0
    %1972 = vmatpush2.msra.mxu0 %v1863
    %1973 = vmatprep.subr.mxu0 0.0
    %1974 = vmatpush2.msra.mxu0 %v1862
    %1975 = vmatprep.subr.mxu0 0.0
    %1976 = vmatpush2.msra.mxu0 %v1861
    %1977 = vmatprep.subr.mxu0 0.0
    %1978 = vmatpush2.msra.mxu0 %v1860
    %1979 = vmatprep.mubr.f32.mxu0 %v1275
    %1980 = vmatmul.mubr.f32.gmra.mxu0 %v1274
    %v1981 = vpop.f32.mrf.mxu0
    %v1982 = vadd.f32 %v1913, %v1981
    %v1983 = vpop.f32.mrf.mxu0
    %1984 = vdwg.mxu0
    %1985 = vmatprep.subr.mxu0 0.0
    %1986 = vmatpush1.msra.mxu0 %v1891
    %1987 = vmatprep.subr.mxu0 0.0
    %1988 = vmatpush1.msra.mxu0 %v1890
    %1989 = vmatprep.subr.mxu0 0.0
    %1990 = vmatpush1.msra.mxu0 %v1889
    %1991 = vmatprep.subr.mxu0 0.0
    %1992 = vmatpush1.msra.mxu0 %v1888
    %1993 = vmatprep.subr.mxu0 0.0
    %1994 = vmatpush1.msra.mxu0 %v1887
    %1995 = vmatprep.subr.mxu0 0.0
    %1996 = vmatpush1.msra.mxu0 %v1886
    %1997 = vmatprep.subr.mxu0 0.0
    %1998 = vmatpush1.msra.mxu0 %v1885
    %1999 = vmatprep.subr.mxu0 0.0
    %2000 = vmatpush1.msra.mxu0 %v1884
    %2001 = vmatprep.subr.mxu0 0.0
    %2002 = vmatpush1.msra.mxu0 %v1883
    %2003 = vmatprep.subr.mxu0 0.0
    %2004 = vmatpush1.msra.mxu0 %v1882
    %2005 = vmatprep.subr.mxu0 0.0
    %2006 = vmatpush1.msra.mxu0 %v1881
    %2007 = vmatprep.subr.mxu0 0.0
    %2008 = vmatpush1.msra.mxu0 %v1880
    %2009 = vmatprep.subr.mxu0 0.0
    %2010 = vmatpush1.msra.mxu0 %v1879
    %2011 = vmatprep.subr.mxu0 0.0
    %2012 = vmatpush1.msra.mxu0 %v1878
    %2013 = vmatprep.subr.mxu0 0.0
    %2014 = vmatpush1.msra.mxu0 %v1877
    %2015 = vmatprep.subr.mxu0 0.0
    %2016 = vmatpush1.msra.mxu0 %v1876
    %2017 = vmatprep.subr.mxu0 0.0
    %2018 = vmatpush2.msra.mxu0 %v1907
    %2019 = vmatprep.subr.mxu0 0.0
    %2020 = vmatpush2.msra.mxu0 %v1906
    %2021 = vmatprep.subr.mxu0 0.0
    %2022 = vmatpush2.msra.mxu0 %v1905
    %2023 = vmatprep.subr.mxu0 0.0
    %2024 = vmatpush2.msra.mxu0 %v1904
    %2025 = vmatprep.subr.mxu0 0.0
    %2026 = vmatpush2.msra.mxu0 %v1903
    %2027 = vmatprep.subr.mxu0 0.0
    %2028 = vmatpush2.msra.mxu0 %v1902
    %2029 = vmatprep.subr.mxu0 0.0
    %2030 = vmatpush2.msra.mxu0 %v1901
    %2031 = vmatprep.subr.mxu0 0.0
    %2032 = vmatpush2.msra.mxu0 %v1900
    %2033 = vmatprep.subr.mxu0 0.0
    %2034 = vmatpush2.msra.mxu0 %v1899
    %2035 = vmatprep.subr.mxu0 0.0
    %2036 = vmatpush2.msra.mxu0 %v1898
    %2037 = vmatprep.subr.mxu0 0.0
    %2038 = vmatpush2.msra.mxu0 %v1897
    %2039 = vmatprep.subr.mxu0 0.0
    %2040 = vmatpush2.msra.mxu0 %v1896
    %2041 = vmatprep.subr.mxu0 0.0
    %2042 = vmatpush2.msra.mxu0 %v1895
    %2043 = vmatprep.subr.mxu0 0.0
    %2044 = vmatpush2.msra.mxu0 %v1894
    %2045 = vmatprep.subr.mxu0 0.0
    %2046 = vmatpush2.msra.mxu0 %v1893
    %2047 = vmatprep.subr.mxu0 0.0
    %2048 = vmatpush2.msra.mxu0 %v1892
    %2049 = vmatprep.mubr.f32.mxu0 %v1277
    %2050 = vmatmul.mubr.f32.gmra.mxu0 %v1276
    %v2051 = vpop.f32.mrf.mxu0
    %v2052 = vadd.f32 %v1982, %v2051
    %v2053 = vpop.f32.mrf.mxu0
    %2054 = vdwg.mxu0
    %v2055 = vmax.f32 %v2052, 0.0
    %v2056 = vld [vmem:[%s10] sm:$0xff]
    %v2057 = vld [vmem:[%s10 + $0x8] sm:$0xff]
    %v2058 = vld [vmem:[%s10 + $0x10] sm:$0xff]
    %v2059 = vld [vmem:[%s10 + $0x18] sm:$0xff]
    %v2060 = vld [vmem:[%s10 + $0x20] sm:$0xff]
    %v2061 = vld [vmem:[%s10 + $0x28] sm:$0xff]
    %v2062 = vld [vmem:[%s10 + $0x30] sm:$0xff]
    %v2063 = vld [vmem:[%s10 + $0x38] sm:$0xff]
    %v2064 = vld [vmem:[%s10 + $0x40] sm:$0xff]
    %v2065 = vld [vmem:[%s10 + $0x48] sm:$0xff]
    %v2066 = vld [vmem:[%s10 + $0x50] sm:$0xff]
    %v2067 = vld [vmem:[%s10 + $0x58] sm:$0xff]
    %v2068 = vld [vmem:[%s10 + $0x60] sm:$0xff]
    %v2069 = vld [vmem:[%s10 + $0x68] sm:$0xff]
    %v2070 = vld [vmem:[%s10 + $0x70] sm:$0xff]
    %v2071 = vld [vmem:[%s10 + $0x78] sm:$0xff]
    %v2072 = vld [vmem:[%s10 + $0x80] sm:$0xff]
    %v2073 = vld [vmem:[%s10 + $0x88] sm:$0xff]
    %v2074 = vld [vmem:[%s10 + $0x90] sm:$0xff]
    %v2075 = vld [vmem:[%s10 + $0x98] sm:$0xff]
    %v2076 = vld [vmem:[%s10 + $0xa0] sm:$0xff]
    %v2077 = vld [vmem:[%s10 + $0xa8] sm:$0xff]
    %v2078 = vld [vmem:[%s10 + $0xb0] sm:$0xff]
    %v2079 = vld [vmem:[%s10 + $0xb8] sm:$0xff]
    %v2080 = vld [vmem:[%s10 + $0xc0] sm:$0xff]
    %v2081 = vld [vmem:[%s10 + $0xc8] sm:$0xff]
    %v2082 = vld [vmem:[%s10 + $0xd0] sm:$0xff]
    %v2083 = vld [vmem:[%s10 + $0xd8] sm:$0xff]
    %v2084 = vld [vmem:[%s10 + $0xe0] sm:$0xff]
    %v2085 = vld [vmem:[%s10 + $0xe8] sm:$0xff]
    %v2086 = vld [vmem:[%s10 + $0xf0] sm:$0xff]
    %v2087 = vld [vmem:[%s10 + $0xf8] sm:$0xff]
    %v2088 = vld [vmem:[%s10 + $0x100] sm:$0xff]
    %v2089 = vld [vmem:[%s10 + $0x108] sm:$0xff]
    %v2090 = vld [vmem:[%s10 + $0x110] sm:$0xff]
    %v2091 = vld [vmem:[%s10 + $0x118] sm:$0xff]
    %v2092 = vld [vmem:[%s10 + $0x120] sm:$0xff]
    %v2093 = vld [vmem:[%s10 + $0x128] sm:$0xff]
    %v2094 = vld [vmem:[%s10 + $0x130] sm:$0xff]
    %v2095 = vld [vmem:[%s10 + $0x138] sm:$0xff]
    %v2096 = vld [vmem:[%s10 + $0x140] sm:$0xff]
    %v2097 = vld [vmem:[%s10 + $0x148] sm:$0xff]
    %v2098 = vld [vmem:[%s10 + $0x150] sm:$0xff]
    %v2099 = vld [vmem:[%s10 + $0x158] sm:$0xff]
    %v2100 = vld [vmem:[%s10 + $0x160] sm:$0xff]
    %v2101 = vld [vmem:[%s10 + $0x168] sm:$0xff]
    %v2102 = vld [vmem:[%s10 + $0x170] sm:$0xff]
    %v2103 = vld [vmem:[%s10 + $0x178] sm:$0xff]
    %v2104 = vld [vmem:[%s10 + $0x180] sm:$0xff]
    %v2105 = vld [vmem:[%s10 + $0x188] sm:$0xff]
    %v2106 = vld [vmem:[%s10 + $0x190] sm:$0xff]
    %v2107 = vld [vmem:[%s10 + $0x198] sm:$0xff]
    %v2108 = vld [vmem:[%s10 + $0x1a0] sm:$0xff]
    %v2109 = vld [vmem:[%s10 + $0x1a8] sm:$0xff]
    %v2110 = vld [vmem:[%s10 + $0x1b0] sm:$0xff]
    %v2111 = vld [vmem:[%s10 + $0x1b8] sm:$0xff]
    %v2112 = vld [vmem:[%s10 + $0x1c0] sm:$0xff]
    %v2113 = vld [vmem:[%s10 + $0x1c8] sm:$0xff]
    %v2114 = vld [vmem:[%s10 + $0x1d0] sm:$0xff]
    %v2115 = vld [vmem:[%s10 + $0x1d8] sm:$0xff]
    %v2116 = vld [vmem:[%s10 + $0x1e0] sm:$0xff]
    %v2117 = vld [vmem:[%s10 + $0x1e8] sm:$0xff]
    %v2118 = vld [vmem:[%s10 + $0x1f0] sm:$0xff]
    %v2119 = vld [vmem:[%s10 + $0x1f8] sm:$0xff]
    %v2120 = vld [vmem:[%s11] sm:$0x1]
    %v2122 = vlaneseq
    %v2123 = vshrl.u32 %v2122, 7
    %v2124 = vsub.s32 0, %v2123
    %v2125 = vrot.slane %v2120, %v2124
    %2127 = vmatprep.subr.mxu0 0.0
    %2128 = vmatpush1.msra.mxu0 %v2071
    %2129 = vmatprep.subr.mxu0 0.0
    %2130 = vmatpush1.msra.mxu0 %v2070
    %2131 = vmatprep.subr.mxu0 0.0
    %2132 = vmatpush1.msra.mxu0 %v2069
    %2133 = vmatprep.subr.mxu0 0.0
    %2134 = vmatpush1.msra.mxu0 %v2068
    %2135 = vmatprep.subr.mxu0 0.0
    %2136 = vmatpush1.msra.mxu0 %v2067
    %2137 = vmatprep.subr.mxu0 0.0
    %2138 = vmatpush1.msra.mxu0 %v2066
    %2139 = vmatprep.subr.mxu0 0.0
    %2140 = vmatpush1.msra.mxu0 %v2065
    %2141 = vmatprep.subr.mxu0 0.0
    %2142 = vmatpush1.msra.mxu0 %v2064
    %2143 = vmatprep.subr.mxu0 0.0
    %2144 = vmatpush1.msra.mxu0 %v2063
    %2145 = vmatprep.subr.mxu0 0.0
    %2146 = vmatpush1.msra.mxu0 %v2062
    %2147 = vmatprep.subr.mxu0 0.0
    %2148 = vmatpush1.msra.mxu0 %v2061
    %2149 = vmatprep.subr.mxu0 0.0
    %2150 = vmatpush1.msra.mxu0 %v2060
    %2151 = vmatprep.subr.mxu0 0.0
    %2152 = vmatpush1.msra.mxu0 %v2059
    %2153 = vmatprep.subr.mxu0 0.0
    %2154 = vmatpush1.msra.mxu0 %v2058
    %2155 = vmatprep.subr.mxu0 0.0
    %2156 = vmatpush1.msra.mxu0 %v2057
    %2157 = vmatprep.subr.mxu0 0.0
    %2158 = vmatpush1.msra.mxu0 %v2056
    %2159 = vmatprep.subr.mxu0 0.0
    %2160 = vmatpush2.msra.mxu0 %v2087
    %2161 = vmatprep.subr.mxu0 0.0
    %2162 = vmatpush2.msra.mxu0 %v2086
    %2163 = vmatprep.subr.mxu0 0.0
    %2164 = vmatpush2.msra.mxu0 %v2085
    %2165 = vmatprep.subr.mxu0 0.0
    %2166 = vmatpush2.msra.mxu0 %v2084
    %2167 = vmatprep.subr.mxu0 0.0
    %2168 = vmatpush2.msra.mxu0 %v2083
    %2169 = vmatprep.subr.mxu0 0.0
    %2170 = vmatpush2.msra.mxu0 %v2082
    %2171 = vmatprep.subr.mxu0 0.0
    %2172 = vmatpush2.msra.mxu0 %v2081
    %2173 = vmatprep.subr.mxu0 0.0
    %2174 = vmatpush2.msra.mxu0 %v2080
    %2175 = vmatprep.subr.mxu0 0.0
    %2176 = vmatpush2.msra.mxu0 %v2079
    %2177 = vmatprep.subr.mxu0 0.0
    %2178 = vmatpush2.msra.mxu0 %v2078
    %2179 = vmatprep.subr.mxu0 0.0
    %2180 = vmatpush2.msra.mxu0 %v2077
    %2181 = vmatprep.subr.mxu0 0.0
    %2182 = vmatpush2.msra.mxu0 %v2076
    %2183 = vmatprep.subr.mxu0 0.0
    %2184 = vmatpush2.msra.mxu0 %v2075
    %2185 = vmatprep.subr.mxu0 0.0
    %2186 = vmatpush2.msra.mxu0 %v2074
    %2187 = vmatprep.subr.mxu0 0.0
    %2188 = vmatpush2.msra.mxu0 %v2073
    %2189 = vmatprep.subr.mxu0 0.0
    %2190 = vmatpush2.msra.mxu0 %v2072
    %2191 = vmatprep.mubr.f32.mxu0 %v1841
    %2192 = vmatmul.mubr.f32.gmra.mxu0 %v1840
    %v2193 = vpop.f32.mrf.mxu0
    %v2194 = vadd.f32 %v2125, %v2193
    %v2195 = vpop.f32.mrf.mxu0
    %2196 = vdwg.mxu0
    %2197 = vmatprep.subr.mxu0 0.0
    %2198 = vmatpush1.msra.mxu0 %v2103
    %2199 = vmatprep.subr.mxu0 0.0
    %2200 = vmatpush1.msra.mxu0 %v2102
    %2201 = vmatprep.subr.mxu0 0.0
    %2202 = vmatpush1.msra.mxu0 %v2101
    %2203 = vmatprep.subr.mxu0 0.0
    %2204 = vmatpush1.msra.mxu0 %v2100
    %2205 = vmatprep.subr.mxu0 0.0
    %2206 = vmatpush1.msra.mxu0 %v2099
    %2207 = vmatprep.subr.mxu0 0.0
    %2208 = vmatpush1.msra.mxu0 %v2098
    %2209 = vmatprep.subr.mxu0 0.0
    %2210 = vmatpush1.msra.mxu0 %v2097
    %2211 = vmatprep.subr.mxu0 0.0
    %2212 = vmatpush1.msra.mxu0 %v2096
    %2213 = vmatprep.subr.mxu0 0.0
    %2214 = vmatpush1.msra.mxu0 %v2095
    %2215 = vmatprep.subr.mxu0 0.0
    %2216 = vmatpush1.msra.mxu0 %v2094
    %2217 = vmatprep.subr.mxu0 0.0
    %2218 = vmatpush1.msra.mxu0 %v2093
    %2219 = vmatprep.subr.mxu0 0.0
    %2220 = vmatpush1.msra.mxu0 %v2092
    %2221 = vmatprep.subr.mxu0 0.0
    %2222 = vmatpush1.msra.mxu0 %v2091
    %2223 = vmatprep.subr.mxu0 0.0
    %2224 = vmatpush1.msra.mxu0 %v2090
    %2225 = vmatprep.subr.mxu0 0.0
    %2226 = vmatpush1.msra.mxu0 %v2089
    %2227 = vmatprep.subr.mxu0 0.0
    %2228 = vmatpush1.msra.mxu0 %v2088
    %2229 = vmatprep.subr.mxu0 0.0
    %2230 = vmatpush2.msra.mxu0 %v2119
    %2231 = vmatprep.subr.mxu0 0.0
    %2232 = vmatpush2.msra.mxu0 %v2118
    %2233 = vmatprep.subr.mxu0 0.0
    %2234 = vmatpush2.msra.mxu0 %v2117
    %2235 = vmatprep.subr.mxu0 0.0
    %2236 = vmatpush2.msra.mxu0 %v2116
    %2237 = vmatprep.subr.mxu0 0.0
    %2238 = vmatpush2.msra.mxu0 %v2115
    %2239 = vmatprep.subr.mxu0 0.0
    %2240 = vmatpush2.msra.mxu0 %v2114
    %2241 = vmatprep.subr.mxu0 0.0
    %2242 = vmatpush2.msra.mxu0 %v2113
    %2243 = vmatprep.subr.mxu0 0.0
    %2244 = vmatpush2.msra.mxu0 %v2112
    %2245 = vmatprep.subr.mxu0 0.0
    %2246 = vmatpush2.msra.mxu0 %v2111
    %2247 = vmatprep.subr.mxu0 0.0
    %2248 = vmatpush2.msra.mxu0 %v2110
    %2249 = vmatprep.subr.mxu0 0.0
    %2250 = vmatpush2.msra.mxu0 %v2109
    %2251 = vmatprep.subr.mxu0 0.0
    %2252 = vmatpush2.msra.mxu0 %v2108
    %2253 = vmatprep.subr.mxu0 0.0
    %2254 = vmatpush2.msra.mxu0 %v2107
    %2255 = vmatprep.subr.mxu0 0.0
    %2256 = vmatpush2.msra.mxu0 %v2106
    %2257 = vmatprep.subr.mxu0 0.0
    %2258 = vmatpush2.msra.mxu0 %v2105
    %2259 = vmatprep.subr.mxu0 0.0
    %2260 = vmatpush2.msra.mxu0 %v2104
    %2261 = vmatprep.mubr.f32.mxu0 %v1843
    %2262 = vmatmul.mubr.f32.gmra.mxu0 %v1842
    %v2263 = vpop.f32.mrf.mxu0
    %v2264 = vadd.f32 %v2194, %v2263
    %v2265 = vpop.f32.mrf.mxu0
    %2266 = vdwg.mxu0
    %v2267 = vmax.f32 %v2264, 0.0
    %v2268 = vld [vmem:[%s12] sm:$0xff]
    %v2269 = vld [vmem:[%s13] sm:$0x1]
    %v2271 = vlaneseq
    %v2272 = vshrl.u32 %v2271, 7
    %v2273 = vsub.s32 0, %v2272
    %v2274 = vrot.slane %v2269, %v2273
    %vm2276 = vcmask 64512
    %v2278 = vsel %vm2276, %v2055, 0
    %2280 = vmatprep.subr.mxu0 0.0
    %2281 = vmatpush1.msra.mxu0 0.0
    %2282 = vmatprep.subr.mxu0 0.0
    %2283 = vmatpush1.msra.mxu0 0.0
    %2284 = vmatprep.subr.mxu0 0.0
    %2285 = vmatpush1.msra.mxu0 0.0
    %2286 = vmatprep.subr.mxu0 0.0
    %2287 = vmatpush1.msra.mxu0 0.0
    %2288 = vmatprep.subr.mxu0 0.0
    %2289 = vmatpush1.msra.mxu0 0.0
    %2290 = vmatprep.subr.mxu0 0.0
    %2291 = vmatpush1.msra.mxu0 0.0
    %2292 = vmatprep.subr.mxu0 0.0
    %2293 = vmatpush1.msra.mxu0 0.0
    %2294 = vmatprep.subr.mxu0 0.0
    %2295 = vmatpush1.msra.mxu0 0.0
    %2296 = vmatprep.subr.mxu0 0.0
    %2297 = vmatpush1.msra.mxu0 0.0
    %2298 = vmatprep.subr.mxu0 0.0
    %2299 = vmatpush1.msra.mxu0 0.0
    %2300 = vmatprep.subr.mxu0 0.0
    %2301 = vmatpush1.msra.mxu0 0.0
    %2302 = vmatprep.subr.mxu0 0.0
    %2303 = vmatpush1.msra.mxu0 0.0
    %2304 = vmatprep.subr.mxu0 0.0
    %2305 = vmatpush1.msra.mxu0 0.0
    %2306 = vmatprep.subr.mxu0 0.0
    %2307 = vmatpush1.msra.mxu0 0.0
    %2308 = vmatprep.subr.mxu0 0.0
    %2309 = vmatpush1.msra.mxu0 0.0
    %2310 = vmatprep.subr.mxu0 0.0
    %2311 = vmatpush1.msra.mxu0 %v2268
    %2312 = vmatprep.subr.mxu0 0.0
    %2313 = vmatpush2.msra.mxu0 0.0
    %2314 = vmatprep.subr.mxu0 0.0
    %2315 = vmatpush2.msra.mxu0 0.0
    %2316 = vmatprep.subr.mxu0 0.0
    %2317 = vmatpush2.msra.mxu0 0.0
    %2318 = vmatprep.subr.mxu0 0.0
    %2319 = vmatpush2.msra.mxu0 0.0
    %2320 = vmatprep.subr.mxu0 0.0
    %2321 = vmatpush2.msra.mxu0 0.0
    %2322 = vmatprep.subr.mxu0 0.0
    %2323 = vmatpush2.msra.mxu0 0.0
    %2324 = vmatprep.subr.mxu0 0.0
    %2325 = vmatpush2.msra.mxu0 0.0
    %2326 = vmatprep.subr.mxu0 0.0
    %2327 = vmatpush2.msra.mxu0 0.0
    %2328 = vmatprep.subr.mxu0 0.0
    %2329 = vmatpush2.msra.mxu0 0.0
    %2330 = vmatprep.subr.mxu0 0.0
    %2331 = vmatpush2.msra.mxu0 0.0
    %2332 = vmatprep.subr.mxu0 0.0
    %2333 = vmatpush2.msra.mxu0 0.0
    %2334 = vmatprep.subr.mxu0 0.0
    %2335 = vmatpush2.msra.mxu0 0.0
    %2336 = vmatprep.subr.mxu0 0.0
    %2337 = vmatpush2.msra.mxu0 0.0
    %2338 = vmatprep.subr.mxu0 0.0
    %2339 = vmatpush2.msra.mxu0 0.0
    %2340 = vmatprep.subr.mxu0 0.0
    %2341 = vmatpush2.msra.mxu0 0.0
    %2342 = vmatprep.subr.mxu0 0.0
    %2343 = vmatpush2.msra.mxu0 0.0
    %2344 = vmatprep.mubr.f32.mxu0 0.0
    %2345 = vmatmul.mubr.f32.gmra.mxu0 %v2278
    %v2346 = vpop.f32.mrf.mxu0
    %v2347 = vadd.f32 %v2274, %v2346
    %v2348 = vpop.f32.mrf.mxu0
    %2349 = vdwg.mxu0
    %v2350 = vld [vmem:[%s14] sm:$0xff]
    %v2351 = vld [vmem:[%s15] sm:$0x1]
    %v2353 = vlaneseq
    %v2354 = vshrl.u32 %v2353, 7
    %v2355 = vsub.s32 0, %v2354
    %v2356 = vrot.slane %v2351, %v2355
    %2358 = vmatprep.subr.mxu0 0.0
    %2359 = vmatpush1.msra.mxu0 0.0
    %2360 = vmatprep.subr.mxu0 0.0
    %2361 = vmatpush1.msra.mxu0 0.0
    %2362 = vmatprep.subr.mxu0 0.0
    %2363 = vmatpush1.msra.mxu0 0.0
    %2364 = vmatprep.subr.mxu0 0.0
    %2365 = vmatpush1.msra.mxu0 0.0
    %2366 = vmatprep.subr.mxu0 0.0
    %2367 = vmatpush1.msra.mxu0 0.0
    %2368 = vmatprep.subr.mxu0 0.0
    %2369 = vmatpush1.msra.mxu0 0.0
    %2370 = vmatprep.subr.mxu0 0.0
    %2371 = vmatpush1.msra.mxu0 0.0
    %2372 = vmatprep.subr.mxu0 0.0
    %2373 = vmatpush1.msra.mxu0 0.0
    %2374 = vmatprep.subr.mxu0 0.0
    %2375 = vmatpush1.msra.mxu0 0.0
    %2376 = vmatprep.subr.mxu0 0.0
    %2377 = vmatpush1.msra.mxu0 0.0
    %2378 = vmatprep.subr.mxu0 0.0
    %2379 = vmatpush1.msra.mxu0 0.0
    %2380 = vmatprep.subr.mxu0 0.0
    %2381 = vmatpush1.msra.mxu0 0.0
    %2382 = vmatprep.subr.mxu0 0.0
    %2383 = vmatpush1.msra.mxu0 0.0
    %2384 = vmatprep.subr.mxu0 0.0
    %2385 = vmatpush1.msra.mxu0 0.0
    %2386 = vmatprep.subr.mxu0 0.0
    %2387 = vmatpush1.msra.mxu0 0.0
    %2388 = vmatprep.subr.mxu0 0.0
    %2389 = vmatpush1.msra.mxu0 %v2350
    %2390 = vmatprep.subr.mxu0 0.0
    %2391 = vmatpush2.msra.mxu0 0.0
    %2392 = vmatprep.subr.mxu0 0.0
    %2393 = vmatpush2.msra.mxu0 0.0
    %2394 = vmatprep.subr.mxu0 0.0
    %2395 = vmatpush2.msra.mxu0 0.0
    %2396 = vmatprep.subr.mxu0 0.0
    %2397 = vmatpush2.msra.mxu0 0.0
    %2398 = vmatprep.subr.mxu0 0.0
    %2399 = vmatpush2.msra.mxu0 0.0
    %2400 = vmatprep.subr.mxu0 0.0
    %2401 = vmatpush2.msra.mxu0 0.0
    %2402 = vmatprep.subr.mxu0 0.0
    %2403 = vmatpush2.msra.mxu0 0.0
    %2404 = vmatprep.subr.mxu0 0.0
    %2405 = vmatpush2.msra.mxu0 0.0
    %2406 = vmatprep.subr.mxu0 0.0
    %2407 = vmatpush2.msra.mxu0 0.0
    %2408 = vmatprep.subr.mxu0 0.0
    %2409 = vmatpush2.msra.mxu0 0.0
    %2410 = vmatprep.subr.mxu0 0.0
    %2411 = vmatpush2.msra.mxu0 0.0
    %2412 = vmatprep.subr.mxu0 0.0
    %2413 = vmatpush2.msra.mxu0 0.0
    %2414 = vmatprep.subr.mxu0 0.0
    %2415 = vmatpush2.msra.mxu0 0.0
    %2416 = vmatprep.subr.mxu0 0.0
    %2417 = vmatpush2.msra.mxu0 0.0
    %2418 = vmatprep.subr.mxu0 0.0
    %2419 = vmatpush2.msra.mxu0 0.0
    %2420 = vmatprep.subr.mxu0 0.0
    %2421 = vmatpush2.msra.mxu0 0.0
    %2422 = vmatprep.mubr.f32.mxu0 0.0
    %2423 = vmatmul.mubr.f32.gmra.mxu0 %v2278
    %v2424 = vpop.f32.mrf.mxu0
    %v2425 = vadd.f32 %v2356, %v2424
    %v2426 = vpop.f32.mrf.mxu0
    %2427 = vdwg.mxu0
    %v2428 = vld [vmem:[%s16] sm:$0xff]
    %v2429 = vld [vmem:[#allocation2] sm:$0x1]
    %v2431 = vlaneseq
    %v2432 = vshrl.u32 %v2431, 7
    %v2433 = vsub.s32 0, %v2432
    %v2434 = vrot.slane %v2429, %v2433
    %v2437 = vsel %vm2276, %v2267, 0
    %2439 = vmatprep.subr.mxu0 0.0
    %2440 = vmatpush1.msra.mxu0 0.0
    %2441 = vmatprep.subr.mxu0 0.0
    %2442 = vmatpush1.msra.mxu0 0.0
    %2443 = vmatprep.subr.mxu0 0.0
    %2444 = vmatpush1.msra.mxu0 0.0
    %2445 = vmatprep.subr.mxu0 0.0
    %2446 = vmatpush1.msra.mxu0 0.0
    %2447 = vmatprep.subr.mxu0 0.0
    %2448 = vmatpush1.msra.mxu0 0.0
    %2449 = vmatprep.subr.mxu0 0.0
    %2450 = vmatpush1.msra.mxu0 0.0
    %2451 = vmatprep.subr.mxu0 0.0
    %2452 = vmatpush1.msra.mxu0 0.0
    %2453 = vmatprep.subr.mxu0 0.0
    %2454 = vmatpush1.msra.mxu0 0.0
    %2455 = vmatprep.subr.mxu0 0.0
    %2456 = vmatpush1.msra.mxu0 0.0
    %2457 = vmatprep.subr.mxu0 0.0
    %2458 = vmatpush1.msra.mxu0 0.0
    %2459 = vmatprep.subr.mxu0 0.0
    %2460 = vmatpush1.msra.mxu0 0.0
    %2461 = vmatprep.subr.mxu0 0.0
    %2462 = vmatpush1.msra.mxu0 0.0
    %2463 = vmatprep.subr.mxu0 0.0
    %2464 = vmatpush1.msra.mxu0 0.0
    %2465 = vmatprep.subr.mxu0 0.0
    %2466 = vmatpush1.msra.mxu0 0.0
    %2467 = vmatprep.subr.mxu0 0.0
    %2468 = vmatpush1.msra.mxu0 0.0
    %2469 = vmatprep.subr.mxu0 0.0
    %2470 = vmatpush1.msra.mxu0 %v2428
    %2471 = vmatprep.subr.mxu0 0.0
    %2472 = vmatpush2.msra.mxu0 0.0
    %2473 = vmatprep.subr.mxu0 0.0
    %2474 = vmatpush2.msra.mxu0 0.0
    %2475 = vmatprep.subr.mxu0 0.0
    %2476 = vmatpush2.msra.mxu0 0.0
    %2477 = vmatprep.subr.mxu0 0.0
    %2478 = vmatpush2.msra.mxu0 0.0
    %2479 = vmatprep.subr.mxu0 0.0
    %2480 = vmatpush2.msra.mxu0 0.0
    %2481 = vmatprep.subr.mxu0 0.0
    %2482 = vmatpush2.msra.mxu0 0.0
    %2483 = vmatprep.subr.mxu0 0.0
    %2484 = vmatpush2.msra.mxu0 0.0
    %2485 = vmatprep.subr.mxu0 0.0
    %2486 = vmatpush2.msra.mxu0 0.0
    %2487 = vmatprep.subr.mxu0 0.0
    %2488 = vmatpush2.msra.mxu0 0.0
    %2489 = vmatprep.subr.mxu0 0.0
    %2490 = vmatpush2.msra.mxu0 0.0
    %2491 = vmatprep.subr.mxu0 0.0
    %2492 = vmatpush2.msra.mxu0 0.0
    %2493 = vmatprep.subr.mxu0 0.0
    %2494 = vmatpush2.msra.mxu0 0.0
    %2495 = vmatprep.subr.mxu0 0.0
    %2496 = vmatpush2.msra.mxu0 0.0
    %2497 = vmatprep.subr.mxu0 0.0
    %2498 = vmatpush2.msra.mxu0 0.0
    %2499 = vmatprep.subr.mxu0 0.0
    %2500 = vmatpush2.msra.mxu0 0.0
    %2501 = vmatprep.subr.mxu0 0.0
    %2502 = vmatpush2.msra.mxu0 0.0
    %2503 = vmatprep.mubr.f32.mxu0 0.0
    %2504 = vmatmul.mubr.f32.gmra.mxu0 %v2437
    %v2505 = vpop.f32.mrf.mxu0
    %v2506 = vadd.f32 %v2434, %v2505
    %v2507 = vpop.f32.mrf.mxu0
    %2508 = vdwg.mxu0
    %v2509 = vld [vmem:[%s1] sm:$0x3]
    %v2510 = vmul.f32 %v2425, -2.0
    %v2511 = vmul.f32 %v2510, 1.442695
    %v2512 = vpow.pop %v2511
    %v2513 = vsub.f32 %v2509, %v2347
    %v2514 = vmul.f32 %v2513, -0.5
    %v2515 = vmul.f32 %v2514, %v2513
    %v2516 = vmul.f32 %v2515, %v2512
    %v2517 = vsub.f32 %v2516, %v2425
    %v2518 = vsub.f32 %v2517, 0.9189385
    %v2519 = vadd.f32 %v2425, 1.4189385
    %vm2520 = vcmask 9216
    %2521 = vst.msk [vmem:[#allocation9] sm:$0x3] %vm2520, %v2347
    %2522 = vst.msk [vmem:[#allocation10] sm:$0x3] %vm2520, %v2425
    %2523 = vst.msk [vmem:[#allocation12] sm:$0x3] %vm2520, %v2518
    %2524 = vst.msk [vmem:[#allocation13] sm:$0x3] %vm2520, %v2519
    %vm2525 = vcmask 1024
    %2526 = vst.msk [vmem:[%s22] sm:$0x3] %vm2525, %v2506
    // Predicated region
    $region86: #{evaluate.1} parent=1 // pred_check
      _
    $region87: #{evaluate.1} parent=1 // pred_check_branch
      %2528 = sbr.rel (0) target = $region89
    $region88: #{evaluate.1} parent=1 // pred_region
      %s2530 = ssub.s32 32, 32
      %2531 = vsyncadd [#allocation5], %s2530
      %s2533 = sshll.u32 [#allocation9], 4
      %s2534 = int_to_ptr.vmem [resolvable:$true] %s2533
      %2536 = dma.vmem_to_hbm [thread:$0]  %s2534, 32, %s18, [#allocation5]
    $region89: #{evaluate.1} parent=1 // pred_fallthru
      _
    // Predicated region
    $region90: #{evaluate.1} parent=1 // pred_check
      _
    $region91: #{evaluate.1} parent=1 // pred_check_branch
      %2538 = sbr.rel (0) target = $region93
    $region92: #{evaluate.1} parent=1 // pred_region
      %s2540 = ssub.s32 32, 32
      %2541 = vsyncadd [#allocation11], %s2540
      %s2543 = sshll.u32 [#allocation10], 4
      %s2544 = int_to_ptr.vmem [resolvable:$true] %s2543
      %2546 = dma.vmem_to_hbm [thread:$0]  %s2544, 32, %s19, [#allocation11]
    $region93: #{evaluate.1} parent=1 // pred_fallthru
      _
    // Predicated region
    $region94: #{evaluate.1} parent=1 // pred_check
      _
    $region95: #{evaluate.1} parent=1 // pred_check_branch
      %2548 = sbr.rel (0) target = $region97
    $region96: #{evaluate.1} parent=1 // pred_region
      %s2550 = ssub.s32 32, 32
      %2551 = vsyncadd [#allocation11], %s2550
      %s2553 = sshll.u32 [#allocation12], 4
      %s2554 = int_to_ptr.vmem [resolvable:$true] %s2553
      %2556 = dma.vmem_to_hbm [thread:$0]  %s2554, 32, %s20, [#allocation11]
    $region97: #{evaluate.1} parent=1 // pred_fallthru
      _
    // Predicated region
    $region98: #{evaluate.1} parent=1 // pred_check
      _
    $region99: #{evaluate.1} parent=1 // pred_check_branch
      %2558 = sbr.rel (0) target = $region101
    $region100: #{evaluate.1} parent=1 // pred_region
      %s2560 = ssub.s32 32, 32
      %2561 = vsyncadd [#allocation14], %s2560
      %s2563 = sshll.u32 [#allocation13], 4
      %s2564 = int_to_ptr.vmem [resolvable:$true] %s2563
      %2566 = dma.vmem_to_hbm [thread:$0]  %s2564, 32, %s21, [#allocation14]
    $region101: #{evaluate.1} parent=1 // pred_fallthru
      _
    // Predicated region
    $region102: #{evaluate.1} parent=1 // pred_check
      _
    $region103: #{evaluate.1} parent=1 // pred_check_branch
      %2568 = sbr.rel (0) target = $region105
    $region104: #{evaluate.1} parent=1 // pred_region
      _
    $region105: #{evaluate.1} parent=1 // pred_fallthru
      _
    // Predicated region
    $region106: #{evaluate.1} parent=1 // pred_check
      _
    $region107: #{evaluate.1} parent=1 // pred_check_branch
      %2570 = sbr.rel (0) target = $region109
    $region108: #{evaluate.1} parent=1 // pred_region
      %2571 = dma.done [#allocation5], 32
    $region109: #{evaluate.1} parent=1 // pred_fallthru
      _
    // Predicated region
    $region110: #{evaluate.1} parent=1 // pred_check
      _
    $region111: #{evaluate.1} parent=1 // pred_check_branch
      %2573 = sbr.rel (0) target = $region113
    $region112: #{evaluate.1} parent=1 // pred_region
      %2574 = dma.done [#allocation11], 32
    $region113: #{evaluate.1} parent=1 // pred_fallthru
      _
    // Predicated region
    $region114: #{evaluate.1} parent=1 // pred_check
      _
    $region115: #{evaluate.1} parent=1 // pred_check_branch
      %2576 = sbr.rel (0) target = $region117
    $region116: #{evaluate.1} parent=1 // pred_region
      %2577 = dma.done [#allocation11], 32
    $region117: #{evaluate.1} parent=1 // pred_fallthru
      _
    // Predicated region
    $region118: #{evaluate.1} parent=1 // pred_check
      _
    $region119: #{evaluate.1} parent=1 // pred_check_branch
      %2579 = sbr.rel (0) target = $region121
    $region120: #{evaluate.1} parent=1 // pred_region
      %2580 = dma.done [#allocation14], 32
    $region121: #{evaluate.1} parent=1 // pred_fallthru
      _
    // Predicated region
    $region122: #{evaluate.1} parent=1 // pred_check
      _
    $region123: #{evaluate.1} parent=1 // pred_check_branch
      %2582 = sbr.rel (0) target = $region125
    $region124: #{evaluate.1} parent=1 // pred_region
      _
    $region125: #{evaluate.1} parent=1 // pred_fallthru
      _
    %2583 = vsyncpa [#allocation4], 1
    %2584 = vsyncpa [#allocation7], 1
    %2585 = vsyncpa [#allocation5], 1
    %2586 = vsyncpa [#allocation11], 1
    %2587 = vsyncpa [#allocation14], 1

</llo_original>
